<compile_context>
chip_gen: v5e
topology: v5e:2x2
jax: 0.10.0
libtpu: 0.0.40
codegen_flags: <defaults>
</compile_context>

<pallas_src>
import functools
import math

import jax
import jax.numpy as jnp
from jax.experimental import pallas as pl
from jax.experimental.pallas import tpu as pltpu

# ----------------------------- deterministic config -----------------------------
B = 2             # batch
C = 3             # image channels
IMG = 16          # spatial size (stands in for 224)
PATCH = 8         # conv1 kernel == stride
N_PATCH = (IMG // PATCH) ** 2          # 4 patches
T_DIM = 32        # text transformer width  (t_h_dim)
V_DIM = 32        # visual transformer width
N_HEADS = 4
N_LAYERS = 2
CTX_LEN = 4       # learnable text context length
N_CLS = 3         # number of labels
SUF_LEN = 3       # classname + EOT + pad tokens
L_TXT = 1 + CTX_LEN + SUF_LEN          # SOS + ctx + suffix = 8
S_VIS = 1 + N_PATCH                    # CLS + patches = 5
LOGIT_SCALE = math.log(1.0 / 0.07)
EPS_NORM = 1e-12


# --------------------------------- small helpers --------------------------------
def _full_spec(shape):
    return pl.BlockSpec(shape, lambda *_: (0,) * len(shape))


def _ln(x, g, b, eps=1e-5):
    mu = jnp.mean(x, axis=-1, keepdims=True)
    var = jnp.mean((x - mu) ** 2, axis=-1, keepdims=True)
    return (x - mu) * jax.lax.rsqrt(var + eps) * g + b


def _bf16_dot(x, w, b=None):
    # bf16 MXU operands, f32 accumulation; bias added in f32.
    y = jnp.dot(x.astype(jnp.bfloat16), w, preferred_element_type=jnp.float32)
    return y if b is None else y + b


# -------------------- fused transformer encoder (grid over layers) --------------
def _encoder_block_kernel(x_ref,
                          ln1_g_ref, ln1_b_ref, qkv_w_ref, qkv_b_ref,
                          out_w_ref, out_b_ref,
                          ln2_g_ref, ln2_b_ref, fc_w_ref, fc_b_ref,
                          proj_w_ref, proj_b_ref,
                          o_ref, *, n_heads, causal):
    """One CLIP ResidualAttentionBlock.  grid = (sequence, layer); the residual
    stream stays resident in the output VMEM block across the layer axis."""
    layer = pl.program_id(1)

    @pl.when(layer == 0)
    def _():
        o_ref[...] = x_ref[...]

    x = o_ref[...]                                   # (S, D) f32 residual stream
    S, D = x.shape
    dh = D // n_heads
    scale = 1.0 / math.sqrt(dh)

    # ------------------------------ attention ------------------------------
    h = _ln(x, ln1_g_ref[...], ln1_b_ref[...])
    qkv = _bf16_dot(h, qkv_w_ref[...], qkv_b_ref[...])          # (S, 3D) f32
    q = qkv[:, :D]
    k = qkv[:, D:2 * D]
    v = qkv[:, 2 * D:]

    if causal:                                       # CLIP text transformer mask
        row = jax.lax.broadcasted_iota(jnp.int32, (S, S), 0)
        col = jax.lax.broadcasted_iota(jnp.int32, (S, S), 1)

    heads = []
    for hh in range(n_heads):                        # static loop, lane slices
        sl = slice(hh * dh, (hh + 1) * dh)
        qh, kh, vh = q[:, sl], k[:, sl], v[:, sl]    # (S, dh)
        s = jax.lax.dot_general(qh, kh, (((1,), (1,)), ((), ())),
                                preferred_element_type=jnp.float32) * scale
        if causal:
            s = jnp.where(col <= row, s, jnp.float32(-1e30))
        s = s - jnp.max(s, axis=-1, keepdims=True)
        p = jnp.exp(s)
        p = p * pl.reciprocal(jnp.sum(p, axis=-1, keepdims=True), approx=True)
        heads.append(jnp.dot(p, vh, preferred_element_type=jnp.float32))
    attn = jnp.concatenate(heads, axis=-1)           # (S, D)
    x = x + _bf16_dot(attn, out_w_ref[...], out_b_ref[...])     # residual fused

    # --------------------------------- MLP ---------------------------------
    h = _ln(x, ln2_g_ref[...], ln2_b_ref[...])
    m = _bf16_dot(h, fc_w_ref[...], fc_b_ref[...])              # (S, 4D)
    m = m * jax.nn.sigmoid(1.702 * m)                           # QuickGELU
    x = x + _bf16_dot(m, proj_w_ref[...], proj_b_ref[...])      # residual fused

    o_ref[...] = x


def run_encoder(x, blocks, n_heads, causal):
    """x: (N, S, D) f32.  blocks: stacked per-layer weights, leading layer axis."""
    N, S, D = x.shape
    L = blocks["qkv_w"].shape[0]
    seq_spec = pl.BlockSpec((None, S, D), lambda n, l: (n, 0, 0))

    def wspec(a):
        return pl.BlockSpec((None,) + tuple(a.shape[1:]), lambda n, l: (l, 0, 0))

    order = ["ln1_g", "ln1_b", "qkv_w", "qkv_b", "out_w", "out_b",
             "ln2_g", "ln2_b", "fc_w", "fc_b", "proj_w", "proj_b"]
    weights = [blocks[k] for k in order]

    return pl.pallas_call(
        functools.partial(_encoder_block_kernel, n_heads=n_heads, causal=causal),
        out_shape=jax.ShapeDtypeStruct((N, S, D), jnp.float32),
        grid=(N, L),
        in_specs=[seq_spec] + [wspec(w) for w in weights],
        out_specs=seq_spec,
        compiler_params=pltpu.CompilerParams(
            dimension_semantics=("parallel", "arbitrary")),
    )(x, *weights)


# ------------- fused vision prologue: patch-embed + CLS + pos + pre-LN ----------
def _vis_embed_kernel(p_ref, w_ref, cls_ref, pos_ref, g_ref, b_ref, o_ref):
    Bn, S0, D = o_ref.shape
    P = S0 - 1
    pe = jnp.dot(p_ref[...].astype(jnp.bfloat16), w_ref[...],
                 preferred_element_type=jnp.float32)            # (B*P, D)
    pe = pe.reshape(Bn, P, D)
    cls = jnp.broadcast_to(cls_ref[...][None], (Bn, 1, D))
    x = jnp.concatenate([cls, pe], axis=1) + pos_ref[...][None]
    o_ref[...] = _ln(x, g_ref[...], b_ref[...])


def vis_embed(patches, w, cls_tok, pos, g, b, batch):
    M, K = patches.shape
    D = w.shape[1]
    S0 = pos.shape[0]
    return pl.pallas_call(
        _vis_embed_kernel,
        out_shape=jax.ShapeDtypeStruct((batch, S0, D), jnp.float32),
        in_specs=[_full_spec((M, K)), _full_spec((K, D)), _full_spec((1, D)),
                  _full_spec((S0, D)), _full_spec((1, D)), _full_spec((1, D))],
        out_specs=_full_spec((batch, S0, D)),
    )(patches, w, cls_tok, pos, g, b)


# ------- fused text epilogue: EOT gather + ln_final + text_proj + L2-norm -------
def _text_head_kernel(x_ref, sel_ref, g_ref, b_ref, proj_ref, o_ref):
    x = x_ref[...]                                   # (N, L, D)
    sel = sel_ref[...]                               # (N, L) one-hot of EOT pos
    x_eot = jnp.sum(sel[:, :, None] * x, axis=1)     # gather via masked sum
    h = _ln(x_eot, g_ref[...], b_ref[...])           # LN commutes with token pick
    t = jnp.dot(h.astype(jnp.bfloat16), proj_ref[...],
                preferred_element_type=jnp.float32)
    t = t * jax.lax.rsqrt(jnp.sum(t * t, axis=-1, keepdims=True) + EPS_NORM)
    o_ref[...] = t


def text_head(x, sel, g, b, proj):
    N, L, D = x.shape
    return pl.pallas_call(
        _text_head_kernel,
        out_shape=jax.ShapeDtypeStruct((N, D), jnp.float32),
        in_specs=[_full_spec((N, L, D)), _full_spec((N, L)), _full_spec((1, D)),
                  _full_spec((1, D)), _full_spec((D, D))],
        out_specs=_full_spec((N, D)),
    )(x, sel, g, b, proj)


# ---- fused vision epilogue + logits: post-LN + proj + L2-norm + cosine sim -----
def _vis_head_logits_kernel(x_ref, g_ref, b_ref, proj_ref, txt_ref, scale_ref, o_ref):
    x = x_ref[...]
    cls = x[:, 0, :]                                 # (B, D) CLS token
    h = _ln(cls, g_ref[...], b_ref[...])
    v = jnp.dot(h.astype(jnp.bfloat16), proj_ref[...],
                preferred_element_type=jnp.float32)
    v = v * jax.lax.rsqrt(jnp.sum(v * v, axis=-1, keepdims=True) + EPS_NORM)
    txt = txt_ref[...]                               # already L2-normalized
    sim = jax.lax.dot_general(v, txt, (((1,), (1,)), ((), ())),
                              preferred_element_type=jnp.float32)
    o_ref[...] = scale_ref[0] * sim                  # scale = exp(logit_scale), SMEM


def vis_head_logits(x, g, b, proj, txt, scale):
    Bn, S, D = x.shape
    Nc = txt.shape[0]
    return pl.pallas_call(
        _vis_head_logits_kernel,
        out_shape=jax.ShapeDtypeStruct((Bn, Nc), jnp.float32),
        in_specs=[_full_spec((Bn, S, D)), _full_spec((1, D)), _full_spec((1, D)),
                  _full_spec((D, D)), _full_spec((Nc, D)),
                  pl.BlockSpec(memory_space=pltpu.MemorySpace.SMEM)],
        out_specs=_full_spec((Bn, Nc)),
    )(x, g, b, proj, txt, scale)


# ------------------------------------ helpers -----------------------------------
def patchify(x, p):
    # x: (B, C, H, W) NCHW -> (B, num_patches, C*p*p), matching conv1 weight layout
    Bn, Cn, H, W = x.shape
    x = x.reshape(Bn, Cn, H // p, p, W // p, p)
    x = x.transpose(0, 2, 4, 1, 3, 5)
    return x.reshape(Bn, (H // p) * (W // p), Cn * p * p)


# ------------------------------ parameters (synthetic) --------------------------
def init_params(key):
    keys = iter(jax.random.split(key, 64))

    def nrm(shape, std=0.02):
        return (std * jax.random.normal(next(keys), shape)).astype(jnp.float32)

    def stacked_blocks(d, mlp, L):
        # per-layer weights stacked along a leading layer axis; matmul weights bf16
        return dict(
            ln1_g=jnp.ones((L, 1, d), jnp.float32), ln1_b=jnp.zeros((L, 1, d), jnp.float32),
            qkv_w=nrm((L, d, 3 * d)).astype(jnp.bfloat16), qkv_b=jnp.zeros((L, 1, 3 * d), jnp.float32),
            out_w=nrm((L, d, d)).astype(jnp.bfloat16), out_b=jnp.zeros((L, 1, d), jnp.float32),
            ln2_g=jnp.ones((L, 1, d), jnp.float32), ln2_b=jnp.zeros((L, 1, d), jnp.float32),
            fc_w=nrm((L, d, mlp)).astype(jnp.bfloat16), fc_b=jnp.zeros((L, 1, mlp), jnp.float32),
            proj_w=nrm((L, mlp, d)).astype(jnp.bfloat16), proj_b=jnp.zeros((L, 1, d), jnp.float32),
        )

    # Synthetic CLIP-style token ids: [SOT, ctx*CTX_LEN, classname, EOT, pad]
    toks = [[49406] + [104] * CTX_LEN + [300 + c, 49407, 0] for c in range(N_CLS)]
    patch_w = nrm((V_DIM, C, PATCH, PATCH))          # conv1 weight, no bias

    return dict(
        # text prompt construction (construct_prompt)
        prompt_emb=nrm((CTX_LEN, T_DIM)),
        sos_emb=nrm((N_CLS, 1, T_DIM)),              # token_embedding(SOS), synthetic
        class_emb=nrm((N_CLS, SUF_LEN, T_DIM)),      # token_embedding(class toks), synthetic
        tokens=jnp.array(toks, jnp.int32),
        # text encoder
        text_pos=nrm((L_TXT, T_DIM)),
        text_blocks=stacked_blocks(T_DIM, 4 * T_DIM, N_LAYERS),
        ln_final_g=jnp.ones((1, T_DIM), jnp.float32),
        ln_final_b=jnp.zeros((1, T_DIM), jnp.float32),
        text_proj=nrm((T_DIM, T_DIM)).astype(jnp.bfloat16),
        # visual encoder
        patch_w_flat=patch_w.reshape(V_DIM, C * PATCH * PATCH).T.astype(jnp.bfloat16),
        cls_emb=nrm((1, V_DIM)),
        vis_pos=nrm((S_VIS, V_DIM)),
        pre_ln_g=jnp.ones((1, V_DIM), jnp.float32),
        pre_ln_b=jnp.zeros((1, V_DIM), jnp.float32),
        vis_blocks=stacked_blocks(V_DIM, 4 * V_DIM, N_LAYERS),
        post_ln_g=jnp.ones((1, V_DIM), jnp.float32),
        post_ln_b=jnp.zeros((1, V_DIM), jnp.float32),
        vision_proj=nrm((V_DIM, V_DIM)).astype(jnp.bfloat16),
        logit_scale=jnp.float32(LOGIT_SCALE),
    )


# --------------------------------- forward pass ---------------------------------
@jax.jit
def forward(params, img):
    mean = jnp.array([0.485, 0.456, 0.406], jnp.float32).reshape(1, C, 1, 1)
    std = jnp.array([0.229, 0.224, 0.225], jnp.float32).reshape(1, C, 1, 1)
    pixel_values = (img - mean) / std                # transforms_clip normalize
    batch = img.shape[0]

    # -------- text branch: prompt = [SOS, learnable ctx, class tokens] --------
    context = jnp.broadcast_to(params["prompt_emb"][None], (N_CLS, CTX_LEN, T_DIM))
    prompt = jnp.concatenate([params["sos_emb"], context, params["class_emb"]], axis=1)
    x_txt = prompt + params["text_pos"][None]
    x_txt = run_encoder(x_txt, params["text_blocks"], N_HEADS, causal=True)
    eot_sel = jax.nn.one_hot(jnp.argmax(params["tokens"], axis=-1), L_TXT,
                             dtype=jnp.float32)
    text_f = text_head(x_txt, eot_sel, params["ln_final_g"], params["ln_final_b"],
                       params["text_proj"])          # (N_CLS, D), L2-normalized

    # -------- visual branch --------
    patches = patchify(pixel_values, PATCH).reshape(batch * N_PATCH, -1)
    x_vis = vis_embed(patches, params["patch_w_flat"], params["cls_emb"],
                      params["vis_pos"], params["pre_ln_g"], params["pre_ln_b"],
                      batch)                         # (B, S_VIS, D)
    x_vis = run_encoder(x_vis, params["vis_blocks"], N_HEADS, causal=False)

    # -------- logits: post-LN + proj + L2-norm + scaled cosine similarity --------
    scale = jnp.exp(params["logit_scale"]).reshape(1)    # logit_scale.exp()
    logits = vis_head_logits(x_vis, params["post_ln_g"], params["post_ln_b"],
                             params["vision_proj"], text_f, scale)
    return logits


if __name__ == "__main__":
    key = jax.random.PRNGKey(0)
    pkey, ikey = jax.random.split(key)
    params = init_params(pkey)
    img = jax.random.uniform(ikey, (B, C, IMG, IMG), jnp.float32)
    logits = forward(params, img)
    jax.block_until_ready(logits)
    assert logits.shape == (B, N_CLS), logits.shape
    assert bool(jnp.all(jnp.isfinite(logits)))
    print("KERNEL_OK")
</pallas_src>

<mosaic_0001>
module attributes {stable_mosaic.version = 11 : i64} {
  func.func @_vis_embed_kernel(%arg0: memref<8x192xf32, #tpu.memory_space<vmem>>, %arg1: memref<192x32xbf16, #tpu.memory_space<vmem>>, %arg2: memref<1x32xf32, #tpu.memory_space<vmem>>, %arg3: memref<5x32xf32, #tpu.memory_space<vmem>>, %arg4: memref<1x32xf32, #tpu.memory_space<vmem>>, %arg5: memref<1x32xf32, #tpu.memory_space<vmem>>, %arg6: memref<2x5x32xf32, #tpu.memory_space<vmem>>) attributes {dimension_semantics = [], scalar_prefetch = 0 : i64, scratch_operands = 0 : i64, tpu.core_type = #tpu.core_type<tc>} {
    %c0 = arith.constant 0 : index
    %c0_0 = arith.constant 0 : index
    %0 = vector.load %arg0[%c0, %c0_0] : memref<8x192xf32, #tpu.memory_space<vmem>>, vector<8x192xf32>
    %1 = arith.truncf %0 : vector<8x192xf32> to vector<8x192xbf16>
    %c0_1 = arith.constant 0 : index
    %c0_2 = arith.constant 0 : index
    %2 = vector.load %arg1[%c0_1, %c0_2] : memref<192x32xbf16, #tpu.memory_space<vmem>>, vector<192x32xbf16>
    %cst = arith.constant dense<0.000000e+00> : vector<8x32xf32>
    %3 = tpu.matmul %1, %2, %cst {dimension_numbers = #tpu.dot_dimension_numbers<[1], [0], [0], [1], [0, 0, 1, 1], [], []>} : vector<8x192xbf16>, vector<192x32xbf16>, vector<8x32xf32> -> vector<8x32xf32>
    %4 = vector.shape_cast %3 : vector<8x32xf32> to vector<2x4x32xf32>
    %c0_3 = arith.constant 0 : index
    %c0_4 = arith.constant 0 : index
    %5 = vector.load %arg2[%c0_3, %c0_4] : memref<1x32xf32, #tpu.memory_space<vmem>>, vector<1x32xf32>
    %6 = vector.shape_cast %5 : vector<1x32xf32> to vector<1x1x32xf32>
    %7 = vector.shape_cast %6 : vector<1x1x32xf32> to vector<1x1x32xf32>
    %8 = vector.broadcast %7 : vector<1x1x32xf32> to vector<2x1x32xf32>
    %9 = tpu.concatenate %8, %4 in 1 : vector<2x1x32xf32>, vector<2x4x32xf32> -> vector<2x5x32xf32>
    %c0_5 = arith.constant 0 : index
    %c0_6 = arith.constant 0 : index
    %10 = vector.load %arg3[%c0_5, %c0_6] : memref<5x32xf32, #tpu.memory_space<vmem>>, vector<5x32xf32>
    %11 = vector.shape_cast %10 : vector<5x32xf32> to vector<1x5x32xf32>
    %12 = vector.broadcast %11 : vector<1x5x32xf32> to vector<2x5x32xf32>
    %13 = arith.addf %9, %12 : vector<2x5x32xf32>
    %c0_7 = arith.constant 0 : index
    %c0_8 = arith.constant 0 : index
    %14 = vector.load %arg4[%c0_7, %c0_8] : memref<1x32xf32, #tpu.memory_space<vmem>>, vector<1x32xf32>
    %c0_9 = arith.constant 0 : index
    %c0_10 = arith.constant 0 : index
    %15 = vector.load %arg5[%c0_9, %c0_10] : memref<1x32xf32, #tpu.memory_space<vmem>>, vector<1x32xf32>
    %cst_11 = arith.constant dense<0.000000e+00> : vector<2x5xf32>
    %16 = vector.multi_reduction <add>, %13, %cst_11 [2] : vector<2x5x32xf32> to vector<2x5xf32>
    %17 = vector.shape_cast %16 : vector<2x5xf32> to vector<2x5x1xf32>
    %cst_12 = arith.constant 3.200000e+01 : f32
    %18 = vector.broadcast %cst_12 : f32 to vector<2x5x1xf32>
    %19 = arith.divf %17, %18 : vector<2x5x1xf32>
    %20 = vector.broadcast %19 : vector<2x5x1xf32> to vector<2x5x32xf32>
    %21 = arith.subf %13, %20 : vector<2x5x32xf32>
    %22 = arith.mulf %21, %21 : vector<2x5x32xf32>
    %cst_13 = arith.constant dense<0.000000e+00> : vector<2x5xf32>
    %23 = vector.multi_reduction <add>, %22, %cst_13 [2] : vector<2x5x32xf32> to vector<2x5xf32>
    %24 = vector.shape_cast %23 : vector<2x5xf32> to vector<2x5x1xf32>
    %cst_14 = arith.constant 3.200000e+01 : f32
    %25 = vector.broadcast %cst_14 : f32 to vector<2x5x1xf32>
    %26 = arith.divf %24, %25 : vector<2x5x1xf32>
    %27 = vector.broadcast %19 : vector<2x5x1xf32> to vector<2x5x32xf32>
    %28 = arith.subf %13, %27 : vector<2x5x32xf32>
    %cst_15 = arith.constant 9.99999974E-6 : f32
    %29 = vector.broadcast %cst_15 : f32 to vector<2x5x1xf32>
    %30 = arith.addf %26, %29 : vector<2x5x1xf32>
    %31 = math.rsqrt %30 : vector<2x5x1xf32>
    %32 = vector.broadcast %31 : vector<2x5x1xf32> to vector<2x5x32xf32>
    %33 = arith.mulf %28, %32 : vector<2x5x32xf32>
    %34 = vector.shape_cast %14 : vector<1x32xf32> to vector<1x1x32xf32>
    %35 = vector.broadcast %34 : vector<1x1x32xf32> to vector<2x5x32xf32>
    %36 = arith.mulf %33, %35 : vector<2x5x32xf32>
    %37 = vector.shape_cast %15 : vector<1x32xf32> to vector<1x1x32xf32>
    %38 = vector.broadcast %37 : vector<1x1x32xf32> to vector<2x5x32xf32>
    %39 = arith.addf %36, %38 : vector<2x5x32xf32>
    %c0_16 = arith.constant 0 : index
    %c0_17 = arith.constant 0 : index
    %c0_18 = arith.constant 0 : index
    %40 = vector.load %arg6[%c0_16, %c0_17, %c0_18] : memref<2x5x32xf32, #tpu.memory_space<vmem>>, vector<2x5x32xf32>
    tpu.vector_store %arg6[%c0_16, %c0_17, %c0_18], %39 {strides = array<i32>} : memref<2x5x32xf32, #tpu.memory_space<vmem>>, vector<2x5x32xf32>,
    return
  }
}

module attributes {stable_mosaic.version = 11 : i64} {
  func.func @_encoder_block_kernel(%arg0: i32, %arg1: i32, %arg2: memref<1x5x32xf32, #tpu.memory_space<vmem>>, %arg3: memref<1x1x32xf32, #tpu.memory_space<vmem>>, %arg4: memref<1x1x32xf32, #tpu.memory_space<vmem>>, %arg5: memref<1x32x96xbf16, #tpu.memory_space<vmem>>, %arg6: memref<1x1x96xf32, #tpu.memory_space<vmem>>, %arg7: memref<1x32x32xbf16, #tpu.memory_space<vmem>>, %arg8: memref<1x1x32xf32, #tpu.memory_space<vmem>>, %arg9: memref<1x1x32xf32, #tpu.memory_space<vmem>>, %arg10: memref<1x1x32xf32, #tpu.memory_space<vmem>>, %arg11: memref<1x32x128xbf16, #tpu.memory_space<vmem>>, %arg12: memref<1x1x128xf32, #tpu.memory_space<vmem>>, %arg13: memref<1x128x32xbf16, #tpu.memory_space<vmem>>, %arg14: memref<1x1x32xf32, #tpu.memory_space<vmem>>, %arg15: memref<1x5x32xf32, #tpu.memory_space<vmem>>) attributes {dimension_semantics = [#tpu.dimension_semantics<parallel>, #tpu.dimension_semantics<arbitrary>], iteration_bounds = array<i64: 2, 2>, scalar_prefetch = 0 : i64, scratch_operands = 0 : i64, tpu.core_type = #tpu.core_type<tc>, window_params = [{transform_indices = @transform_0, window_bounds = array<i64: 1, 5, 32>}, {transform_indices = @transform_1, window_bounds = array<i64: 1, 1, 32>}, {transform_indices = @transform_2, window_bounds = array<i64: 1, 1, 32>}, {transform_indices = @transform_3, window_bounds = array<i64: 1, 32, 96>}, {transform_indices = @transform_4, window_bounds = array<i64: 1, 1, 96>}, {transform_indices = @transform_5, window_bounds = array<i64: 1, 32, 32>}, {transform_indices = @transform_6, window_bounds = array<i64: 1, 1, 32>}, {transform_indices = @transform_7, window_bounds = array<i64: 1, 1, 32>}, {transform_indices = @transform_8, window_bounds = array<i64: 1, 1, 32>}, {transform_indices = @transform_9, window_bounds = array<i64: 1, 32, 128>}, {transform_indices = @transform_10, window_bounds = array<i64: 1, 1, 128>}, {transform_indices = @transform_11, window_bounds = array<i64: 1, 128, 32>}, {transform_indices = @transform_12, window_bounds = array<i64: 1, 1, 32>}, {transform_indices = @transform_13, window_bounds = array<i64: 1, 5, 32>}]} {
    %c0_i32 = arith.constant 0 : i32
    %0 = arith.cmpi eq, %arg1, %c0_i32 : i32
    %1 = arith.extui %0 : i1 to i32
    %c0_i32_0 = arith.constant 0 : i32
    %2 = arith.cmpi ne, %1, %c0_i32_0 : i32
    scf.if %2 {
      %c0_77 = arith.constant 0 : index
      %c0_78 = arith.constant 0 : index
      %c0_79 = arith.constant 0 : index
      %174 = vector.load %arg2[%c0_77, %c0_78, %c0_79] : memref<1x5x32xf32, #tpu.memory_space<vmem>>, vector<1x5x32xf32>
      %175 = vector.shape_cast %174 : vector<1x5x32xf32> to vector<5x32xf32>
      %c0_80 = arith.constant 0 : index
      %c0_81 = arith.constant 0 : index
      %c0_82 = arith.constant 0 : index
      %176 = vector.load %arg15[%c0_80, %c0_81, %c0_82] : memref<1x5x32xf32, #tpu.memory_space<vmem>>, vector<1x5x32xf32>
      %177 = vector.shape_cast %176 : vector<1x5x32xf32> to vector<5x32xf32>
      %178 = vector.shape_cast %175 : vector<5x32xf32> to vector<1x5x32xf32>
      tpu.vector_store %arg15[%c0_80, %c0_81, %c0_82], %178 {strides = array<i32>} : memref<1x5x32xf32, #tpu.memory_space<vmem>>, vector<1x5x32xf32>,
    } else {
    }
    %c0 = arith.constant 0 : index
    %c0_1 = arith.constant 0 : index
    %c0_2 = arith.constant 0 : index
    %3 = vector.load %arg15[%c0, %c0_1, %c0_2] : memref<1x5x32xf32, #tpu.memory_space<vmem>>, vector<1x5x32xf32>
    %4 = vector.shape_cast %3 : vector<1x5x32xf32> to vector<5x32xf32>
    %c0_3 = arith.constant 0 : index
    %c0_4 = arith.constant 0 : index
    %c0_5 = arith.constant 0 : index
    %5 = vector.load %arg3[%c0_3, %c0_4, %c0_5] : memref<1x1x32xf32, #tpu.memory_space<vmem>>, vector<1x1x32xf32>
    %6 = vector.shape_cast %5 : vector<1x1x32xf32> to vector<1x32xf32>
    %c0_6 = arith.constant 0 : index
    %c0_7 = arith.constant 0 : index
    %c0_8 = arith.constant 0 : index
    %7 = vector.load %arg4[%c0_6, %c0_7, %c0_8] : memref<1x1x32xf32, #tpu.memory_space<vmem>>, vector<1x1x32xf32>
    %8 = vector.shape_cast %7 : vector<1x1x32xf32> to vector<1x32xf32>
    %cst = arith.constant dense<0.000000e+00> : vector<5xf32>
    %9 = vector.multi_reduction <add>, %4, %cst [1] : vector<5x32xf32> to vector<5xf32>
    %10 = vector.shape_cast %9 : vector<5xf32> to vector<5x1xf32>
    %cst_9 = arith.constant 3.200000e+01 : f32
    %11 = vector.broadcast %cst_9 : f32 to vector<5x1xf32>
    %12 = arith.divf %10, %11 : vector<5x1xf32>
    %13 = vector.broadcast %12 : vector<5x1xf32> to vector<5x32xf32>
    %14 = arith.subf %4, %13 : vector<5x32xf32>
    %15 = arith.mulf %14, %14 : vector<5x32xf32>
    %cst_10 = arith.constant dense<0.000000e+00> : vector<5xf32>
    %16 = vector.multi_reduction <add>, %15, %cst_10 [1] : vector<5x32xf32> to vector<5xf32>
    %17 = vector.shape_cast %16 : vector<5xf32> to vector<5x1xf32>
    %cst_11 = arith.constant 3.200000e+01 : f32
    %18 = vector.broadcast %cst_11 : f32 to vector<5x1xf32>
    %19 = arith.divf %17, %18 : vector<5x1xf32>
    %20 = vector.broadcast %12 : vector<5x1xf32> to vector<5x32xf32>
    %21 = arith.subf %4, %20 : vector<5x32xf32>
    %cst_12 = arith.constant 9.99999974E-6 : f32
    %22 = vector.broadcast %cst_12 : f32 to vector<5x1xf32>
    %23 = arith.addf %19, %22 : vector<5x1xf32>
    %24 = math.rsqrt %23 : vector<5x1xf32>
    %25 = vector.broadcast %24 : vector<5x1xf32> to vector<5x32xf32>
    %26 = arith.mulf %21, %25 : vector<5x32xf32>
    %27 = vector.broadcast %6 : vector<1x32xf32> to vector<5x32xf32>
    %28 = arith.mulf %26, %27 : vector<5x32xf32>
    %29 = vector.broadcast %8 : vector<1x32xf32> to vector<5x32xf32>
    %30 = arith.addf %28, %29 : vector<5x32xf32>
    %c0_13 = arith.constant 0 : index
    %c0_14 = arith.constant 0 : index
    %c0_15 = arith.constant 0 : index
    %31 = vector.load %arg5[%c0_13, %c0_14, %c0_15] : memref<1x32x96xbf16, #tpu.memory_space<vmem>>, vector<1x32x96xbf16>
    %32 = vector.shape_cast %31 : vector<1x32x96xbf16> to vector<32x96xbf16>
    %c0_16 = arith.constant 0 : index
    %c0_17 = arith.constant 0 : index
    %c0_18 = arith.constant 0 : index
    %33 = vector.load %arg6[%c0_16, %c0_17, %c0_18] : memref<1x1x96xf32, #tpu.memory_space<vmem>>, vector<1x1x96xf32>
    %34 = vector.shape_cast %33 : vector<1x1x96xf32> to vector<1x96xf32>
    %35 = arith.truncf %30 : vector<5x32xf32> to vector<5x32xbf16>
    %cst_19 = arith.constant dense<0.000000e+00> : vector<5x96xf32>
    %36 = tpu.matmul %35, %32, %cst_19 {dimension_numbers = #tpu.dot_dimension_numbers<[1], [0], [0], [1], [0, 0, 1, 1], [], []>} : vector<5x32xbf16>, vector<32x96xbf16>, vector<5x96xf32> -> vector<5x96xf32>
    %37 = vector.broadcast %34 : vector<1x96xf32> to vector<5x96xf32>
    %38 = arith.addf %36, %37 : vector<5x96xf32>
    %39 = vector.extract_strided_slice %38 {offsets = [0, 0], sizes = [5, 32], strides = [1, 1]} : vector<5x96xf32> to vector<5x32xf32>
    %40 = vector.extract_strided_slice %38 {offsets = [0, 32], sizes = [5, 32], strides = [1, 1]} : vector<5x96xf32> to vector<5x32xf32>
    %41 = vector.extract_strided_slice %38 {offsets = [0, 64], sizes = [5, 32], strides = [1, 1]} : vector<5x96xf32> to vector<5x32xf32>
    %42 = vector.extract_strided_slice %39 {offsets = [0, 0], sizes = [5, 8], strides = [1, 1]} : vector<5x32xf32> to vector<5x8xf32>
    %43 = vector.extract_strided_slice %40 {offsets = [0, 0], sizes = [5, 8], strides = [1, 1]} : vector<5x32xf32> to vector<5x8xf32>
    %44 = vector.extract_strided_slice %41 {offsets = [0, 0], sizes = [5, 8], strides = [1, 1]} : vector<5x32xf32> to vector<5x8xf32>
    %cst_20 = arith.constant dense<0.000000e+00> : vector<5x5xf32>
    %45 = tpu.matmul %42, %43, %cst_20 {dimension_numbers = #tpu.dot_dimension_numbers<[1], [1], [0], [0], [0, 0, 1, 0], [], []>} : vector<5x8xf32>, vector<5x8xf32>, vector<5x5xf32> -> vector<5x5xf32>
    %cst_21 = arith.constant 0.353553385 : f32
    %46 = vector.broadcast %cst_21 : f32 to vector<5x5xf32>
    %47 = arith.mulf %45, %46 : vector<5x5xf32>
    %cst_22 = arith.constant dense<0xFF800000> : vector<5xf32>
    %48 = vector.multi_reduction <maximumf>, %47, %cst_22 [1] : vector<5x5xf32> to vector<5xf32>
    %49 = vector.shape_cast %48 : vector<5xf32> to vector<5x1xf32>
    %50 = vector.broadcast %49 : vector<5x1xf32> to vector<5x5xf32>
    %51 = arith.subf %47, %50 : vector<5x5xf32>
    %52 = math.exp %51 : vector<5x5xf32>
    %cst_23 = arith.constant dense<0.000000e+00> : vector<5xf32>
    %53 = vector.multi_reduction <add>, %52, %cst_23 [1] : vector<5x5xf32> to vector<5xf32>
    %54 = vector.shape_cast %53 : vector<5xf32> to vector<5x1xf32>
    %55 = tpu.reciprocal %54 {approx = true} : vector<5x1xf32> -> vector<5x1xf32>
    %56 = vector.broadcast %55 : vector<5x1xf32> to vector<5x5xf32>
    %57 = arith.mulf %52, %56 : vector<5x5xf32>
    %cst_24 = arith.constant dense<0.000000e+00> : vector<5x8xf32>
    %58 = tpu.matmul %57, %44, %cst_24 {dimension_numbers = #tpu.dot_dimension_numbers<[1], [0], [0], [1], [0, 0, 1, 1], [], []>} : vector<5x5xf32>, vector<5x8xf32>, vector<5x8xf32> -> vector<5x8xf32>
    %59 = vector.extract_strided_slice %39 {offsets = [0, 8], sizes = [5, 8], strides = [1, 1]} : vector<5x32xf32> to vector<5x8xf32>
    %60 = vector.extract_strided_slice %40 {offsets = [0, 8], sizes = [5, 8], strides = [1, 1]} : vector<5x32xf32> to vector<5x8xf32>
    %61 = vector.extract_strided_slice %41 {offsets = [0, 8], sizes = [5, 8], strides = [1, 1]} : vector<5x32xf32> to vector<5x8xf32>
    %cst_25 = arith.constant dense<0.000000e+00> : vector<5x5xf32>
    %62 = tpu.matmul %59, %60, %cst_25 {dimension_numbers = #tpu.dot_dimension_numbers<[1], [1], [0], [0], [0, 0, 1, 0], [], []>} : vector<5x8xf32>, vector<5x8xf32>, vector<5x5xf32> -> vector<5x5xf32>
    %cst_26 = arith.constant 0.353553385 : f32
    %63 = vector.broadcast %cst_26 : f32 to vector<5x5xf32>
    %64 = arith.mulf %62, %63 : vector<5x5xf32>
    %cst_27 = arith.constant dense<0xFF800000> : vector<5xf32>
    %65 = vector.multi_reduction <maximumf>, %64, %cst_27 [1] : vector<5x5xf32> to vector<5xf32>
    %66 = vector.shape_cast %65 : vector<5xf32> to vector<5x1xf32>
    %67 = vector.broadcast %66 : vector<5x1xf32> to vector<5x5xf32>
    %68 = arith.subf %64, %67 : vector<5x5xf32>
    %69 = math.exp %68 : vector<5x5xf32>
    %cst_28 = arith.constant dense<0.000000e+00> : vector<5xf32>
    %70 = vector.multi_reduction <add>, %69, %cst_28 [1] : vector<5x5xf32> to vector<5xf32>
    %71 = vector.shape_cast %70 : vector<5xf32> to vector<5x1xf32>
    %72 = tpu.reciprocal %71 {approx = true} : vector<5x1xf32> -> vector<5x1xf32>
    %73 = vector.broadcast %72 : vector<5x1xf32> to vector<5x5xf32>
    %74 = arith.mulf %69, %73 : vector<5x5xf32>
    %cst_29 = arith.constant dense<0.000000e+00> : vector<5x8xf32>
    %75 = tpu.matmul %74, %61, %cst_29 {dimension_numbers = #tpu.dot_dimension_numbers<[1], [0], [0], [1], [0, 0, 1, 1], [], []>} : vector<5x5xf32>, vector<5x8xf32>, vector<5x8xf32> -> vector<5x8xf32>
    %76 = vector.extract_strided_slice %39 {offsets = [0, 16], sizes = [5, 8], strides = [1, 1]} : vector<5x32xf32> to vector<5x8xf32>
    %77 = vector.extract_strided_slice %40 {offsets = [0, 16], sizes = [5, 8], strides = [1, 1]} : vector<5x32xf32> to vector<5x8xf32>
    %78 = vector.extract_strided_slice %41 {offsets = [0, 16], sizes = [5, 8], strides = [1, 1]} : vector<5x32xf32> to vector<5x8xf32>
    %cst_30 = arith.constant dense<0.000000e+00> : vector<5x5xf32>
    %79 = tpu.matmul %76, %77, %cst_30 {dimension_numbers = #tpu.dot_dimension_numbers<[1], [1], [0], [0], [0, 0, 1, 0], [], []>} : vector<5x8xf32>, vector<5x8xf32>, vector<5x5xf32> -> vector<5x5xf32>
    %cst_31 = arith.constant 0.353553385 : f32
    %80 = vector.broadcast %cst_31 : f32 to vector<5x5xf32>
    %81 = arith.mulf %79, %80 : vector<5x5xf32>
    %cst_32 = arith.constant dense<0xFF800000> : vector<5xf32>
    %82 = vector.multi_reduction <maximumf>, %81, %cst_32 [1] : vector<5x5xf32> to vector<5xf32>
    %83 = vector.shape_cast %82 : vector<5xf32> to vector<5x1xf32>
    %84 = vector.broadcast %83 : vector<5x1xf32> to vector<5x5xf32>
    %85 = arith.subf %81, %84 : vector<5x5xf32>
    %86 = math.exp %85 : vector<5x5xf32>
    %cst_33 = arith.constant dense<0.000000e+00> : vector<5xf32>
    %87 = vector.multi_reduction <add>, %86, %cst_33 [1] : vector<5x5xf32> to vector<5xf32>
    %88 = vector.shape_cast %87 : vector<5xf32> to vector<5x1xf32>
    %89 = tpu.reciprocal %88 {approx = true} : vector<5x1xf32> -> vector<5x1xf32>
    %90 = vector.broadcast %89 : vector<5x1xf32> to vector<5x5xf32>
    %91 = arith.mulf %86, %90 : vector<5x5xf32>
    %cst_34 = arith.constant dense<0.000000e+00> : vector<5x8xf32>
    %92 = tpu.matmul %91, %78, %cst_34 {dimension_numbers = #tpu.dot_dimension_numbers<[1], [0], [0], [1], [0, 0, 1, 1], [], []>} : vector<5x5xf32>, vector<5x8xf32>, vector<5x8xf32> -> vector<5x8xf32>
    %93 = vector.extract_strided_slice %39 {offsets = [0, 24], sizes = [5, 8], strides = [1, 1]} : vector<5x32xf32> to vector<5x8xf32>
    %94 = vector.extract_strided_slice %40 {offsets = [0, 24], sizes = [5, 8], strides = [1, 1]} : vector<5x32xf32> to vector<5x8xf32>
    %95 = vector.extract_strided_slice %41 {offsets = [0, 24], sizes = [5, 8], strides = [1, 1]} : vector<5x32xf32> to vector<5x8xf32>
    %cst_35 = arith.constant dense<0.000000e+00> : vector<5x5xf32>
    %96 = tpu.matmul %93, %94, %cst_35 {dimension_numbers = #tpu.dot_dimension_numbers<[1], [1], [0], [0], [0, 0, 1, 0], [], []>} : vector<5x8xf32>, vector<5x8xf32>, vector<5x5xf32> -> vector<5x5xf32>
    %cst_36 = arith.constant 0.353553385 : f32
    %97 = vector.broadcast %cst_36 : f32 to vector<5x5xf32>
    %98 = arith.mulf %96, %97 : vector<5x5xf32>
    %cst_37 = arith.constant dense<0xFF800000> : vector<5xf32>
    %99 = vector.multi_reduction <maximumf>, %98, %cst_37 [1] : vector<5x5xf32> to vector<5xf32>
    %100 = vector.shape_cast %99 : vector<5xf32> to vector<5x1xf32>
    %101 = vector.broadcast %100 : vector<5x1xf32> to vector<5x5xf32>
    %102 = arith.subf %98, %101 : vector<5x5xf32>
    %103 = math.exp %102 : vector<5x5xf32>
    %cst_38 = arith.constant dense<0.000000e+00> : vector<5xf32>
    %104 = vector.multi_reduction <add>, %103, %cst_38 [1] : vector<5x5xf32> to vector<5xf32>
    %105 = vector.shape_cast %104 : vector<5xf32> to vector<5x1xf32>
    %106 = tpu.reciprocal %105 {approx = true} : vector<5x1xf32> -> vector<5x1xf32>
    %107 = vector.broadcast %106 : vector<5x1xf32> to vector<5x5xf32>
    %108 = arith.mulf %103, %107 : vector<5x5xf32>
    %cst_39 = arith.constant dense<0.000000e+00> : vector<5x8xf32>
    %109 = tpu.matmul %108, %95, %cst_39 {dimension_numbers = #tpu.dot_dimension_numbers<[1], [0], [0], [1], [0, 0, 1, 1], [], []>} : vector<5x5xf32>, vector<5x8xf32>, vector<5x8xf32> -> vector<5x8xf32>
    %110 = tpu.concatenate %58, %75, %92, %109 in 1 : vector<5x8xf32>, vector<5x8xf32>, vector<5x8xf32>, vector<5x8xf32> -> vector<5x32xf32>
    %c0_40 = arith.constant 0 : index
    %c0_41 = arith.constant 0 : index
    %c0_42 = arith.constant 0 : index
    %111 = vector.load %arg7[%c0_40, %c0_41, %c0_42] : memref<1x32x32xbf16, #tpu.memory_space<vmem>>, vector<1x32x32xbf16>
    %112 = vector.shape_cast %111 : vector<1x32x32xbf16> to vector<32x32xbf16>
    %c0_43 = arith.constant 0 : index
    %c0_44 = arith.constant 0 : index
    %c0_45 = arith.constant 0 : index
    %113 = vector.load %arg8[%c0_43, %c0_44, %c0_45] : memref<1x1x32xf32, #tpu.memory_space<vmem>>, vector<1x1x32xf32>
    %114 = vector.shape_cast %113 : vector<1x1x32xf32> to vector<1x32xf32>
    %115 = arith.truncf %110 : vector<5x32xf32> to vector<5x32xbf16>
    %cst_46 = arith.constant dense<0.000000e+00> : vector<5x32xf32>
    %116 = tpu.matmul %115, %112, %cst_46 {dimension_numbers = #tpu.dot_dimension_numbers<[1], [0], [0], [1], [0, 0, 1, 1], [], []>} : vector<5x32xbf16>, vector<32x32xbf16>, vector<5x32xf32> -> vector<5x32xf32>
    %117 = vector.broadcast %114 : vector<1x32xf32> to vector<5x32xf32>
    %118 = arith.addf %116, %117 : vector<5x32xf32>
    %119 = arith.addf %4, %118 : vector<5x32xf32>
    %c0_47 = arith.constant 0 : index
    %c0_48 = arith.constant 0 : index
    %c0_49 = arith.constant 0 : index
    %120 = vector.load %arg9[%c0_47, %c0_48, %c0_49] : memref<1x1x32xf32, #tpu.memory_space<vmem>>, vector<1x1x32xf32>
    %121 = vector.shape_cast %120 : vector<1x1x32xf32> to vector<1x32xf32>
    %c0_50 = arith.constant 0 : index
    %c0_51 = arith.constant 0 : index
    %c0_52 = arith.constant 0 : index
    %122 = vector.load %arg10[%c0_50, %c0_51, %c0_52] : memref<1x1x32xf32, #tpu.memory_space<vmem>>, vector<1x1x32xf32>
    %123 = vector.shape_cast %122 : vector<1x1x32xf32> to vector<1x32xf32>
    %cst_53 = arith.constant dense<0.000000e+00> : vector<5xf32>
    %124 = vector.multi_reduction <add>, %119, %cst_53 [1] : vector<5x32xf32> to vector<5xf32>
    %125 = vector.shape_cast %124 : vector<5xf32> to vector<5x1xf32>
    %cst_54 = arith.constant 3.200000e+01 : f32
    %126 = vector.broadcast %cst_54 : f32 to vector<5x1xf32>
    %127 = arith.divf %125, %126 : vector<5x1xf32>
    %128 = vector.broadcast %127 : vector<5x1xf32> to vector<5x32xf32>
    %129 = arith.subf %119, %128 : vector<5x32xf32>
    %130 = arith.mulf %129, %129 : vector<5x32xf32>
    %cst_55 = arith.constant dense<0.000000e+00> : vector<5xf32>
    %131 = vector.multi_reduction <add>, %130, %cst_55 [1] : vector<5x32xf32> to vector<5xf32>
    %132 = vector.shape_cast %131 : vector<5xf32> to vector<5x1xf32>
    %cst_56 = arith.constant 3.200000e+01 : f32
    %133 = vector.broadcast %cst_56 : f32 to vector<5x1xf32>
    %134 = arith.divf %132, %133 : vector<5x1xf32>
    %135 = vector.broadcast %127 : vector<5x1xf32> to vector<5x32xf32>
    %136 = arith.subf %119, %135 : vector<5x32xf32>
    %cst_57 = arith.constant 9.99999974E-6 : f32
    %137 = vector.broadcast %cst_57 : f32 to vector<5x1xf32>
    %138 = arith.addf %134, %137 : vector<5x1xf32>
    %139 = math.rsqrt %138 : vector<5x1xf32>
    %140 = vector.broadcast %139 : vector<5x1xf32> to vector<5x32xf32>
    %141 = arith.mulf %136, %140 : vector<5x32xf32>
    %142 = vector.broadcast %121 : vector<1x32xf32> to vector<5x32xf32>
    %143 = arith.mulf %141, %142 : vector<5x32xf32>
    %144 = vector.broadcast %123 : vector<1x32xf32> to vector<5x32xf32>
    %145 = arith.addf %143, %144 : vector<5x32xf32>
    %c0_58 = arith.constant 0 : index
    %c0_59 = arith.constant 0 : index
    %c0_60 = arith.constant 0 : index
    %146 = vector.load %arg11[%c0_58, %c0_59, %c0_60] : memref<1x32x128xbf16, #tpu.memory_space<vmem>>, vector<1x32x128xbf16>
    %147 = vector.shape_cast %146 : vector<1x32x128xbf16> to vector<32x128xbf16>
    %c0_61 = arith.constant 0 : index
    %c0_62 = arith.constant 0 : index
    %c0_63 = arith.constant 0 : index
    %148 = vector.load %arg12[%c0_61, %c0_62, %c0_63] : memref<1x1x128xf32, #tpu.memory_space<vmem>>, vector<1x1x128xf32>
    %149 = vector.shape_cast %148 : vector<1x1x128xf32> to vector<1x128xf32>
    %150 = arith.truncf %145 : vector<5x32xf32> to vector<5x32xbf16>
    %cst_64 = arith.constant dense<0.000000e+00> : vector<5x128xf32>
    %151 = tpu.matmul %150, %147, %cst_64 {dimension_numbers = #tpu.dot_dimension_numbers<[1], [0], [0], [1], [0, 0, 1, 1], [], []>} : vector<5x32xbf16>, vector<32x128xbf16>, vector<5x128xf32> -> vector<5x128xf32>
    %152 = vector.broadcast %149 : vector<1x128xf32> to vector<5x128xf32>
    %153 = arith.addf %151, %152 : vector<5x128xf32>
    %cst_65 = arith.constant 1.702000e+00 : f32
    %154 = vector.broadcast %cst_65 : f32 to vector<5x128xf32>
    %155 = arith.mulf %154, %153 : vector<5x128xf32>
    %156 = arith.negf %155 : vector<5x128xf32>
    %157 = math.exp %156 : vector<5x128xf32>
    %cst_66 = arith.constant 1.000000e+00 : f32
    %158 = vector.broadcast %cst_66 : f32 to vector<5x128xf32>
    %159 = arith.addf %158, %157 : vector<5x128xf32>
    %160 = arith.divf %158, %159 : vector<5x128xf32>
    %161 = arith.mulf %153, %160 : vector<5x128xf32>
    %c0_67 = arith.constant 0 : index
    %c0_68 = arith.constant 0 : index
    %c0_69 = arith.constant 0 : index
    %162 = vector.load %arg13[%c0_67, %c0_68, %c0_69] : memref<1x128x32xbf16, #tpu.memory_space<vmem>>, vector<1x128x32xbf16>
    %163 = vector.shape_cast %162 : vector<1x128x32xbf16> to vector<128x32xbf16>
    %c0_70 = arith.constant 0 : index
    %c0_71 = arith.constant 0 : index
    %c0_72 = arith.constant 0 : index
    %164 = vector.load %arg14[%c0_70, %c0_71, %c0_72] : memref<1x1x32xf32, #tpu.memory_space<vmem>>, vector<1x1x32xf32>
    %165 = vector.shape_cast %164 : vector<1x1x32xf32> to vector<1x32xf32>
    %166 = arith.truncf %161 : vector<5x128xf32> to vector<5x128xbf16>
    %cst_73 = arith.constant dense<0.000000e+00> : vector<5x32xf32>
    %167 = tpu.matmul %166, %163, %cst_73 {dimension_numbers = #tpu.dot_dimension_numbers<[1], [0], [0], [1], [0, 0, 1, 1], [], []>} : vector<5x128xbf16>, vector<128x32xbf16>, vector<5x32xf32> -> vector<5x32xf32>
    %168 = vector.broadcast %165 : vector<1x32xf32> to vector<5x32xf32>
    %169 = arith.addf %167, %168 : vector<5x32xf32>
    %170 = arith.addf %119, %169 : vector<5x32xf32>
    %c0_74 = arith.constant 0 : index
    %c0_75 = arith.constant 0 : index
    %c0_76 = arith.constant 0 : index
    %171 = vector.load %arg15[%c0_74, %c0_75, %c0_76] : memref<1x5x32xf32, #tpu.memory_space<vmem>>, vector<1x5x32xf32>
    %172 = vector.shape_cast %171 : vector<1x5x32xf32> to vector<5x32xf32>
    %173 = vector.shape_cast %170 : vector<5x32xf32> to vector<1x5x32xf32>
    tpu.vector_store %arg15[%c0_74, %c0_75, %c0_76], %173 {strides = array<i32>} : memref<1x5x32xf32, #tpu.memory_space<vmem>>, vector<1x5x32xf32>,
    return
  }
  func.func @transform_0(%arg0: i32, %arg1: i32) -> (i32, i32, i32) {
    %c0_i32 = arith.constant 0 : i32
    %c0_i32_0 = arith.constant 0 : i32
    %c0_i32_1 = arith.constant 0 : i32
    return %arg0, %c0_i32, %c0_i32_0 : i32, i32, i32
  }
  func.func @transform_1(%arg0: i32, %arg1: i32) -> (i32, i32, i32) {
    %c0_i32 = arith.constant 0 : i32
    %c0_i32_0 = arith.constant 0 : i32
    %c0_i32_1 = arith.constant 0 : i32
    return %arg1, %c0_i32, %c0_i32_0 : i32, i32, i32
  }
  func.func @transform_2(%arg0: i32, %arg1: i32) -> (i32, i32, i32) {
    %c0_i32 = arith.constant 0 : i32
    %c0_i32_0 = arith.constant 0 : i32
    %c0_i32_1 = arith.constant 0 : i32
    return %arg1, %c0_i32, %c0_i32_0 : i32, i32, i32
  }
  func.func @transform_3(%arg0: i32, %arg1: i32) -> (i32, i32, i32) {
    %c0_i32 = arith.constant 0 : i32
    %c0_i32_0 = arith.constant 0 : i32
    %c0_i32_1 = arith.constant 0 : i32
    return %arg1, %c0_i32, %c0_i32_0 : i32, i32, i32
  }
  func.func @transform_4(%arg0: i32, %arg1: i32) -> (i32, i32, i32) {
    %c0_i32 = arith.constant 0 : i32
    %c0_i32_0 = arith.constant 0 : i32
    %c0_i32_1 = arith.constant 0 : i32
    return %arg1, %c0_i32, %c0_i32_0 : i32, i32, i32
  }
  func.func @transform_5(%arg0: i32, %arg1: i32) -> (i32, i32, i32) {
    %c0_i32 = arith.constant 0 : i32
    %c0_i32_0 = arith.constant 0 : i32
    %c0_i32_1 = arith.constant 0 : i32
    return %arg1, %c0_i32, %c0_i32_0 : i32, i32, i32
  }
  func.func @transform_6(%arg0: i32, %arg1: i32) -> (i32, i32, i32) {
    %c0_i32 = arith.constant 0 : i32
    %c0_i32_0 = arith.constant 0 : i32
    %c0_i32_1 = arith.constant 0 : i32
    return %arg1, %c0_i32, %c0_i32_0 : i32, i32, i32
  }
  func.func @transform_7(%arg0: i32, %arg1: i32) -> (i32, i32, i32) {
    %c0_i32 = arith.constant 0 : i32
    %c0_i32_0 = arith.constant 0 : i32
    %c0_i32_1 = arith.constant 0 : i32
    return %arg1, %c0_i32, %c0_i32_0 : i32, i32, i32
  }
  func.func @transform_8(%arg0: i32, %arg1: i32) -> (i32, i32, i32) {
    %c0_i32 = arith.constant 0 : i32
    %c0_i32_0 = arith.constant 0 : i32
    %c0_i32_1 = arith.constant 0 : i32
    return %arg1, %c0_i32, %c0_i32_0 : i32, i32, i32
  }
  func.func @transform_9(%arg0: i32, %arg1: i32) -> (i32, i32, i32) {
    %c0_i32 = arith.constant 0 : i32
    %c0_i32_0 = arith.constant 0 : i32
    %c0_i32_1 = arith.constant 0 : i32
    return %arg1, %c0_i32, %c0_i32_0 : i32, i32, i32
  }
  func.func @transform_10(%arg0: i32, %arg1: i32) -> (i32, i32, i32) {
    %c0_i32 = arith.constant 0 : i32
    %c0_i32_0 = arith.constant 0 : i32
    %c0_i32_1 = arith.constant 0 : i32
    return %arg1, %c0_i32, %c0_i32_0 : i32, i32, i32
  }
  func.func @transform_11(%arg0: i32, %arg1: i32) -> (i32, i32, i32) {
    %c0_i32 = arith.constant 0 : i32
    %c0_i32_0 = arith.constant 0 : i32
    %c0_i32_1 = arith.constant 0 : i32
    return %arg1, %c0_i32, %c0_i32_0 : i32, i32, i32
  }
  func.func @transform_12(%arg0: i32, %arg1: i32) -> (i32, i32, i32) {
    %c0_i32 = arith.constant 0 : i32
    %c0_i32_0 = arith.constant 0 : i32
    %c0_i32_1 = arith.constant 0 : i32
    return %arg1, %c0_i32, %c0_i32_0 : i32, i32, i32
  }
  func.func @transform_13(%arg0: i32, %arg1: i32) -> (i32, i32, i32) {
    %c0_i32 = arith.constant 0 : i32
    %c0_i32_0 = arith.constant 0 : i32
    %c0_i32_1 = arith.constant 0 : i32
    return %arg0, %c0_i32, %c0_i32_0 : i32, i32, i32
  }
}

module attributes {stable_mosaic.version = 11 : i64} {
  func.func @_encoder_block_kernel(%arg0: i32, %arg1: i32, %arg2: memref<1x8x32xf32, #tpu.memory_space<vmem>>, %arg3: memref<1x1x32xf32, #tpu.memory_space<vmem>>, %arg4: memref<1x1x32xf32, #tpu.memory_space<vmem>>, %arg5: memref<1x32x96xbf16, #tpu.memory_space<vmem>>, %arg6: memref<1x1x96xf32, #tpu.memory_space<vmem>>, %arg7: memref<1x32x32xbf16, #tpu.memory_space<vmem>>, %arg8: memref<1x1x32xf32, #tpu.memory_space<vmem>>, %arg9: memref<1x1x32xf32, #tpu.memory_space<vmem>>, %arg10: memref<1x1x32xf32, #tpu.memory_space<vmem>>, %arg11: memref<1x32x128xbf16, #tpu.memory_space<vmem>>, %arg12: memref<1x1x128xf32, #tpu.memory_space<vmem>>, %arg13: memref<1x128x32xbf16, #tpu.memory_space<vmem>>, %arg14: memref<1x1x32xf32, #tpu.memory_space<vmem>>, %arg15: memref<1x8x32xf32, #tpu.memory_space<vmem>>) attributes {dimension_semantics = [#tpu.dimension_semantics<parallel>, #tpu.dimension_semantics<arbitrary>], iteration_bounds = array<i64: 3, 2>, scalar_prefetch = 0 : i64, scratch_operands = 0 : i64, tpu.core_type = #tpu.core_type<tc>, window_params = [{transform_indices = @transform_0, window_bounds = array<i64: 1, 8, 32>}, {transform_indices = @transform_1, window_bounds = array<i64: 1, 1, 32>}, {transform_indices = @transform_2, window_bounds = array<i64: 1, 1, 32>}, {transform_indices = @transform_3, window_bounds = array<i64: 1, 32, 96>}, {transform_indices = @transform_4, window_bounds = array<i64: 1, 1, 96>}, {transform_indices = @transform_5, window_bounds = array<i64: 1, 32, 32>}, {transform_indices = @transform_6, window_bounds = array<i64: 1, 1, 32>}, {transform_indices = @transform_7, window_bounds = array<i64: 1, 1, 32>}, {transform_indices = @transform_8, window_bounds = array<i64: 1, 1, 32>}, {transform_indices = @transform_9, window_bounds = array<i64: 1, 32, 128>}, {transform_indices = @transform_10, window_bounds = array<i64: 1, 1, 128>}, {transform_indices = @transform_11, window_bounds = array<i64: 1, 128, 32>}, {transform_indices = @transform_12, window_bounds = array<i64: 1, 1, 32>}, {transform_indices = @transform_13, window_bounds = array<i64: 1, 8, 32>}]} {
    %c0_i32 = arith.constant 0 : i32
    %0 = arith.cmpi eq, %arg1, %c0_i32 : i32
    %1 = arith.extui %0 : i1 to i32
    %c0_i32_0 = arith.constant 0 : i32
    %2 = arith.cmpi ne, %1, %c0_i32_0 : i32
    scf.if %2 {
      %c0_81 = arith.constant 0 : index
      %c0_82 = arith.constant 0 : index
      %c0_83 = arith.constant 0 : index
      %188 = vector.load %arg2[%c0_81, %c0_82, %c0_83] : memref<1x8x32xf32, #tpu.memory_space<vmem>>, vector<1x8x32xf32>
      %189 = vector.shape_cast %188 : vector<1x8x32xf32> to vector<8x32xf32>
      %c0_84 = arith.constant 0 : index
      %c0_85 = arith.constant 0 : index
      %c0_86 = arith.constant 0 : index
      %190 = vector.load %arg15[%c0_84, %c0_85, %c0_86] : memref<1x8x32xf32, #tpu.memory_space<vmem>>, vector<1x8x32xf32>
      %191 = vector.shape_cast %190 : vector<1x8x32xf32> to vector<8x32xf32>
      %192 = vector.shape_cast %189 : vector<8x32xf32> to vector<1x8x32xf32>
      tpu.vector_store %arg15[%c0_84, %c0_85, %c0_86], %192 {strides = array<i32>} : memref<1x8x32xf32, #tpu.memory_space<vmem>>, vector<1x8x32xf32>,
    } else {
    }
    %c0 = arith.constant 0 : index
    %c0_1 = arith.constant 0 : index
    %c0_2 = arith.constant 0 : index
    %3 = vector.load %arg15[%c0, %c0_1, %c0_2] : memref<1x8x32xf32, #tpu.memory_space<vmem>>, vector<1x8x32xf32>
    %4 = vector.shape_cast %3 : vector<1x8x32xf32> to vector<8x32xf32>
    %c0_3 = arith.constant 0 : index
    %c0_4 = arith.constant 0 : index
    %c0_5 = arith.constant 0 : index
    %5 = vector.load %arg3[%c0_3, %c0_4, %c0_5] : memref<1x1x32xf32, #tpu.memory_space<vmem>>, vector<1x1x32xf32>
    %6 = vector.shape_cast %5 : vector<1x1x32xf32> to vector<1x32xf32>
    %c0_6 = arith.constant 0 : index
    %c0_7 = arith.constant 0 : index
    %c0_8 = arith.constant 0 : index
    %7 = vector.load %arg4[%c0_6, %c0_7, %c0_8] : memref<1x1x32xf32, #tpu.memory_space<vmem>>, vector<1x1x32xf32>
    %8 = vector.shape_cast %7 : vector<1x1x32xf32> to vector<1x32xf32>
    %cst = arith.constant dense<0.000000e+00> : vector<8xf32>
    %9 = vector.multi_reduction <add>, %4, %cst [1] : vector<8x32xf32> to vector<8xf32>
    %10 = vector.shape_cast %9 : vector<8xf32> to vector<8x1xf32>
    %cst_9 = arith.constant 3.200000e+01 : f32
    %11 = vector.broadcast %cst_9 : f32 to vector<8x1xf32>
    %12 = arith.divf %10, %11 : vector<8x1xf32>
    %13 = vector.broadcast %12 : vector<8x1xf32> to vector<8x32xf32>
    %14 = arith.subf %4, %13 : vector<8x32xf32>
    %15 = arith.mulf %14, %14 : vector<8x32xf32>
    %cst_10 = arith.constant dense<0.000000e+00> : vector<8xf32>
    %16 = vector.multi_reduction <add>, %15, %cst_10 [1] : vector<8x32xf32> to vector<8xf32>
    %17 = vector.shape_cast %16 : vector<8xf32> to vector<8x1xf32>
    %cst_11 = arith.constant 3.200000e+01 : f32
    %18 = vector.broadcast %cst_11 : f32 to vector<8x1xf32>
    %19 = arith.divf %17, %18 : vector<8x1xf32>
    %20 = vector.broadcast %12 : vector<8x1xf32> to vector<8x32xf32>
    %21 = arith.subf %4, %20 : vector<8x32xf32>
    %cst_12 = arith.constant 9.99999974E-6 : f32
    %22 = vector.broadcast %cst_12 : f32 to vector<8x1xf32>
    %23 = arith.addf %19, %22 : vector<8x1xf32>
    %24 = math.rsqrt %23 : vector<8x1xf32>
    %25 = vector.broadcast %24 : vector<8x1xf32> to vector<8x32xf32>
    %26 = arith.mulf %21, %25 : vector<8x32xf32>
    %27 = vector.broadcast %6 : vector<1x32xf32> to vector<8x32xf32>
    %28 = arith.mulf %26, %27 : vector<8x32xf32>
    %29 = vector.broadcast %8 : vector<1x32xf32> to vector<8x32xf32>
    %30 = arith.addf %28, %29 : vector<8x32xf32>
    %c0_13 = arith.constant 0 : index
    %c0_14 = arith.constant 0 : index
    %c0_15 = arith.constant 0 : index
    %31 = vector.load %arg5[%c0_13, %c0_14, %c0_15] : memref<1x32x96xbf16, #tpu.memory_space<vmem>>, vector<1x32x96xbf16>
    %32 = vector.shape_cast %31 : vector<1x32x96xbf16> to vector<32x96xbf16>
    %c0_16 = arith.constant 0 : index
    %c0_17 = arith.constant 0 : index
    %c0_18 = arith.constant 0 : index
    %33 = vector.load %arg6[%c0_16, %c0_17, %c0_18] : memref<1x1x96xf32, #tpu.memory_space<vmem>>, vector<1x1x96xf32>
    %34 = vector.shape_cast %33 : vector<1x1x96xf32> to vector<1x96xf32>
    %35 = arith.truncf %30 : vector<8x32xf32> to vector<8x32xbf16>
    %cst_19 = arith.constant dense<0.000000e+00> : vector<8x96xf32>
    %36 = tpu.matmul %35, %32, %cst_19 {dimension_numbers = #tpu.dot_dimension_numbers<[1], [0], [0], [1], [0, 0, 1, 1], [], []>} : vector<8x32xbf16>, vector<32x96xbf16>, vector<8x96xf32> -> vector<8x96xf32>
    %37 = vector.broadcast %34 : vector<1x96xf32> to vector<8x96xf32>
    %38 = arith.addf %36, %37 : vector<8x96xf32>
    %39 = vector.extract_strided_slice %38 {offsets = [0, 0], sizes = [8, 32], strides = [1, 1]} : vector<8x96xf32> to vector<8x32xf32>
    %40 = vector.extract_strided_slice %38 {offsets = [0, 32], sizes = [8, 32], strides = [1, 1]} : vector<8x96xf32> to vector<8x32xf32>
    %41 = vector.extract_strided_slice %38 {offsets = [0, 64], sizes = [8, 32], strides = [1, 1]} : vector<8x96xf32> to vector<8x32xf32>
    %42 = tpu.iota {dimensions = array<i32: 0>} : vector<8x8xi32>
    %43 = tpu.iota {dimensions = array<i32: 1>} : vector<8x8xi32>
    %44 = vector.extract_strided_slice %39 {offsets = [0, 0], sizes = [8, 8], strides = [1, 1]} : vector<8x32xf32> to vector<8x8xf32>
    %45 = vector.extract_strided_slice %40 {offsets = [0, 0], sizes = [8, 8], strides = [1, 1]} : vector<8x32xf32> to vector<8x8xf32>
    %46 = vector.extract_strided_slice %41 {offsets = [0, 0], sizes = [8, 8], strides = [1, 1]} : vector<8x32xf32> to vector<8x8xf32>
    %cst_20 = arith.constant dense<0.000000e+00> : vector<8x8xf32>
    %47 = tpu.matmul %44, %45, %cst_20 {dimension_numbers = #tpu.dot_dimension_numbers<[1], [1], [0], [0], [0, 0, 1, 0], [], []>} : vector<8x8xf32>, vector<8x8xf32>, vector<8x8xf32> -> vector<8x8xf32>
    %cst_21 = arith.constant 0.353553385 : f32
    %48 = vector.broadcast %cst_21 : f32 to vector<8x8xf32>
    %49 = arith.mulf %47, %48 : vector<8x8xf32>
    %50 = arith.cmpi sle, %43, %42 : vector<8x8xi32>
    %cst_22 = arith.constant -1.000000e+30 : f32
    %51 = vector.broadcast %cst_22 : f32 to vector<8x8xf32>
    %52 = arith.select %50, %49, %51 : vector<8x8xi1>, vector<8x8xf32>
    %cst_23 = arith.constant dense<0xFF800000> : vector<8xf32>
    %53 = vector.multi_reduction <maximumf>, %52, %cst_23 [1] : vector<8x8xf32> to vector<8xf32>
    %54 = vector.shape_cast %53 : vector<8xf32> to vector<8x1xf32>
    %55 = vector.broadcast %54 : vector<8x1xf32> to vector<8x8xf32>
    %56 = arith.subf %52, %55 : vector<8x8xf32>
    %57 = math.exp %56 : vector<8x8xf32>
    %cst_24 = arith.constant dense<0.000000e+00> : vector<8xf32>
    %58 = vector.multi_reduction <add>, %57, %cst_24 [1] : vector<8x8xf32> to vector<8xf32>
    %59 = vector.shape_cast %58 : vector<8xf32> to vector<8x1xf32>
    %60 = tpu.reciprocal %59 {approx = true} : vector<8x1xf32> -> vector<8x1xf32>
    %61 = vector.broadcast %60 : vector<8x1xf32> to vector<8x8xf32>
    %62 = arith.mulf %57, %61 : vector<8x8xf32>
    %cst_25 = arith.constant dense<0.000000e+00> : vector<8x8xf32>
    %63 = tpu.matmul %62, %46, %cst_25 {dimension_numbers = #tpu.dot_dimension_numbers<[1], [0], [0], [1], [0, 0, 1, 1], [], []>} : vector<8x8xf32>, vector<8x8xf32>, vector<8x8xf32> -> vector<8x8xf32>
    %64 = vector.extract_strided_slice %39 {offsets = [0, 8], sizes = [8, 8], strides = [1, 1]} : vector<8x32xf32> to vector<8x8xf32>
    %65 = vector.extract_strided_slice %40 {offsets = [0, 8], sizes = [8, 8], strides = [1, 1]} : vector<8x32xf32> to vector<8x8xf32>
    %66 = vector.extract_strided_slice %41 {offsets = [0, 8], sizes = [8, 8], strides = [1, 1]} : vector<8x32xf32> to vector<8x8xf32>
    %cst_26 = arith.constant dense<0.000000e+00> : vector<8x8xf32>
    %67 = tpu.matmul %64, %65, %cst_26 {dimension_numbers = #tpu.dot_dimension_numbers<[1], [1], [0], [0], [0, 0, 1, 0], [], []>} : vector<8x8xf32>, vector<8x8xf32>, vector<8x8xf32> -> vector<8x8xf32>
    %cst_27 = arith.constant 0.353553385 : f32
    %68 = vector.broadcast %cst_27 : f32 to vector<8x8xf32>
    %69 = arith.mulf %67, %68 : vector<8x8xf32>
    %70 = arith.cmpi sle, %43, %42 : vector<8x8xi32>
    %cst_28 = arith.constant -1.000000e+30 : f32
    %71 = vector.broadcast %cst_28 : f32 to vector<8x8xf32>
    %72 = arith.select %70, %69, %71 : vector<8x8xi1>, vector<8x8xf32>
    %cst_29 = arith.constant dense<0xFF800000> : vector<8xf32>
    %73 = vector.multi_reduction <maximumf>, %72, %cst_29 [1] : vector<8x8xf32> to vector<8xf32>
    %74 = vector.shape_cast %73 : vector<8xf32> to vector<8x1xf32>
    %75 = vector.broadcast %74 : vector<8x1xf32> to vector<8x8xf32>
    %76 = arith.subf %72, %75 : vector<8x8xf32>
    %77 = math.exp %76 : vector<8x8xf32>
    %cst_30 = arith.constant dense<0.000000e+00> : vector<8xf32>
    %78 = vector.multi_reduction <add>, %77, %cst_30 [1] : vector<8x8xf32> to vector<8xf32>
    %79 = vector.shape_cast %78 : vector<8xf32> to vector<8x1xf32>
    %80 = tpu.reciprocal %79 {approx = true} : vector<8x1xf32> -> vector<8x1xf32>
    %81 = vector.broadcast %80 : vector<8x1xf32> to vector<8x8xf32>
    %82 = arith.mulf %77, %81 : vector<8x8xf32>
    %cst_31 = arith.constant dense<0.000000e+00> : vector<8x8xf32>
    %83 = tpu.matmul %82, %66, %cst_31 {dimension_numbers = #tpu.dot_dimension_numbers<[1], [0], [0], [1], [0, 0, 1, 1], [], []>} : vector<8x8xf32>, vector<8x8xf32>, vector<8x8xf32> -> vector<8x8xf32>
    %84 = vector.extract_strided_slice %39 {offsets = [0, 16], sizes = [8, 8], strides = [1, 1]} : vector<8x32xf32> to vector<8x8xf32>
    %85 = vector.extract_strided_slice %40 {offsets = [0, 16], sizes = [8, 8], strides = [1, 1]} : vector<8x32xf32> to vector<8x8xf32>
    %86 = vector.extract_strided_slice %41 {offsets = [0, 16], sizes = [8, 8], strides = [1, 1]} : vector<8x32xf32> to vector<8x8xf32>
    %cst_32 = arith.constant dense<0.000000e+00> : vector<8x8xf32>
    %87 = tpu.matmul %84, %85, %cst_32 {dimension_numbers = #tpu.dot_dimension_numbers<[1], [1], [0], [0], [0, 0, 1, 0], [], []>} : vector<8x8xf32>, vector<8x8xf32>, vector<8x8xf32> -> vector<8x8xf32>
    %cst_33 = arith.constant 0.353553385 : f32
    %88 = vector.broadcast %cst_33 : f32 to vector<8x8xf32>
    %89 = arith.mulf %87, %88 : vector<8x8xf32>
    %90 = arith.cmpi sle, %43, %42 : vector<8x8xi32>
    %cst_34 = arith.constant -1.000000e+30 : f32
    %91 = vector.broadcast %cst_34 : f32 to vector<8x8xf32>
    %92 = arith.select %90, %89, %91 : vector<8x8xi1>, vector<8x8xf32>
    %cst_35 = arith.constant dense<0xFF800000> : vector<8xf32>
    %93 = vector.multi_reduction <maximumf>, %92, %cst_35 [1] : vector<8x8xf32> to vector<8xf32>
    %94 = vector.shape_cast %93 : vector<8xf32> to vector<8x1xf32>
    %95 = vector.broadcast %94 : vector<8x1xf32> to vector<8x8xf32>
    %96 = arith.subf %92, %95 : vector<8x8xf32>
    %97 = math.exp %96 : vector<8x8xf32>
    %cst_36 = arith.constant dense<0.000000e+00> : vector<8xf32>
    %98 = vector.multi_reduction <add>, %97, %cst_36 [1] : vector<8x8xf32> to vector<8xf32>
    %99 = vector.shape_cast %98 : vector<8xf32> to vector<8x1xf32>
    %100 = tpu.reciprocal %99 {approx = true} : vector<8x1xf32> -> vector<8x1xf32>
    %101 = vector.broadcast %100 : vector<8x1xf32> to vector<8x8xf32>
    %102 = arith.mulf %97, %101 : vector<8x8xf32>
    %cst_37 = arith.constant dense<0.000000e+00> : vector<8x8xf32>
    %103 = tpu.matmul %102, %86, %cst_37 {dimension_numbers = #tpu.dot_dimension_numbers<[1], [0], [0], [1], [0, 0, 1, 1], [], []>} : vector<8x8xf32>, vector<8x8xf32>, vector<8x8xf32> -> vector<8x8xf32>
    %104 = vector.extract_strided_slice %39 {offsets = [0, 24], sizes = [8, 8], strides = [1, 1]} : vector<8x32xf32> to vector<8x8xf32>
    %105 = vector.extract_strided_slice %40 {offsets = [0, 24], sizes = [8, 8], strides = [1, 1]} : vector<8x32xf32> to vector<8x8xf32>
    %106 = vector.extract_strided_slice %41 {offsets = [0, 24], sizes = [8, 8], strides = [1, 1]} : vector<8x32xf32> to vector<8x8xf32>
    %cst_38 = arith.constant dense<0.000000e+00> : vector<8x8xf32>
    %107 = tpu.matmul %104, %105, %cst_38 {dimension_numbers = #tpu.dot_dimension_numbers<[1], [1], [0], [0], [0, 0, 1, 0], [], []>} : vector<8x8xf32>, vector<8x8xf32>, vector<8x8xf32> -> vector<8x8xf32>
    %cst_39 = arith.constant 0.353553385 : f32
    %108 = vector.broadcast %cst_39 : f32 to vector<8x8xf32>
    %109 = arith.mulf %107, %108 : vector<8x8xf32>
    %110 = arith.cmpi sle, %43, %42 : vector<8x8xi32>
    %cst_40 = arith.constant -1.000000e+30 : f32
    %111 = vector.broadcast %cst_40 : f32 to vector<8x8xf32>
    %112 = arith.select %110, %109, %111 : vector<8x8xi1>, vector<8x8xf32>
    %cst_41 = arith.constant dense<0xFF800000> : vector<8xf32>
    %113 = vector.multi_reduction <maximumf>, %112, %cst_41 [1] : vector<8x8xf32> to vector<8xf32>
    %114 = vector.shape_cast %113 : vector<8xf32> to vector<8x1xf32>
    %115 = vector.broadcast %114 : vector<8x1xf32> to vector<8x8xf32>
    %116 = arith.subf %112, %115 : vector<8x8xf32>
    %117 = math.exp %116 : vector<8x8xf32>
    %cst_42 = arith.constant dense<0.000000e+00> : vector<8xf32>
    %118 = vector.multi_reduction <add>, %117, %cst_42 [1] : vector<8x8xf32> to vector<8xf32>
    %119 = vector.shape_cast %118 : vector<8xf32> to vector<8x1xf32>
    %120 = tpu.reciprocal %119 {approx = true} : vector<8x1xf32> -> vector<8x1xf32>
    %121 = vector.broadcast %120 : vector<8x1xf32> to vector<8x8xf32>
    %122 = arith.mulf %117, %121 : vector<8x8xf32>
    %cst_43 = arith.constant dense<0.000000e+00> : vector<8x8xf32>
    %123 = tpu.matmul %122, %106, %cst_43 {dimension_numbers = #tpu.dot_dimension_numbers<[1], [0], [0], [1], [0, 0, 1, 1], [], []>} : vector<8x8xf32>, vector<8x8xf32>, vector<8x8xf32> -> vector<8x8xf32>
    %124 = tpu.concatenate %63, %83, %103, %123 in 1 : vector<8x8xf32>, vector<8x8xf32>, vector<8x8xf32>, vector<8x8xf32> -> vector<8x32xf32>
    %c0_44 = arith.constant 0 : index
    %c0_45 = arith.constant 0 : index
    %c0_46 = arith.constant 0 : index
    %125 = vector.load %arg7[%c0_44, %c0_45, %c0_46] : memref<1x32x32xbf16, #tpu.memory_space<vmem>>, vector<1x32x32xbf16>
    %126 = vector.shape_cast %125 : vector<1x32x32xbf16> to vector<32x32xbf16>
    %c0_47 = arith.constant 0 : index
    %c0_48 = arith.constant 0 : index
    %c0_49 = arith.constant 0 : index
    %127 = vector.load %arg8[%c0_47, %c0_48, %c0_49] : memref<1x1x32xf32, #tpu.memory_space<vmem>>, vector<1x1x32xf32>
    %128 = vector.shape_cast %127 : vector<1x1x32xf32> to vector<1x32xf32>
    %129 = arith.truncf %124 : vector<8x32xf32> to vector<8x32xbf16>
    %cst_50 = arith.constant dense<0.000000e+00> : vector<8x32xf32>
    %130 = tpu.matmul %129, %126, %cst_50 {dimension_numbers = #tpu.dot_dimension_numbers<[1], [0], [0], [1], [0, 0, 1, 1], [], []>} : vector<8x32xbf16>, vector<32x32xbf16>, vector<8x32xf32> -> vector<8x32xf32>
    %131 = vector.broadcast %128 : vector<1x32xf32> to vector<8x32xf32>
    %132 = arith.addf %130, %131 : vector<8x32xf32>
    %133 = arith.addf %4, %132 : vector<8x32xf32>
    %c0_51 = arith.constant 0 : index
    %c0_52 = arith.constant 0 : index
    %c0_53 = arith.constant 0 : index
    %134 = vector.load %arg9[%c0_51, %c0_52, %c0_53] : memref<1x1x32xf32, #tpu.memory_space<vmem>>, vector<1x1x32xf32>
    %135 = vector.shape_cast %134 : vector<1x1x32xf32> to vector<1x32xf32>
    %c0_54 = arith.constant 0 : index
    %c0_55 = arith.constant 0 : index
    %c0_56 = arith.constant 0 : index
    %136 = vector.load %arg10[%c0_54, %c0_55, %c0_56] : memref<1x1x32xf32, #tpu.memory_space<vmem>>, vector<1x1x32xf32>
    %137 = vector.shape_cast %136 : vector<1x1x32xf32> to vector<1x32xf32>
    %cst_57 = arith.constant dense<0.000000e+00> : vector<8xf32>
    %138 = vector.multi_reduction <add>, %133, %cst_57 [1] : vector<8x32xf32> to vector<8xf32>
    %139 = vector.shape_cast %138 : vector<8xf32> to vector<8x1xf32>
    %cst_58 = arith.constant 3.200000e+01 : f32
    %140 = vector.broadcast %cst_58 : f32 to vector<8x1xf32>
    %141 = arith.divf %139, %140 : vector<8x1xf32>
    %142 = vector.broadcast %141 : vector<8x1xf32> to vector<8x32xf32>
    %143 = arith.subf %133, %142 : vector<8x32xf32>
    %144 = arith.mulf %143, %143 : vector<8x32xf32>
    %cst_59 = arith.constant dense<0.000000e+00> : vector<8xf32>
    %145 = vector.multi_reduction <add>, %144, %cst_59 [1] : vector<8x32xf32> to vector<8xf32>
    %146 = vector.shape_cast %145 : vector<8xf32> to vector<8x1xf32>
    %cst_60 = arith.constant 3.200000e+01 : f32
    %147 = vector.broadcast %cst_60 : f32 to vector<8x1xf32>
    %148 = arith.divf %146, %147 : vector<8x1xf32>
    %149 = vector.broadcast %141 : vector<8x1xf32> to vector<8x32xf32>
    %150 = arith.subf %133, %149 : vector<8x32xf32>
    %cst_61 = arith.constant 9.99999974E-6 : f32
    %151 = vector.broadcast %cst_61 : f32 to vector<8x1xf32>
    %152 = arith.addf %148, %151 : vector<8x1xf32>
    %153 = math.rsqrt %152 : vector<8x1xf32>
    %154 = vector.broadcast %153 : vector<8x1xf32> to vector<8x32xf32>
    %155 = arith.mulf %150, %154 : vector<8x32xf32>
    %156 = vector.broadcast %135 : vector<1x32xf32> to vector<8x32xf32>
    %157 = arith.mulf %155, %156 : vector<8x32xf32>
    %158 = vector.broadcast %137 : vector<1x32xf32> to vector<8x32xf32>
    %159 = arith.addf %157, %158 : vector<8x32xf32>
    %c0_62 = arith.constant 0 : index
    %c0_63 = arith.constant 0 : index
    %c0_64 = arith.constant 0 : index
    %160 = vector.load %arg11[%c0_62, %c0_63, %c0_64] : memref<1x32x128xbf16, #tpu.memory_space<vmem>>, vector<1x32x128xbf16>
    %161 = vector.shape_cast %160 : vector<1x32x128xbf16> to vector<32x128xbf16>
    %c0_65 = arith.constant 0 : index
    %c0_66 = arith.constant 0 : index
    %c0_67 = arith.constant 0 : index
    %162 = vector.load %arg12[%c0_65, %c0_66, %c0_67] : memref<1x1x128xf32, #tpu.memory_space<vmem>>, vector<1x1x128xf32>
    %163 = vector.shape_cast %162 : vector<1x1x128xf32> to vector<1x128xf32>
    %164 = arith.truncf %159 : vector<8x32xf32> to vector<8x32xbf16>
    %cst_68 = arith.constant dense<0.000000e+00> : vector<8x128xf32>
    %165 = tpu.matmul %164, %161, %cst_68 {dimension_numbers = #tpu.dot_dimension_numbers<[1], [0], [0], [1], [0, 0, 1, 1], [], []>} : vector<8x32xbf16>, vector<32x128xbf16>, vector<8x128xf32> -> vector<8x128xf32>
    %166 = vector.broadcast %163 : vector<1x128xf32> to vector<8x128xf32>
    %167 = arith.addf %165, %166 : vector<8x128xf32>
    %cst_69 = arith.constant 1.702000e+00 : f32
    %168 = vector.broadcast %cst_69 : f32 to vector<8x128xf32>
    %169 = arith.mulf %168, %167 : vector<8x128xf32>
    %170 = arith.negf %169 : vector<8x128xf32>
    %171 = math.exp %170 : vector<8x128xf32>
    %cst_70 = arith.constant 1.000000e+00 : f32
    %172 = vector.broadcast %cst_70 : f32 to vector<8x128xf32>
    %173 = arith.addf %172, %171 : vector<8x128xf32>
    %174 = arith.divf %172, %173 : vector<8x128xf32>
    %175 = arith.mulf %167, %174 : vector<8x128xf32>
    %c0_71 = arith.constant 0 : index
    %c0_72 = arith.constant 0 : index
    %c0_73 = arith.constant 0 : index
    %176 = vector.load %arg13[%c0_71, %c0_72, %c0_73] : memref<1x128x32xbf16, #tpu.memory_space<vmem>>, vector<1x128x32xbf16>
    %177 = vector.shape_cast %176 : vector<1x128x32xbf16> to vector<128x32xbf16>
    %c0_74 = arith.constant 0 : index
    %c0_75 = arith.constant 0 : index
    %c0_76 = arith.constant 0 : index
    %178 = vector.load %arg14[%c0_74, %c0_75, %c0_76] : memref<1x1x32xf32, #tpu.memory_space<vmem>>, vector<1x1x32xf32>
    %179 = vector.shape_cast %178 : vector<1x1x32xf32> to vector<1x32xf32>
    %180 = arith.truncf %175 : vector<8x128xf32> to vector<8x128xbf16>
    %cst_77 = arith.constant dense<0.000000e+00> : vector<8x32xf32>
    %181 = tpu.matmul %180, %177, %cst_77 {dimension_numbers = #tpu.dot_dimension_numbers<[1], [0], [0], [1], [0, 0, 1, 1], [], []>} : vector<8x128xbf16>, vector<128x32xbf16>, vector<8x32xf32> -> vector<8x32xf32>
    %182 = vector.broadcast %179 : vector<1x32xf32> to vector<8x32xf32>
    %183 = arith.addf %181, %182 : vector<8x32xf32>
    %184 = arith.addf %133, %183 : vector<8x32xf32>
    %c0_78 = arith.constant 0 : index
    %c0_79 = arith.constant 0 : index
    %c0_80 = arith.constant 0 : index
    %185 = vector.load %arg15[%c0_78, %c0_79, %c0_80] : memref<1x8x32xf32, #tpu.memory_space<vmem>>, vector<1x8x32xf32>
    %186 = vector.shape_cast %185 : vector<1x8x32xf32> to vector<8x32xf32>
    %187 = vector.shape_cast %184 : vector<8x32xf32> to vector<1x8x32xf32>
    tpu.vector_store %arg15[%c0_78, %c0_79, %c0_80], %187 {strides = array<i32>} : memref<1x8x32xf32, #tpu.memory_space<vmem>>, vector<1x8x32xf32>,
    return
  }
  func.func @transform_0(%arg0: i32, %arg1: i32) -> (i32, i32, i32) {
    %c0_i32 = arith.constant 0 : i32
    %c0_i32_0 = arith.constant 0 : i32
    %c0_i32_1 = arith.constant 0 : i32
    return %arg0, %c0_i32, %c0_i32_0 : i32, i32, i32
  }
  func.func @transform_1(%arg0: i32, %arg1: i32) -> (i32, i32, i32) {
    %c0_i32 = arith.constant 0 : i32
    %c0_i32_0 = arith.constant 0 : i32
    %c0_i32_1 = arith.constant 0 : i32
    return %arg1, %c0_i32, %c0_i32_0 : i32, i32, i32
  }
  func.func @transform_2(%arg0: i32, %arg1: i32) -> (i32, i32, i32) {
    %c0_i32 = arith.constant 0 : i32
    %c0_i32_0 = arith.constant 0 : i32
    %c0_i32_1 = arith.constant 0 : i32
    return %arg1, %c0_i32, %c0_i32_0 : i32, i32, i32
  }
  func.func @transform_3(%arg0: i32, %arg1: i32) -> (i32, i32, i32) {
    %c0_i32 = arith.constant 0 : i32
    %c0_i32_0 = arith.constant 0 : i32
    %c0_i32_1 = arith.constant 0 : i32
    return %arg1, %c0_i32, %c0_i32_0 : i32, i32, i32
  }
  func.func @transform_4(%arg0: i32, %arg1: i32) -> (i32, i32, i32) {
    %c0_i32 = arith.constant 0 : i32
    %c0_i32_0 = arith.constant 0 : i32
    %c0_i32_1 = arith.constant 0 : i32
    return %arg1, %c0_i32, %c0_i32_0 : i32, i32, i32
  }
  func.func @transform_5(%arg0: i32, %arg1: i32) -> (i32, i32, i32) {
    %c0_i32 = arith.constant 0 : i32
    %c0_i32_0 = arith.constant 0 : i32
    %c0_i32_1 = arith.constant 0 : i32
    return %arg1, %c0_i32, %c0_i32_0 : i32, i32, i32
  }
  func.func @transform_6(%arg0: i32, %arg1: i32) -> (i32, i32, i32) {
    %c0_i32 = arith.constant 0 : i32
    %c0_i32_0 = arith.constant 0 : i32
    %c0_i32_1 = arith.constant 0 : i32
    return %arg1, %c0_i32, %c0_i32_0 : i32, i32, i32
  }
  func.func @transform_7(%arg0: i32, %arg1: i32) -> (i32, i32, i32) {
    %c0_i32 = arith.constant 0 : i32
    %c0_i32_0 = arith.constant 0 : i32
    %c0_i32_1 = arith.constant 0 : i32
    return %arg1, %c0_i32, %c0_i32_0 : i32, i32, i32
  }
  func.func @transform_8(%arg0: i32, %arg1: i32) -> (i32, i32, i32) {
    %c0_i32 = arith.constant 0 : i32
    %c0_i32_0 = arith.constant 0 : i32
    %c0_i32_1 = arith.constant 0 : i32
    return %arg1, %c0_i32, %c0_i32_0 : i32, i32, i32
  }
  func.func @transform_9(%arg0: i32, %arg1: i32) -> (i32, i32, i32) {
    %c0_i32 = arith.constant 0 : i32
    %c0_i32_0 = arith.constant 0 : i32
    %c0_i32_1 = arith.constant 0 : i32
    return %arg1, %c0_i32, %c0_i32_0 : i32, i32, i32
  }
  func.func @transform_10(%arg0: i32, %arg1: i32) -> (i32, i32, i32) {
    %c0_i32 = arith.constant 0 : i32
    %c0_i32_0 = arith.constant 0 : i32
    %c0_i32_1 = arith.constant 0 : i32
    return %arg1, %c0_i32, %c0_i32_0 : i32, i32, i32
  }
  func.func @transform_11(%arg0: i32, %arg1: i32) -> (i32, i32, i32) {
    %c0_i32 = arith.constant 0 : i32
    %c0_i32_0 = arith.constant 0 : i32
    %c0_i32_1 = arith.constant 0 : i32
    return %arg1, %c0_i32, %c0_i32_0 : i32, i32, i32
  }
  func.func @transform_12(%arg0: i32, %arg1: i32) -> (i32, i32, i32) {
    %c0_i32 = arith.constant 0 : i32
    %c0_i32_0 = arith.constant 0 : i32
    %c0_i32_1 = arith.constant 0 : i32
    return %arg1, %c0_i32, %c0_i32_0 : i32, i32, i32
  }
  func.func @transform_13(%arg0: i32, %arg1: i32) -> (i32, i32, i32) {
    %c0_i32 = arith.constant 0 : i32
    %c0_i32_0 = arith.constant 0 : i32
    %c0_i32_1 = arith.constant 0 : i32
    return %arg0, %c0_i32, %c0_i32_0 : i32, i32, i32
  }
}

module attributes {stable_mosaic.version = 11 : i64} {
  func.func @_text_head_kernel(%arg0: memref<3x8x32xf32, #tpu.memory_space<vmem>>, %arg1: memref<3x8xf32, #tpu.memory_space<vmem>>, %arg2: memref<1x32xf32, #tpu.memory_space<vmem>>, %arg3: memref<1x32xf32, #tpu.memory_space<vmem>>, %arg4: memref<32x32xbf16, #tpu.memory_space<vmem>>, %arg5: memref<3x32xf32, #tpu.memory_space<vmem>>) attributes {dimension_semantics = [], scalar_prefetch = 0 : i64, scratch_operands = 0 : i64, tpu.core_type = #tpu.core_type<tc>} {
    %c0 = arith.constant 0 : index
    %c0_0 = arith.constant 0 : index
    %c0_1 = arith.constant 0 : index
    %0 = vector.load %arg0[%c0, %c0_0, %c0_1] : memref<3x8x32xf32, #tpu.memory_space<vmem>>, vector<3x8x32xf32>
    %c0_2 = arith.constant 0 : index
    %c0_3 = arith.constant 0 : index
    %1 = vector.load %arg1[%c0_2, %c0_3] : memref<3x8xf32, #tpu.memory_space<vmem>>, vector<3x8xf32>
    %2 = vector.shape_cast %1 : vector<3x8xf32> to vector<3x8x1xf32>
    %3 = vector.broadcast %2 : vector<3x8x1xf32> to vector<3x8x32xf32>
    %4 = arith.mulf %3, %0 : vector<3x8x32xf32>
    %cst = arith.constant dense<0.000000e+00> : vector<3x32xf32>
    %5 = vector.multi_reduction <add>, %4, %cst [1] : vector<3x8x32xf32> to vector<3x32xf32>
    %c0_4 = arith.constant 0 : index
    %c0_5 = arith.constant 0 : index
    %6 = vector.load %arg2[%c0_4, %c0_5] : memref<1x32xf32, #tpu.memory_space<vmem>>, vector<1x32xf32>
    %c0_6 = arith.constant 0 : index
    %c0_7 = arith.constant 0 : index
    %7 = vector.load %arg3[%c0_6, %c0_7] : memref<1x32xf32, #tpu.memory_space<vmem>>, vector<1x32xf32>
    %cst_8 = arith.constant dense<0.000000e+00> : vector<3xf32>
    %8 = vector.multi_reduction <add>, %5, %cst_8 [1] : vector<3x32xf32> to vector<3xf32>
    %9 = vector.shape_cast %8 : vector<3xf32> to vector<3x1xf32>
    %cst_9 = arith.constant 3.200000e+01 : f32
    %10 = vector.broadcast %cst_9 : f32 to vector<3x1xf32>
    %11 = arith.divf %9, %10 : vector<3x1xf32>
    %12 = vector.broadcast %11 : vector<3x1xf32> to vector<3x32xf32>
    %13 = arith.subf %5, %12 : vector<3x32xf32>
    %14 = arith.mulf %13, %13 : vector<3x32xf32>
    %cst_10 = arith.constant dense<0.000000e+00> : vector<3xf32>
    %15 = vector.multi_reduction <add>, %14, %cst_10 [1] : vector<3x32xf32> to vector<3xf32>
    %16 = vector.shape_cast %15 : vector<3xf32> to vector<3x1xf32>
    %cst_11 = arith.constant 3.200000e+01 : f32
    %17 = vector.broadcast %cst_11 : f32 to vector<3x1xf32>
    %18 = arith.divf %16, %17 : vector<3x1xf32>
    %19 = vector.broadcast %11 : vector<3x1xf32> to vector<3x32xf32>
    %20 = arith.subf %5, %19 : vector<3x32xf32>
    %cst_12 = arith.constant 9.99999974E-6 : f32
    %21 = vector.broadcast %cst_12 : f32 to vector<3x1xf32>
    %22 = arith.addf %18, %21 : vector<3x1xf32>
    %23 = math.rsqrt %22 : vector<3x1xf32>
    %24 = vector.broadcast %23 : vector<3x1xf32> to vector<3x32xf32>
    %25 = arith.mulf %20, %24 : vector<3x32xf32>
    %26 = vector.broadcast %6 : vector<1x32xf32> to vector<3x32xf32>
    %27 = arith.mulf %25, %26 : vector<3x32xf32>
    %28 = vector.broadcast %7 : vector<1x32xf32> to vector<3x32xf32>
    %29 = arith.addf %27, %28 : vector<3x32xf32>
    %30 = arith.truncf %29 : vector<3x32xf32> to vector<3x32xbf16>
    %c0_13 = arith.constant 0 : index
    %c0_14 = arith.constant 0 : index
    %31 = vector.load %arg4[%c0_13, %c0_14] : memref<32x32xbf16, #tpu.memory_space<vmem>>, vector<32x32xbf16>
    %cst_15 = arith.constant dense<0.000000e+00> : vector<3x32xf32>
    %32 = tpu.matmul %30, %31, %cst_15 {dimension_numbers = #tpu.dot_dimension_numbers<[1], [0], [0], [1], [0, 0, 1, 1], [], []>} : vector<3x32xbf16>, vector<32x32xbf16>, vector<3x32xf32> -> vector<3x32xf32>
    %33 = arith.mulf %32, %32 : vector<3x32xf32>
    %cst_16 = arith.constant dense<0.000000e+00> : vector<3xf32>
    %34 = vector.multi_reduction <add>, %33, %cst_16 [1] : vector<3x32xf32> to vector<3xf32>
    %35 = vector.shape_cast %34 : vector<3xf32> to vector<3x1xf32>
    %cst_17 = arith.constant 9.99999996E-13 : f32
    %36 = vector.broadcast %cst_17 : f32 to vector<3x1xf32>
    %37 = arith.addf %35, %36 : vector<3x1xf32>
    %38 = math.rsqrt %37 : vector<3x1xf32>
    %39 = vector.broadcast %38 : vector<3x1xf32> to vector<3x32xf32>
    %40 = arith.mulf %32, %39 : vector<3x32xf32>
    %c0_18 = arith.constant 0 : index
    %c0_19 = arith.constant 0 : index
    %41 = vector.load %arg5[%c0_18, %c0_19] : memref<3x32xf32, #tpu.memory_space<vmem>>, vector<3x32xf32>
    tpu.vector_store %arg5[%c0_18, %c0_19], %40 {strides = array<i32>} : memref<3x32xf32, #tpu.memory_space<vmem>>, vector<3x32xf32>,
    return
  }
}

module attributes {stable_mosaic.version = 11 : i64} {
  func.func @_vis_head_logits_kernel(%arg0: memref<2x5x32xf32, #tpu.memory_space<vmem>>, %arg1: memref<1x32xf32, #tpu.memory_space<vmem>>, %arg2: memref<1x32xf32, #tpu.memory_space<vmem>>, %arg3: memref<32x32xbf16, #tpu.memory_space<vmem>>, %arg4: memref<3x32xf32, #tpu.memory_space<vmem>>, %arg5: memref<1xf32, #tpu.memory_space<smem>>, %arg6: memref<2x3xf32, #tpu.memory_space<vmem>>) attributes {dimension_semantics = [], scalar_prefetch = 0 : i64, scratch_operands = 0 : i64, tpu.core_type = #tpu.core_type<tc>} {
    %c0 = arith.constant 0 : index
    %c0_0 = arith.constant 0 : index
    %c0_1 = arith.constant 0 : index
    %0 = vector.load %arg0[%c0, %c0_0, %c0_1] : memref<2x5x32xf32, #tpu.memory_space<vmem>>, vector<2x5x32xf32>
    %1 = vector.extract_strided_slice %0 {offsets = [0, 0, 0], sizes = [2, 1, 32], strides = [1, 1, 1]} : vector<2x5x32xf32> to vector<2x1x32xf32>
    %2 = vector.shape_cast %1 : vector<2x1x32xf32> to vector<2x32xf32>
    %c0_2 = arith.constant 0 : index
    %c0_3 = arith.constant 0 : index
    %3 = vector.load %arg1[%c0_2, %c0_3] : memref<1x32xf32, #tpu.memory_space<vmem>>, vector<1x32xf32>
    %c0_4 = arith.constant 0 : index
    %c0_5 = arith.constant 0 : index
    %4 = vector.load %arg2[%c0_4, %c0_5] : memref<1x32xf32, #tpu.memory_space<vmem>>, vector<1x32xf32>
    %cst = arith.constant dense<0.000000e+00> : vector<2xf32>
    %5 = vector.multi_reduction <add>, %2, %cst [1] : vector<2x32xf32> to vector<2xf32>
    %6 = vector.shape_cast %5 : vector<2xf32> to vector<2x1xf32>
    %cst_6 = arith.constant 3.200000e+01 : f32
    %7 = vector.broadcast %cst_6 : f32 to vector<2x1xf32>
    %8 = arith.divf %6, %7 : vector<2x1xf32>
    %9 = vector.broadcast %8 : vector<2x1xf32> to vector<2x32xf32>
    %10 = arith.subf %2, %9 : vector<2x32xf32>
    %11 = arith.mulf %10, %10 : vector<2x32xf32>
    %cst_7 = arith.constant dense<0.000000e+00> : vector<2xf32>
    %12 = vector.multi_reduction <add>, %11, %cst_7 [1] : vector<2x32xf32> to vector<2xf32>
    %13 = vector.shape_cast %12 : vector<2xf32> to vector<2x1xf32>
    %cst_8 = arith.constant 3.200000e+01 : f32
    %14 = vector.broadcast %cst_8 : f32 to vector<2x1xf32>
    %15 = arith.divf %13, %14 : vector<2x1xf32>
    %16 = vector.broadcast %8 : vector<2x1xf32> to vector<2x32xf32>
    %17 = arith.subf %2, %16 : vector<2x32xf32>
    %cst_9 = arith.constant 9.99999974E-6 : f32
    %18 = vector.broadcast %cst_9 : f32 to vector<2x1xf32>
    %19 = arith.addf %15, %18 : vector<2x1xf32>
    %20 = math.rsqrt %19 : vector<2x1xf32>
    %21 = vector.broadcast %20 : vector<2x1xf32> to vector<2x32xf32>
    %22 = arith.mulf %17, %21 : vector<2x32xf32>
    %23 = vector.broadcast %3 : vector<1x32xf32> to vector<2x32xf32>
    %24 = arith.mulf %22, %23 : vector<2x32xf32>
    %25 = vector.broadcast %4 : vector<1x32xf32> to vector<2x32xf32>
    %26 = arith.addf %24, %25 : vector<2x32xf32>
    %27 = arith.truncf %26 : vector<2x32xf32> to vector<2x32xbf16>
    %c0_10 = arith.constant 0 : index
    %c0_11 = arith.constant 0 : index
    %28 = vector.load %arg3[%c0_10, %c0_11] : memref<32x32xbf16, #tpu.memory_space<vmem>>, vector<32x32xbf16>
    %cst_12 = arith.constant dense<0.000000e+00> : vector<2x32xf32>
    %29 = tpu.matmul %27, %28, %cst_12 {dimension_numbers = #tpu.dot_dimension_numbers<[1], [0], [0], [1], [0, 0, 1, 1], [], []>} : vector<2x32xbf16>, vector<32x32xbf16>, vector<2x32xf32> -> vector<2x32xf32>
    %30 = arith.mulf %29, %29 : vector<2x32xf32>
    %cst_13 = arith.constant dense<0.000000e+00> : vector<2xf32>
    %31 = vector.multi_reduction <add>, %30, %cst_13 [1] : vector<2x32xf32> to vector<2xf32>
    %32 = vector.shape_cast %31 : vector<2xf32> to vector<2x1xf32>
    %cst_14 = arith.constant 9.99999996E-13 : f32
    %33 = vector.broadcast %cst_14 : f32 to vector<2x1xf32>
    %34 = arith.addf %32, %33 : vector<2x1xf32>
    %35 = math.rsqrt %34 : vector<2x1xf32>
    %36 = vector.broadcast %35 : vector<2x1xf32> to vector<2x32xf32>
    %37 = arith.mulf %29, %36 : vector<2x32xf32>
    %c0_15 = arith.constant 0 : index
    %c0_16 = arith.constant 0 : index
    %38 = vector.load %arg4[%c0_15, %c0_16] : memref<3x32xf32, #tpu.memory_space<vmem>>, vector<3x32xf32>
    %cst_17 = arith.constant dense<0.000000e+00> : vector<2x3xf32>
    %39 = tpu.matmul %37, %38, %cst_17 {dimension_numbers = #tpu.dot_dimension_numbers<[1], [1], [0], [0], [0, 0, 1, 0], [], []>} : vector<2x32xf32>, vector<3x32xf32>, vector<2x3xf32> -> vector<2x3xf32>
    %c0_18 = arith.constant 0 : index
    %40 = memref.load %arg5[%c0_18] : memref<1xf32, #tpu.memory_space<smem>>
    %41 = vector.broadcast %40 : f32 to vector<2x3xf32>
    %42 = arith.mulf %41, %39 : vector<2x3xf32>
    %c0_19 = arith.constant 0 : index
    %c0_20 = arith.constant 0 : index
    %43 = vector.load %arg6[%c0_19, %c0_20] : memref<2x3xf32, #tpu.memory_space<vmem>>, vector<2x3xf32>
    tpu.vector_store %arg6[%c0_19, %c0_20], %42 {strides = array<i32>} : memref<2x3xf32, #tpu.memory_space<vmem>>, vector<2x3xf32>,
    return
  }
}

</mosaic_0001>

<llo_original>
// kernel: forward.7
$region0: #{forward.7}
  #allocation0 [shape = 'u32[]', space=smem, size = 0x4, offset = 0x4, fixed_abs, tag = 'smem constant byte address 0x4 - core index']
  #allocation1 [shape = 'u32[72,128]{1,0:T(1,128)}', space=vmem, size = 0x9000, scoped, tag = 'internal scratch']
  %s0 = inlined_call_operand.vmem [shape: f32[8,192], index: 0, kind: input, shape index: {}]
  %s1 = inlined_call_operand.vmem [shape: bf16[192,32], index: 1, kind: input, shape index: {}]
  %s2 = inlined_call_operand.vmem [shape: f32[1,32], index: 2, kind: input, shape index: {}]
  %s3 = inlined_call_operand.vmem [shape: f32[5,32], index: 3, kind: input, shape index: {}]
  %s4 = inlined_call_operand.vmem [shape: f32[1,32], index: 4, kind: input, shape index: {}]
  %s5 = inlined_call_operand.vmem [shape: f32[1,32], index: 5, kind: input, shape index: {}]
  %s6 = inlined_call_operand.vmem [shape: f32[2,5,32], index: 6, kind: output, shape index: {}]
  %s7 = sld [smem:[#allocation0]]
  $region34: #{forward.7} parent=0
    _
  %s9 = ssub.s32 1, %s7
  %s10 = scalar_select 0, %s9, %s7
  // Predicated region
  $region2: #{forward.7} parent=0 // pred_check
    _
  $region3: #{forward.7} parent=0 // pred_check_branch
    %12 = sbr.rel (0) target = $region5
  $region4: #{forward.7} parent=0 // pred_region
    _
  $region5: #{forward.7} parent=0 // pred_fallthru
    _
  // Predicated region
  $region6: #{forward.7} parent=0 // pred_check
    _
  $region7: #{forward.7} parent=0 // pred_check_branch
    %14 = sbr.rel (0) target = $region9
  $region8: #{forward.7} parent=0 // pred_region
    _
  $region9: #{forward.7} parent=0 // pred_fallthru
    _
  // Predicated region
  $region10: #{forward.7} parent=0 // pred_check
    _
  $region11: #{forward.7} parent=0 // pred_check_branch
    %16 = sbr.rel (0) target = $region13
  $region12: #{forward.7} parent=0 // pred_region
    _
  $region13: #{forward.7} parent=0 // pred_fallthru
    _
  // Predicated region
  $region14: #{forward.7} parent=0 // pred_check
    _
  $region15: #{forward.7} parent=0 // pred_check_branch
    %18 = sbr.rel (0) target = $region17
  $region16: #{forward.7} parent=0 // pred_region
    _
  $region17: #{forward.7} parent=0 // pred_fallthru
    _
  // Predicated region
  $region18: #{forward.7} parent=0 // pred_check
    _
  $region19: #{forward.7} parent=0 // pred_check_branch
    %20 = sbr.rel (0) target = $region21
  $region20: #{forward.7} parent=0 // pred_region
    _
  $region21: #{forward.7} parent=0 // pred_fallthru
    _
  // Predicated region
  $region22: #{forward.7} parent=0 // pred_check
    _
  $region23: #{forward.7} parent=0 // pred_check_branch
    %22 = sbr.rel (0) target = $region25
  $region24: #{forward.7} parent=0 // pred_region
    _
  $region25: #{forward.7} parent=0 // pred_fallthru
    _
  %v24 = vld [vmem:[%s0] sm:$0xff]
  %v25 = vld [vmem:[%s0 + $0x8] sm:$0xff]
  %v26 = vpack.c.bf16 %v24, %v24
  %v27 = vpack.c.bf16 %v25, %v25
  %v28 = vld [vmem:[%s1] sm:$0xf]
  %v29 = vld [vmem:[%s1 + $0x4] sm:$0xf]
  %v30 = vld [vmem:[%s1 + $0x8] sm:$0xf]
  %v31 = vld [vmem:[%s1 + $0xc] sm:$0xf]
  %v32 = vld [vmem:[%s1 + $0x10] sm:$0xf]
  %v33 = vld [vmem:[%s1 + $0x14] sm:$0xf]
  %v34 = vld [vmem:[%s1 + $0x18] sm:$0xf]
  %v35 = vld [vmem:[%s1 + $0x1c] sm:$0xf]
  %v36 = vld [vmem:[%s1 + $0x20] sm:$0xf]
  %v37 = vld [vmem:[%s1 + $0x24] sm:$0xf]
  %v38 = vld [vmem:[%s1 + $0x28] sm:$0xf]
  %v39 = vld [vmem:[%s1 + $0x2c] sm:$0xf]
  %v40 = vld [vmem:[%s1 + $0x30] sm:$0xf]
  %v41 = vld [vmem:[%s1 + $0x34] sm:$0xf]
  %v42 = vld [vmem:[%s1 + $0x38] sm:$0xf]
  %v43 = vld [vmem:[%s1 + $0x3c] sm:$0xf]
  %v44 = vld [vmem:[%s1 + $0x40] sm:$0xf]
  %v45 = vld [vmem:[%s1 + $0x44] sm:$0xf]
  %v46 = vld [vmem:[%s1 + $0x48] sm:$0xf]
  %v47 = vld [vmem:[%s1 + $0x4c] sm:$0xf]
  %v48 = vld [vmem:[%s1 + $0x50] sm:$0xf]
  %v49 = vld [vmem:[%s1 + $0x54] sm:$0xf]
  %v50 = vld [vmem:[%s1 + $0x58] sm:$0xf]
  %v51 = vld [vmem:[%s1 + $0x5c] sm:$0xf]
  %v76 = vunpack.c.l.b16 %v28
  %v77 = vunpack.c.l.b16 %v29
  %v78 = vunpack.c.l.b16 %v30
  %v79 = vunpack.c.l.b16 %v31
  %v80 = vunpack.c.l.b16 %v32
  %v81 = vunpack.c.l.b16 %v33
  %v82 = vunpack.c.l.b16 %v34
  %v83 = vunpack.c.l.b16 %v35
  %v84 = vunpack.c.l.b16 %v36
  %v85 = vunpack.c.l.b16 %v37
  %v86 = vunpack.c.l.b16 %v38
  %v87 = vunpack.c.l.b16 %v39
  %v88 = vunpack.c.l.b16 %v40
  %v89 = vunpack.c.l.b16 %v41
  %v90 = vunpack.c.l.b16 %v42
  %v91 = vunpack.c.l.b16 %v43
  %v92 = vunpack.c.l.b16 %v44
  %v93 = vunpack.c.l.b16 %v45
  %v94 = vunpack.c.l.b16 %v46
  %v95 = vunpack.c.l.b16 %v47
  %v96 = vunpack.c.l.b16 %v48
  %v97 = vunpack.c.l.b16 %v49
  %v98 = vunpack.c.l.b16 %v50
  %v99 = vunpack.c.l.b16 %v51
  %v100 = vpack.c.b16 %v77, %v76
  %v101 = vpack.c.b16 %v79, %v78
  %v102 = vpack.c.b16 %v81, %v80
  %v103 = vpack.c.b16 %v83, %v82
  %v104 = vpack.c.b16 %v85, %v84
  %v105 = vpack.c.b16 %v87, %v86
  %v106 = vpack.c.b16 %v89, %v88
  %v107 = vpack.c.b16 %v91, %v90
  %v108 = vpack.c.b16 %v93, %v92
  %v109 = vpack.c.b16 %v95, %v94
  %v110 = vpack.c.b16 %v97, %v96
  %v111 = vpack.c.b16 %v99, %v98
  %vm124 = vcmask 523264
  %v126 = vsel %vm124, %v27, 0
  %128 = vmatpush.bf16.msra.mxu0 %v107
  %129 = vmatpush.bf16.msra.mxu0 %v106
  %130 = vmatpush.bf16.msra.mxu0 %v105
  %131 = vmatpush.bf16.msra.mxu0 %v104
  %132 = vmatpush.bf16.msra.mxu0 %v103
  %133 = vmatpush.bf16.msra.mxu0 %v102
  %134 = vmatpush.bf16.msra.mxu0 %v101
  %135 = vmatpush.bf16.msra.mxu0 %v100
  %136 = vmatmul.bf16.gmra.mxu0 %v26
  %v137 = vpop.f32.mrf.mxu0
  %v138 = vadd.f32 0.0, %v137
  %v139 = vpop.f32.mrf.mxu0
  %140 = vdwg.mxu0
  %141 = vmatpush.bf16.msra.mxu0 0
  %142 = vmatpush.bf16.msra.mxu0 0
  %143 = vmatpush.bf16.msra.mxu0 0
  %144 = vmatpush.bf16.msra.mxu0 0
  %145 = vmatpush.bf16.msra.mxu0 %v111
  %146 = vmatpush.bf16.msra.mxu0 %v110
  %147 = vmatpush.bf16.msra.mxu0 %v109
  %148 = vmatpush.bf16.msra.mxu0 %v108
  %149 = vmatmul.bf16.gmra.mxu0 %v126
  %v150 = vpop.f32.mrf.mxu0
  %v151 = vadd.f32 %v138, %v150
  %v152 = vpop.f32.mrf.mxu0
  %153 = vdwg.mxu0
  %v155 = vrot.slane %v151, 4
  %v156 = vld [vmem:[%s2] sm:$0x1]
  %157 = vst [vmem:[#allocation1] ss:$2 sm:$0xff] %v151
  %v158 = vld.sshfl [vmem:[#allocation1] sm:$0xff pattern:$0x75316420]
  %s159 = scalar_lea.vmem [#allocation1], 16
  %160 = vst [vmem:[%s159] ss:$2 sm:$0xff] %v155
  %v161 = vld.sshfl [vmem:[#allocation1 + $0x10] sm:$0xff pattern:$0x75316420]
  %v162 = vrot.slane %v158, 7
  %v163 = vrot.slane %v161, 7
  %vm166 = vcmask 1040384
  %v167 = vsel %vm166, %v156, %v162
  %v168 = vsel %vm166, %v156, %v163
  %v169 = vld [vmem:[%s3] sm:$0x1f]
  %v170 = vadd.f32 %v167, %v169
  %v171 = vadd.f32 %v168, %v169
  %v172 = vld [vmem:[%s4] sm:$0x1]
  %v173 = vld [vmem:[%s5] sm:$0x1]
  %vm174 = vcmask 258048
  %v175 = vsel %vm174, %v170, 0.0
  %176 = vadd.xlane.f32.xlu0 %v175
  %v177 = vpop.xlane.xlu0 %176
  %v178 = vsel %vm174, %v171, 0.0
  %179 = vadd.xlane.f32.xlu0 %v178
  %v180 = vpop.xlane.xlu0 %179
  %v181 = vrcp.pop 32.0
  %v182 = vmul.f32 32.0, %v181
  %v183 = vsub.f32 1.0, %v182
  %v184 = vmul.f32 %v181, %v183
  %v185 = vadd.f32 %v181, %v184
  %vm186 = vweird.f32 %v181
  %v187 = vsel %vm186, %v181, %v185
  %v188 = vmul.f32 %v177, %v187
  %v189 = vmul.f32 %v180, %v187
  %v190 = vsub.f32 %v170, %v188
  %v191 = vsub.f32 %v171, %v189
  %v192 = vmul.f32 %v190, %v190
  %v193 = vmul.f32 %v191, %v191
  %v194 = vsel %vm174, %v192, 0.0
  %195 = vadd.xlane.f32.xlu0 %v194
  %v196 = vpop.xlane.xlu0 %195
  %v197 = vsel %vm174, %v193, 0.0
  %198 = vadd.xlane.f32.xlu0 %v197
  %v199 = vpop.xlane.xlu0 %198
  %v200 = vmul.f32 %v196, %v187
  %v201 = vmul.f32 %v199, %v187
  %v202 = vadd.f32 %v200, 1e-05
  %v203 = vadd.f32 %v201, 1e-05
  %v204 = vrsqrt.pop %v202
  %v205 = vmul.f32 %v204, %v202
  %v206 = vmul.f32 %v205, %v204
  %v207 = vmul.f32 0.5, %v206
  %v208 = vsub.f32 1.5, %v207
  %v209 = vmul.f32 %v204, %v208
  %vm210 = vweird.f32 %v202
  %vm211 = vweird.f32 %v204
  %vm212 = vmor %vm210, %vm211
  %v213 = vsel %vm212, %v204, %v209
  %v214 = vrsqrt.pop %v203
  %v215 = vmul.f32 %v214, %v203
  %v216 = vmul.f32 %v215, %v214
  %v217 = vmul.f32 0.5, %v216
  %v218 = vsub.f32 1.5, %v217
  %v219 = vmul.f32 %v214, %v218
  %vm220 = vweird.f32 %v203
  %vm221 = vweird.f32 %v214
  %vm222 = vmor %vm220, %vm221
  %v223 = vsel %vm222, %v214, %v219
  %v224 = vmul.f32 %v190, %v213
  %v225 = vmul.f32 %v191, %v223
  %v227 = vperm.slane %v172, 0
  %v229 = vmul.f32 %v224, %v227
  %v230 = vmul.f32 %v225, %v227
  %v232 = vperm.slane %v173, 0
  %v234 = vadd.f32 %v229, %v232
  %v235 = vadd.f32 %v230, %v232
  %236 = vst.msk [vmem:[%s6] sm:$0x1f] %vm174, %v234
  %237 = vst.msk [vmem:[%s6 + $0x8] sm:$0x1f] %vm174, %v235
  // Predicated region
  $region26: #{forward.7} parent=0 // pred_check
    _
  $region27: #{forward.7} parent=0 // pred_check_branch
    %239 = sbr.rel (0) target = $region29
  $region28: #{forward.7} parent=0 // pred_region
    _
  $region29: #{forward.7} parent=0 // pred_fallthru
    _
  // Predicated region
  $region30: #{forward.7} parent=0 // pred_check
    _
  $region31: #{forward.7} parent=0 // pred_check_branch
    %241 = sbr.rel (0) target = $region33
  $region32: #{forward.7} parent=0 // pred_region
    _
  $region33: #{forward.7} parent=0 // pred_fallthru
    _

// kernel: forward.8
$region0: #{forward.8}
  #allocation0 [shape = 'u32[]', space=smem, size = 0x4, offset = 0x4, fixed_abs, tag = 'smem constant byte address 0x4 - core index']
  #allocation1 [shape = 'u32[72,128]{1,0:T(1,128)}', space=vmem, size = 0x9000, scoped, tag = 'internal scratch']
  %s0 = inlined_call_operand.vmem [shape: f32[2,5,32], index: 0, kind: input, shape index: {}]
  %s1 = inlined_call_operand.vmem [shape: f32[2,1,32], index: 1, kind: input, shape index: {}]
  %s2 = inlined_call_operand.vmem [shape: f32[2,1,32], index: 2, kind: input, shape index: {}]
  %s3 = inlined_call_operand.vmem [shape: bf16[2,32,96], index: 3, kind: input, shape index: {}]
  %s4 = inlined_call_operand.vmem [shape: f32[2,1,96], index: 4, kind: input, shape index: {}]
  %s5 = inlined_call_operand.vmem [shape: bf16[2,32,32], index: 5, kind: input, shape index: {}]
  %s6 = inlined_call_operand.vmem [shape: f32[2,1,32], index: 6, kind: input, shape index: {}]
  %s7 = inlined_call_operand.vmem [shape: f32[2,1,32], index: 7, kind: input, shape index: {}]
  %s8 = inlined_call_operand.vmem [shape: f32[2,1,32], index: 8, kind: input, shape index: {}]
  %s9 = inlined_call_operand.vmem [shape: bf16[2,32,128], index: 9, kind: input, shape index: {}]
  %s10 = inlined_call_operand.vmem [shape: f32[2,1,128], index: 10, kind: input, shape index: {}]
  %s11 = inlined_call_operand.vmem [shape: bf16[2,128,32], index: 11, kind: input, shape index: {}]
  %s12 = inlined_call_operand.vmem [shape: f32[2,1,32], index: 12, kind: input, shape index: {}]
  %s13 = inlined_call_operand.vmem [shape: f32[2,5,32], index: 13, kind: output, shape index: {}]
  %s14 = sld [smem:[#allocation0]]
  $region89: #{forward.8} parent=0
    _
  %s16 = ssub.s32 1, %s14
  %s17 = scalar_select 0, %s16, %s14
  loop: start=0, step=1, limit=6
  $region2: #{forward.8} parent=0 // loop_pre_header
    _
  $region3: #{forward.8} parent=0 // loop_header
    %s19 = sphi 0, %s23
    %p20 = scmp.ge.s32.totalorder %s19, 6
    %s26 = sphi 0, %s38
    %s27 = sphi 0, %s34
    %s28 = sphi 0, %s26
    %s29 = sphi 0, %s27
    %s30 = sphi 0, %s28
    %s31 = sphi 0, %s29
    %s41 = sphi 0, %s43
    %s44 = sphi 0, %s41
    %s45 = sphi 0, %s44
    %s61 = sphi 0, %s45
    %s67 = sphi 0, %s69
    %s70 = sphi 0, %s67
    %s71 = sphi 0, %s70
    %s87 = sphi 0, %s71
    %s93 = sphi 0, %s95
    %s96 = sphi 0, %s93
    %s97 = sphi 0, %s96
    %s113 = sphi 0, %s97
    %s119 = sphi 0, %s121
    %s122 = sphi 0, %s119
    %s123 = sphi 0, %s122
    %s139 = sphi 0, %s123
    %s145 = sphi 0, %s147
    %s148 = sphi 0, %s145
    %s149 = sphi 0, %s148
    %s165 = sphi 0, %s149
    %s171 = sphi 0, %s173
    %s174 = sphi 0, %s171
    %s175 = sphi 0, %s174
    %s191 = sphi 0, %s175
    %s197 = sphi 0, %s199
    %s200 = sphi 0, %s197
    %s201 = sphi 0, %s200
    %s217 = sphi 0, %s201
    %s223 = sphi 0, %s225
    %s226 = sphi 0, %s223
    %s227 = sphi 0, %s226
    %s243 = sphi 0, %s227
    %s249 = sphi 0, %s251
    %s252 = sphi 0, %s249
    %s253 = sphi 0, %s252
    %s269 = sphi 0, %s253
    %s275 = sphi 0, %s277
    %s278 = sphi 0, %s275
    %s279 = sphi 0, %s278
    %s295 = sphi 0, %s279
    %s301 = sphi 0, %s303
    %s304 = sphi 0, %s301
    %s305 = sphi 0, %s304
    %s321 = sphi 0, %s305
    %s327 = sphi 0, %s329
    %s330 = sphi 0, %s327
    %s331 = sphi 0, %s330
    %s347 = sphi 0, %s331
    %s353 = sphi 0, %s355
    %s356 = sphi 0, %s353
    %s357 = sphi 0, %s356
    %s373 = sphi 0, %s357
    %s379 = sphi 0, %s381
    %s382 = sphi 0, %s379
    %s383 = sphi 0, %s382
    %s399 = sphi 0, %s383
  $region4: #{forward.8} parent=0 // loop_header_branch
    %22 = sbr.rel (%p20) target = $region8
  $region5: #{forward.8} parent=0 // loop_body
    %s24 = ssub.s32 %s19, 1
    %s25 = ssub.s32 %s19, 2
    %s32 = sadd.s32 1, %s27
    %p33 = scmp.ge.s32.totalorder %s32, 2
    %s34 = scalar_select %p33, 0, %s32
    %s35 = sadd.s32 1, %s26
    %s36 = scalar_select %p33, %s35, %s26
    %p37 = scmp.ge.s32.totalorder %s36, 2
    %s38 = scalar_select %p37, 0, %s36
    %s39 = ssub.s32 %s26, %s38
    %p40 = scmp.eq.s32.totalorder %s39, 0
    %s42 = sadd.s32 %s41, 1
    %s43 = scalar_select %p40, %s41, %s42
    %p46 = pneg %p40
    %p47 = scmp.eq.s32.totalorder %s19, 3
    %p48 = por %p46, %p47
    %p49 = scmp.ne.s32.totalorder %s41, %s44
    %p50 = scmp.eq.s32.totalorder %s19, 0
    %p51 = por %p49, %p50
    %p52 = scmp.ne.s32.totalorder %s41, %s44
    %p53 = scmp.eq.s32.totalorder %s24, 3
    %p54 = por %p52, %p53
    %p55 = scmp.ne.s32.totalorder %s44, %s45
    %p56 = scmp.eq.s32.totalorder %s24, 0
    %p57 = por %p55, %p56
    %p58 = scmp.ne.s32.totalorder %s44, %s45
    %p59 = scmp.eq.s32.totalorder %s25, 3
    %p60 = por %p58, %p59
    %p62 = scmp.ne.s32.totalorder %s45, %s61
    %p63 = scmp.eq.s32.totalorder %s25, 0
    %p64 = por %p62, %p63
    %s65 = ssub.s32 %s27, %s34
    %p66 = scmp.eq.s32.totalorder %s65, 0
    %s68 = sadd.s32 %s67, 1
    %s69 = scalar_select %p66, %s67, %s68
    %p72 = pneg %p66
    %p73 = scmp.eq.s32.totalorder %s19, 3
    %p74 = por %p72, %p73
    %p75 = scmp.ne.s32.totalorder %s67, %s70
    %p76 = scmp.eq.s32.totalorder %s19, 0
    %p77 = por %p75, %p76
    %p78 = scmp.ne.s32.totalorder %s67, %s70
    %p79 = scmp.eq.s32.totalorder %s24, 3
    %p80 = por %p78, %p79
    %p81 = scmp.ne.s32.totalorder %s70, %s71
    %p82 = scmp.eq.s32.totalorder %s24, 0
    %p83 = por %p81, %p82
    %p84 = scmp.ne.s32.totalorder %s70, %s71
    %p85 = scmp.eq.s32.totalorder %s25, 3
    %p86 = por %p84, %p85
    %p88 = scmp.ne.s32.totalorder %s71, %s87
    %p89 = scmp.eq.s32.totalorder %s25, 0
    %p90 = por %p88, %p89
    %s91 = ssub.s32 %s27, %s34
    %p92 = scmp.eq.s32.totalorder %s91, 0
    %s94 = sadd.s32 %s93, 1
    %s95 = scalar_select %p92, %s93, %s94
    %p98 = pneg %p92
    %p99 = scmp.eq.s32.totalorder %s19, 3
    %p100 = por %p98, %p99
    %p101 = scmp.ne.s32.totalorder %s93, %s96
    %p102 = scmp.eq.s32.totalorder %s19, 0
    %p103 = por %p101, %p102
    %p104 = scmp.ne.s32.totalorder %s93, %s96
    %p105 = scmp.eq.s32.totalorder %s24, 3
    %p106 = por %p104, %p105
    %p107 = scmp.ne.s32.totalorder %s96, %s97
    %p108 = scmp.eq.s32.totalorder %s24, 0
    %p109 = por %p107, %p108
    %p110 = scmp.ne.s32.totalorder %s96, %s97
    %p111 = scmp.eq.s32.totalorder %s25, 3
    %p112 = por %p110, %p111
    %p114 = scmp.ne.s32.totalorder %s97, %s113
    %p115 = scmp.eq.s32.totalorder %s25, 0
    %p116 = por %p114, %p115
    %s117 = ssub.s32 %s27, %s34
    %p118 = scmp.eq.s32.totalorder %s117, 0
    %s120 = sadd.s32 %s119, 1
    %s121 = scalar_select %p118, %s119, %s120
    %p124 = pneg %p118
    %p125 = scmp.eq.s32.totalorder %s19, 3
    %p126 = por %p124, %p125
    %p127 = scmp.ne.s32.totalorder %s119, %s122
    %p128 = scmp.eq.s32.totalorder %s19, 0
    %p129 = por %p127, %p128
    %p130 = scmp.ne.s32.totalorder %s119, %s122
    %p131 = scmp.eq.s32.totalorder %s24, 3
    %p132 = por %p130, %p131
    %p133 = scmp.ne.s32.totalorder %s122, %s123
    %p134 = scmp.eq.s32.totalorder %s24, 0
    %p135 = por %p133, %p134
    %p136 = scmp.ne.s32.totalorder %s122, %s123
    %p137 = scmp.eq.s32.totalorder %s25, 3
    %p138 = por %p136, %p137
    %p140 = scmp.ne.s32.totalorder %s123, %s139
    %p141 = scmp.eq.s32.totalorder %s25, 0
    %p142 = por %p140, %p141
    %s143 = ssub.s32 %s27, %s34
    %p144 = scmp.eq.s32.totalorder %s143, 0
    %s146 = sadd.s32 %s145, 1
    %s147 = scalar_select %p144, %s145, %s146
    %p150 = pneg %p144
    %p151 = scmp.eq.s32.totalorder %s19, 3
    %p152 = por %p150, %p151
    %p153 = scmp.ne.s32.totalorder %s145, %s148
    %p154 = scmp.eq.s32.totalorder %s19, 0
    %p155 = por %p153, %p154
    %p156 = scmp.ne.s32.totalorder %s145, %s148
    %p157 = scmp.eq.s32.totalorder %s24, 3
    %p158 = por %p156, %p157
    %p159 = scmp.ne.s32.totalorder %s148, %s149
    %p160 = scmp.eq.s32.totalorder %s24, 0
    %p161 = por %p159, %p160
    %p162 = scmp.ne.s32.totalorder %s148, %s149
    %p163 = scmp.eq.s32.totalorder %s25, 3
    %p164 = por %p162, %p163
    %p166 = scmp.ne.s32.totalorder %s149, %s165
    %p167 = scmp.eq.s32.totalorder %s25, 0
    %p168 = por %p166, %p167
    %s169 = ssub.s32 %s27, %s34
    %p170 = scmp.eq.s32.totalorder %s169, 0
    %s172 = sadd.s32 %s171, 1
    %s173 = scalar_select %p170, %s171, %s172
    %p176 = pneg %p170
    %p177 = scmp.eq.s32.totalorder %s19, 3
    %p178 = por %p176, %p177
    %p179 = scmp.ne.s32.totalorder %s171, %s174
    %p180 = scmp.eq.s32.totalorder %s19, 0
    %p181 = por %p179, %p180
    %p182 = scmp.ne.s32.totalorder %s171, %s174
    %p183 = scmp.eq.s32.totalorder %s24, 3
    %p184 = por %p182, %p183
    %p185 = scmp.ne.s32.totalorder %s174, %s175
    %p186 = scmp.eq.s32.totalorder %s24, 0
    %p187 = por %p185, %p186
    %p188 = scmp.ne.s32.totalorder %s174, %s175
    %p189 = scmp.eq.s32.totalorder %s25, 3
    %p190 = por %p188, %p189
    %p192 = scmp.ne.s32.totalorder %s175, %s191
    %p193 = scmp.eq.s32.totalorder %s25, 0
    %p194 = por %p192, %p193
    %s195 = ssub.s32 %s27, %s34
    %p196 = scmp.eq.s32.totalorder %s195, 0
    %s198 = sadd.s32 %s197, 1
    %s199 = scalar_select %p196, %s197, %s198
    %p202 = pneg %p196
    %p203 = scmp.eq.s32.totalorder %s19, 3
    %p204 = por %p202, %p203
    %p205 = scmp.ne.s32.totalorder %s197, %s200
    %p206 = scmp.eq.s32.totalorder %s19, 0
    %p207 = por %p205, %p206
    %p208 = scmp.ne.s32.totalorder %s197, %s200
    %p209 = scmp.eq.s32.totalorder %s24, 3
    %p210 = por %p208, %p209
    %p211 = scmp.ne.s32.totalorder %s200, %s201
    %p212 = scmp.eq.s32.totalorder %s24, 0
    %p213 = por %p211, %p212
    %p214 = scmp.ne.s32.totalorder %s200, %s201
    %p215 = scmp.eq.s32.totalorder %s25, 3
    %p216 = por %p214, %p215
    %p218 = scmp.ne.s32.totalorder %s201, %s217
    %p219 = scmp.eq.s32.totalorder %s25, 0
    %p220 = por %p218, %p219
    %s221 = ssub.s32 %s27, %s34
    %p222 = scmp.eq.s32.totalorder %s221, 0
    %s224 = sadd.s32 %s223, 1
    %s225 = scalar_select %p222, %s223, %s224
    %p228 = pneg %p222
    %p229 = scmp.eq.s32.totalorder %s19, 3
    %p230 = por %p228, %p229
    %p231 = scmp.ne.s32.totalorder %s223, %s226
    %p232 = scmp.eq.s32.totalorder %s19, 0
    %p233 = por %p231, %p232
    %p234 = scmp.ne.s32.totalorder %s223, %s226
    %p235 = scmp.eq.s32.totalorder %s24, 3
    %p236 = por %p234, %p235
    %p237 = scmp.ne.s32.totalorder %s226, %s227
    %p238 = scmp.eq.s32.totalorder %s24, 0
    %p239 = por %p237, %p238
    %p240 = scmp.ne.s32.totalorder %s226, %s227
    %p241 = scmp.eq.s32.totalorder %s25, 3
    %p242 = por %p240, %p241
    %p244 = scmp.ne.s32.totalorder %s227, %s243
    %p245 = scmp.eq.s32.totalorder %s25, 0
    %p246 = por %p244, %p245
    %s247 = ssub.s32 %s27, %s34
    %p248 = scmp.eq.s32.totalorder %s247, 0
    %s250 = sadd.s32 %s249, 1
    %s251 = scalar_select %p248, %s249, %s250
    %p254 = pneg %p248
    %p255 = scmp.eq.s32.totalorder %s19, 3
    %p256 = por %p254, %p255
    %p257 = scmp.ne.s32.totalorder %s249, %s252
    %p258 = scmp.eq.s32.totalorder %s19, 0
    %p259 = por %p257, %p258
    %p260 = scmp.ne.s32.totalorder %s249, %s252
    %p261 = scmp.eq.s32.totalorder %s24, 3
    %p262 = por %p260, %p261
    %p263 = scmp.ne.s32.totalorder %s252, %s253
    %p264 = scmp.eq.s32.totalorder %s24, 0
    %p265 = por %p263, %p264
    %p266 = scmp.ne.s32.totalorder %s252, %s253
    %p267 = scmp.eq.s32.totalorder %s25, 3
    %p268 = por %p266, %p267
    %p270 = scmp.ne.s32.totalorder %s253, %s269
    %p271 = scmp.eq.s32.totalorder %s25, 0
    %p272 = por %p270, %p271
    %s273 = ssub.s32 %s27, %s34
    %p274 = scmp.eq.s32.totalorder %s273, 0
    %s276 = sadd.s32 %s275, 1
    %s277 = scalar_select %p274, %s275, %s276
    %p280 = pneg %p274
    %p281 = scmp.eq.s32.totalorder %s19, 3
    %p282 = por %p280, %p281
    %p283 = scmp.ne.s32.totalorder %s275, %s278
    %p284 = scmp.eq.s32.totalorder %s19, 0
    %p285 = por %p283, %p284
    %p286 = scmp.ne.s32.totalorder %s275, %s278
    %p287 = scmp.eq.s32.totalorder %s24, 3
    %p288 = por %p286, %p287
    %p289 = scmp.ne.s32.totalorder %s278, %s279
    %p290 = scmp.eq.s32.totalorder %s24, 0
    %p291 = por %p289, %p290
    %p292 = scmp.ne.s32.totalorder %s278, %s279
    %p293 = scmp.eq.s32.totalorder %s25, 3
    %p294 = por %p292, %p293
    %p296 = scmp.ne.s32.totalorder %s279, %s295
    %p297 = scmp.eq.s32.totalorder %s25, 0
    %p298 = por %p296, %p297
    %s299 = ssub.s32 %s27, %s34
    %p300 = scmp.eq.s32.totalorder %s299, 0
    %s302 = sadd.s32 %s301, 1
    %s303 = scalar_select %p300, %s301, %s302
    %p306 = pneg %p300
    %p307 = scmp.eq.s32.totalorder %s19, 3
    %p308 = por %p306, %p307
    %p309 = scmp.ne.s32.totalorder %s301, %s304
    %p310 = scmp.eq.s32.totalorder %s19, 0
    %p311 = por %p309, %p310
    %p312 = scmp.ne.s32.totalorder %s301, %s304
    %p313 = scmp.eq.s32.totalorder %s24, 3
    %p314 = por %p312, %p313
    %p315 = scmp.ne.s32.totalorder %s304, %s305
    %p316 = scmp.eq.s32.totalorder %s24, 0
    %p317 = por %p315, %p316
    %p318 = scmp.ne.s32.totalorder %s304, %s305
    %p319 = scmp.eq.s32.totalorder %s25, 3
    %p320 = por %p318, %p319
    %p322 = scmp.ne.s32.totalorder %s305, %s321
    %p323 = scmp.eq.s32.totalorder %s25, 0
    %p324 = por %p322, %p323
    %s325 = ssub.s32 %s27, %s34
    %p326 = scmp.eq.s32.totalorder %s325, 0
    %s328 = sadd.s32 %s327, 1
    %s329 = scalar_select %p326, %s327, %s328
    %p332 = pneg %p326
    %p333 = scmp.eq.s32.totalorder %s19, 3
    %p334 = por %p332, %p333
    %p335 = scmp.ne.s32.totalorder %s327, %s330
    %p336 = scmp.eq.s32.totalorder %s19, 0
    %p337 = por %p335, %p336
    %p338 = scmp.ne.s32.totalorder %s327, %s330
    %p339 = scmp.eq.s32.totalorder %s24, 3
    %p340 = por %p338, %p339
    %p341 = scmp.ne.s32.totalorder %s330, %s331
    %p342 = scmp.eq.s32.totalorder %s24, 0
    %p343 = por %p341, %p342
    %p344 = scmp.ne.s32.totalorder %s330, %s331
    %p345 = scmp.eq.s32.totalorder %s25, 3
    %p346 = por %p344, %p345
    %p348 = scmp.ne.s32.totalorder %s331, %s347
    %p349 = scmp.eq.s32.totalorder %s25, 0
    %p350 = por %p348, %p349
    %s351 = ssub.s32 %s27, %s34
    %p352 = scmp.eq.s32.totalorder %s351, 0
    %s354 = sadd.s32 %s353, 1
    %s355 = scalar_select %p352, %s353, %s354
    %p358 = pneg %p352
    %p359 = scmp.eq.s32.totalorder %s19, 3
    %p360 = por %p358, %p359
    %p361 = scmp.ne.s32.totalorder %s353, %s356
    %p362 = scmp.eq.s32.totalorder %s19, 0
    %p363 = por %p361, %p362
    %p364 = scmp.ne.s32.totalorder %s353, %s356
    %p365 = scmp.eq.s32.totalorder %s24, 3
    %p366 = por %p364, %p365
    %p367 = scmp.ne.s32.totalorder %s356, %s357
    %p368 = scmp.eq.s32.totalorder %s24, 0
    %p369 = por %p367, %p368
    %p370 = scmp.ne.s32.totalorder %s356, %s357
    %p371 = scmp.eq.s32.totalorder %s25, 3
    %p372 = por %p370, %p371
    %p374 = scmp.ne.s32.totalorder %s357, %s373
    %p375 = scmp.eq.s32.totalorder %s25, 0
    %p376 = por %p374, %p375
    %s377 = ssub.s32 %s26, %s38
    %p378 = scmp.eq.s32.totalorder %s377, 0
    %s380 = sadd.s32 %s379, 1
    %s381 = scalar_select %p378, %s379, %s380
    %p384 = pneg %p378
    %p385 = scmp.eq.s32.totalorder %s19, 3
    %p386 = por %p384, %p385
    %p387 = scmp.ne.s32.totalorder %s379, %s382
    %p388 = scmp.eq.s32.totalorder %s19, 0
    %p389 = por %p387, %p388
    %p390 = scmp.ne.s32.totalorder %s379, %s382
    %p391 = scmp.eq.s32.totalorder %s24, 3
    %p392 = por %p390, %p391
    %p393 = scmp.ne.s32.totalorder %s382, %s383
    %p394 = scmp.eq.s32.totalorder %s24, 0
    %p395 = por %p393, %p394
    %p396 = scmp.ne.s32.totalorder %s382, %s383
    %p397 = scmp.eq.s32.totalorder %s25, 3
    %p398 = por %p396, %p397
    %p400 = scmp.ne.s32.totalorder %s383, %s399
    %p401 = scmp.eq.s32.totalorder %s25, 0
    %p402 = por %p400, %p401
    %p403 = scmp.le.s32.totalorder 1, %s19
    %p404 = scmp.lt.s32.totalorder %s19, 5
    %p405 = pnand %p403, %p404
    %p406 = pneg %p405
    // Predicated region
    $region9: #{forward.8} parent=5 // pred_check
      _
    $region10: #{forward.8} parent=5 // pred_check_branch
      %408 = sbr.rel (%p405) target = $region12
    $region11: #{forward.8} parent=5 // pred_region
      %s409 = ssub.s32 %s19, 1
    $region12: #{forward.8} parent=5 // pred_fallthru
      _
    %p410 = scmp.lt.s32.totalorder %s19, 4
    // Predicated region
    $region13: #{forward.8} parent=5 // pred_check
      %p411 = pneg %p410
    $region14: #{forward.8} parent=5 // pred_check_branch
      %413 = sbr.rel (%p411) target = $region16
    $region15: #{forward.8} parent=5 // pred_region
      // Predicated region
      $region17: #{forward.8} parent=15 // pred_check
        %p414 = pneg %p51
      $region18: #{forward.8} parent=15 // pred_check_branch
        %416 = sbr.rel (%p414) target = $region20
      $region19: #{forward.8} parent=15 // pred_region
        %p417 = scmp.lt.s32.totalorder %s26, 1
        %s418 = scalar_select %p417, %s26, 1
        %s419 = smul.addr %s418, 8
        %s420 = scalar_lea.vmem %s0, %s419
      $region20: #{forward.8} parent=15 // pred_fallthru
        _
      // Predicated region
      $region21: #{forward.8} parent=15 // pred_check
        %p421 = pneg %p77
      $region22: #{forward.8} parent=15 // pred_check_branch
        %423 = sbr.rel (%p421) target = $region24
      $region23: #{forward.8} parent=15 // pred_region
        %p424 = scmp.lt.s32.totalorder %s27, 1
        %s425 = scalar_select %p424, %s27, 1
        %s426 = scalar_lea.vmem %s1, %s425
      $region24: #{forward.8} parent=15 // pred_fallthru
        _
      // Predicated region
      $region25: #{forward.8} parent=15 // pred_check
        %p427 = pneg %p103
      $region26: #{forward.8} parent=15 // pred_check_branch
        %429 = sbr.rel (%p427) target = $region28
      $region27: #{forward.8} parent=15 // pred_region
        %p430 = scmp.lt.s32.totalorder %s27, 1
        %s431 = scalar_select %p430, %s27, 1
        %s432 = scalar_lea.vmem %s2, %s431
      $region28: #{forward.8} parent=15 // pred_fallthru
        _
      // Predicated region
      $region29: #{forward.8} parent=15 // pred_check
        %p433 = pneg %p129
      $region30: #{forward.8} parent=15 // pred_check_branch
        %435 = sbr.rel (%p433) target = $region32
      $region31: #{forward.8} parent=15 // pred_region
        %p436 = scmp.lt.s32.totalorder %s27, 1
        %s437 = scalar_select %p436, %s27, 1
        %s438 = smul.addr %s437, 4
        %s439 = smul.addr %s438, 4
        %s440 = scalar_lea.vmem %s3, %s439
      $region32: #{forward.8} parent=15 // pred_fallthru
        _
      // Predicated region
      $region33: #{forward.8} parent=15 // pred_check
        %p441 = pneg %p155
      $region34: #{forward.8} parent=15 // pred_check_branch
        %443 = sbr.rel (%p441) target = $region36
      $region35: #{forward.8} parent=15 // pred_region
        %p444 = scmp.lt.s32.totalorder %s27, 1
        %s445 = scalar_select %p444, %s27, 1
        %s446 = scalar_lea.vmem %s4, %s445
      $region36: #{forward.8} parent=15 // pred_fallthru
        _
      // Predicated region
      $region37: #{forward.8} parent=15 // pred_check
        %p447 = pneg %p181
      $region38: #{forward.8} parent=15 // pred_check_branch
        %449 = sbr.rel (%p447) target = $region40
      $region39: #{forward.8} parent=15 // pred_region
        %p450 = scmp.lt.s32.totalorder %s27, 1
        %s451 = scalar_select %p450, %s27, 1
        %s452 = smul.addr %s451, 4
        %s453 = smul.addr %s452, 4
        %s454 = scalar_lea.vmem %s5, %s453
      $region40: #{forward.8} parent=15 // pred_fallthru
        _
      // Predicated region
      $region41: #{forward.8} parent=15 // pred_check
        %p455 = pneg %p207
      $region42: #{forward.8} parent=15 // pred_check_branch
        %457 = sbr.rel (%p455) target = $region44
      $region43: #{forward.8} parent=15 // pred_region
        %p458 = scmp.lt.s32.totalorder %s27, 1
        %s459 = scalar_select %p458, %s27, 1
        %s460 = scalar_lea.vmem %s6, %s459
      $region44: #{forward.8} parent=15 // pred_fallthru
        _
      // Predicated region
      $region45: #{forward.8} parent=15 // pred_check
        %p461 = pneg %p233
      $region46: #{forward.8} parent=15 // pred_check_branch
        %463 = sbr.rel (%p461) target = $region48
      $region47: #{forward.8} parent=15 // pred_region
        %p464 = scmp.lt.s32.totalorder %s27, 1
        %s465 = scalar_select %p464, %s27, 1
        %s466 = scalar_lea.vmem %s7, %s465
      $region48: #{forward.8} parent=15 // pred_fallthru
        _
      // Predicated region
      $region49: #{forward.8} parent=15 // pred_check
        %p467 = pneg %p259
      $region50: #{forward.8} parent=15 // pred_check_branch
        %469 = sbr.rel (%p467) target = $region52
      $region51: #{forward.8} parent=15 // pred_region
        %p470 = scmp.lt.s32.totalorder %s27, 1
        %s471 = scalar_select %p470, %s27, 1
        %s472 = scalar_lea.vmem %s8, %s471
      $region52: #{forward.8} parent=15 // pred_fallthru
        _
      // Predicated region
      $region53: #{forward.8} parent=15 // pred_check
        %p473 = pneg %p285
      $region54: #{forward.8} parent=15 // pred_check_branch
        %475 = sbr.rel (%p473) target = $region56
      $region55: #{forward.8} parent=15 // pred_region
        %p476 = scmp.lt.s32.totalorder %s27, 1
        %s477 = scalar_select %p476, %s27, 1
        %s478 = smul.addr %s477, 4
        %s479 = smul.addr %s478, 4
        %s480 = scalar_lea.vmem %s9, %s479
      $region56: #{forward.8} parent=15 // pred_fallthru
        _
      // Predicated region
      $region57: #{forward.8} parent=15 // pred_check
        %p481 = pneg %p311
      $region58: #{forward.8} parent=15 // pred_check_branch
        %483 = sbr.rel (%p481) target = $region60
      $region59: #{forward.8} parent=15 // pred_region
        %p484 = scmp.lt.s32.totalorder %s27, 1
        %s485 = scalar_select %p484, %s27, 1
        %s486 = scalar_lea.vmem %s10, %s485
      $region60: #{forward.8} parent=15 // pred_fallthru
        _
      // Predicated region
      $region61: #{forward.8} parent=15 // pred_check
        %p487 = pneg %p337
      $region62: #{forward.8} parent=15 // pred_check_branch
        %489 = sbr.rel (%p487) target = $region64
      $region63: #{forward.8} parent=15 // pred_region
        %p490 = scmp.lt.s32.totalorder %s27, 1
        %s491 = scalar_select %p490, %s27, 1
        %s492 = smul.addr %s491, 16
        %s493 = smul.addr %s492, 4
        %s494 = scalar_lea.vmem %s11, %s493
      $region64: #{forward.8} parent=15 // pred_fallthru
        _
      // Predicated region
      $region65: #{forward.8} parent=15 // pred_check
        %p495 = pneg %p363
      $region66: #{forward.8} parent=15 // pred_check_branch
        %497 = sbr.rel (%p495) target = $region68
      $region67: #{forward.8} parent=15 // pred_region
        %p498 = scmp.lt.s32.totalorder %s27, 1
        %s499 = scalar_select %p498, %s27, 1
        %s500 = scalar_lea.vmem %s12, %s499
      $region68: #{forward.8} parent=15 // pred_fallthru
        _
    $region16: #{forward.8} parent=5 // pred_fallthru
      _
    %p501 = scmp.le.s32.totalorder 1, %s19
    %p502 = scmp.lt.s32.totalorder %s19, 5
    %p503 = pnand %p501, %p502
    %p504 = pneg %p503
    // Predicated region
    $region69: #{forward.8} parent=5 // pred_check
      _
    $region70: #{forward.8} parent=5 // pred_check_branch
      %506 = sbr.rel (%p503) target = $region72
    $region71: #{forward.8} parent=5 // pred_region
      %s507 = ssub.s32 %s19, 1
      %p508 = scmp.lt.s32.totalorder %s28, 1
      %s509 = scalar_select %p508, %s28, 1
      %s510 = smul.addr %s509, 8
      %s511 = scalar_lea.vmem %s0, %s510
      %p512 = pneg %p57
      %p513 = pneg %p54
      %p514 = scmp.lt.s32.totalorder %s29, 1
      %s515 = scalar_select %p514, %s29, 1
      %s516 = scalar_lea.vmem %s1, %s515
      %p517 = pneg %p83
      %p518 = pneg %p80
      %p519 = scmp.lt.s32.totalorder %s29, 1
      %s520 = scalar_select %p519, %s29, 1
      %s521 = scalar_lea.vmem %s2, %s520
      %p522 = pneg %p109
      %p523 = pneg %p106
      %p524 = scmp.lt.s32.totalorder %s29, 1
      %s525 = scalar_select %p524, %s29, 1
      %s526 = smul.addr %s525, 4
      %s527 = smul.addr %s526, 4
      %s528 = scalar_lea.vmem %s3, %s527
      %p529 = pneg %p135
      %p530 = pneg %p132
      %p531 = scmp.lt.s32.totalorder %s29, 1
      %s532 = scalar_select %p531, %s29, 1
      %s533 = scalar_lea.vmem %s4, %s532
      %p534 = pneg %p161
      %p535 = pneg %p158
      %p536 = scmp.lt.s32.totalorder %s29, 1
      %s537 = scalar_select %p536, %s29, 1
      %s538 = smul.addr %s537, 4
      %s539 = smul.addr %s538, 4
      %s540 = scalar_lea.vmem %s5, %s539
      %p541 = pneg %p187
      %p542 = pneg %p184
      %p543 = scmp.lt.s32.totalorder %s29, 1
      %s544 = scalar_select %p543, %s29, 1
      %s545 = scalar_lea.vmem %s6, %s544
      %p546 = pneg %p213
      %p547 = pneg %p210
      %p548 = scmp.lt.s32.totalorder %s29, 1
      %s549 = scalar_select %p548, %s29, 1
      %s550 = scalar_lea.vmem %s7, %s549
      %p551 = pneg %p239
      %p552 = pneg %p236
      %p553 = scmp.lt.s32.totalorder %s29, 1
      %s554 = scalar_select %p553, %s29, 1
      %s555 = scalar_lea.vmem %s8, %s554
      %p556 = pneg %p265
      %p557 = pneg %p262
      %p558 = scmp.lt.s32.totalorder %s29, 1
      %s559 = scalar_select %p558, %s29, 1
      %s560 = smul.addr %s559, 4
      %s561 = smul.addr %s560, 4
      %s562 = scalar_lea.vmem %s9, %s561
      %p563 = pneg %p291
      %p564 = pneg %p288
      %p565 = scmp.lt.s32.totalorder %s29, 1
      %s566 = scalar_select %p565, %s29, 1
      %s567 = scalar_lea.vmem %s10, %s566
      %p568 = pneg %p317
      %p569 = pneg %p314
      %p570 = scmp.lt.s32.totalorder %s29, 1
      %s571 = scalar_select %p570, %s29, 1
      %s572 = smul.addr %s571, 16
      %s573 = smul.addr %s572, 4
      %s574 = scalar_lea.vmem %s11, %s573
      %p575 = pneg %p343
      %p576 = pneg %p340
      %p577 = scmp.lt.s32.totalorder %s29, 1
      %s578 = scalar_select %p577, %s29, 1
      %s579 = scalar_lea.vmem %s12, %s578
      %p580 = pneg %p369
      %p581 = pneg %p366
      %p582 = pneg %p395
      %p583 = pneg %p392
      %p584 = scmp.lt.s32.totalorder %s28, 1
      %s585 = scalar_select %p584, %s28, 1
      %s586 = smul.addr %s585, 8
      %s587 = scalar_lea.vmem %s13, %s586
      %p588 = scmp.lt.s32.totalorder %s28, 1
      %s589 = scalar_select %p588, %s28, 1
      %s590 = smul.addr %s589, 8
      %s591 = scalar_lea.vmem %s0, %s590
      %p592 = scmp.lt.s32.totalorder %s29, 1
      %s593 = scalar_select %p592, %s29, 1
      %s594 = scalar_lea.vmem %s1, %s593
      %p595 = scmp.lt.s32.totalorder %s29, 1
      %s596 = scalar_select %p595, %s29, 1
      %s597 = scalar_lea.vmem %s2, %s596
      %p598 = scmp.lt.s32.totalorder %s29, 1
      %s599 = scalar_select %p598, %s29, 1
      %s600 = smul.addr %s599, 4
      %s601 = smul.addr %s600, 4
      %s602 = scalar_lea.vmem %s3, %s601
      %p603 = scmp.lt.s32.totalorder %s29, 1
      %s604 = scalar_select %p603, %s29, 1
      %s605 = scalar_lea.vmem %s4, %s604
      %p606 = scmp.lt.s32.totalorder %s29, 1
      %s607 = scalar_select %p606, %s29, 1
      %s608 = smul.addr %s607, 4
      %s609 = smul.addr %s608, 4
      %s610 = scalar_lea.vmem %s5, %s609
      %p611 = scmp.lt.s32.totalorder %s29, 1
      %s612 = scalar_select %p611, %s29, 1
      %s613 = scalar_lea.vmem %s6, %s612
      %p614 = scmp.lt.s32.totalorder %s29, 1
      %s615 = scalar_select %p614, %s29, 1
      %s616 = scalar_lea.vmem %s7, %s615
      %p617 = scmp.lt.s32.totalorder %s29, 1
      %s618 = scalar_select %p617, %s29, 1
      %s619 = scalar_lea.vmem %s8, %s618
      %p620 = scmp.lt.s32.totalorder %s29, 1
      %s621 = scalar_select %p620, %s29, 1
      %s622 = smul.addr %s621, 4
      %s623 = smul.addr %s622, 4
      %s624 = scalar_lea.vmem %s9, %s623
      %p625 = scmp.lt.s32.totalorder %s29, 1
      %s626 = scalar_select %p625, %s29, 1
      %s627 = scalar_lea.vmem %s10, %s626
      %p628 = scmp.lt.s32.totalorder %s29, 1
      %s629 = scalar_select %p628, %s29, 1
      %s630 = smul.addr %s629, 16
      %s631 = smul.addr %s630, 4
      %s632 = scalar_lea.vmem %s11, %s631
      %p633 = scmp.lt.s32.totalorder %s29, 1
      %s634 = scalar_select %p633, %s29, 1
      %s635 = scalar_lea.vmem %s12, %s634
      %p636 = scmp.lt.s32.totalorder %s28, 1
      %s637 = scalar_select %p636, %s28, 1
      %s638 = smul.addr %s637, 8
      %s639 = scalar_lea.vmem %s13, %s638
      %p641 = scmp.eq.s32.totalorder %s29, 0
      // Predicated region
      $region73: #{forward.8} parent=71 // pred_check
        %p642 = pneg %p641
      $region74: #{forward.8} parent=71 // pred_check_branch
        %644 = sbr.rel (%p642) target = $region76
      $region75: #{forward.8} parent=71 // pred_region
        %v645 = vld [vmem:[%s591] sm:$0x1f]
        %vm646 = vcmask 258048
        %647 = vst.msk [vmem:[%s639] sm:$0x1f] %vm646, %v645
      $region76: #{forward.8} parent=71 // pred_fallthru
        _
      %v648 = vld [vmem:[%s639] sm:$0x1f]
      %v649 = vld [vmem:[%s594] sm:$0x1]
      %v650 = vld [vmem:[%s597] sm:$0x1]
      %vm651 = vcmask 258048
      %v652 = vsel %vm651, %v648, 0.0
      %653 = vadd.xlane.f32.xlu0 %v652
      %v654 = vpop.xlane.xlu0 %653
      %v655 = vrcp.pop 32.0
      %v656 = vmul.f32 32.0, %v655
      %v657 = vsub.f32 1.0, %v656
      %v658 = vmul.f32 %v655, %v657
      %v659 = vadd.f32 %v655, %v658
      %vm660 = vweird.f32 %v655
      %v661 = vsel %vm660, %v655, %v659
      %v662 = vmul.f32 %v654, %v661
      %v663 = vsub.f32 %v648, %v662
      %v664 = vmul.f32 %v663, %v663
      %v665 = vsel %vm651, %v664, 0.0
      %666 = vadd.xlane.f32.xlu0 %v665
      %v667 = vpop.xlane.xlu0 %666
      %v668 = vmul.f32 %v667, %v661
      %v669 = vadd.f32 %v668, 1e-05
      %v670 = vrsqrt.pop %v669
      %v671 = vmul.f32 %v670, %v669
      %v672 = vmul.f32 %v671, %v670
      %v673 = vmul.f32 0.5, %v672
      %v674 = vsub.f32 1.5, %v673
      %v675 = vmul.f32 %v670, %v674
      %vm676 = vweird.f32 %v669
      %vm677 = vweird.f32 %v670
      %vm678 = vmor %vm676, %vm677
      %v679 = vsel %vm678, %v670, %v675
      %v680 = vmul.f32 %v663, %v679
      %v682 = vperm.slane %v649, 0
      %v684 = vmul.f32 %v680, %v682
      %v686 = vperm.slane %v650, 0
      %v688 = vadd.f32 %v684, %v686
      %v689 = vld [vmem:[%s602] sm:$0xf]
      %v690 = vld [vmem:[%s602 + $0x4] sm:$0xf]
      %v691 = vld [vmem:[%s602 + $0x8] sm:$0xf]
      %v692 = vld [vmem:[%s602 + $0xc] sm:$0xf]
      %v693 = vld [vmem:[%s605] sm:$0x1]
      %v694 = vpack.c.bf16 %v688, %v688
      %v696 = vperm.slane %v693, 0
      %v702 = vunpack.c.l.b16 %v689
      %v703 = vunpack.c.l.b16 %v690
      %v704 = vunpack.c.l.b16 %v691
      %v705 = vunpack.c.l.b16 %v692
      %v706 = vpack.c.b16 %v703, %v702
      %v707 = vpack.c.b16 %v705, %v704
      %vm710 = vcmask 261120
      %v712 = vsel %vm710, %v694, 0
      %714 = vmatpush.bf16.msra.mxu0 0
      %715 = vmatpush.bf16.msra.mxu0 0
      %716 = vmatpush.bf16.msra.mxu0 0
      %717 = vmatpush.bf16.msra.mxu0 0
      %718 = vmatpush.bf16.msra.mxu0 0
      %719 = vmatpush.bf16.msra.mxu0 0
      %720 = vmatpush.bf16.msra.mxu0 %v707
      %721 = vmatpush.bf16.msra.mxu0 %v706
      %722 = vmatmul.bf16.gmra.mxu0 %v712
      %v723 = vpop.f32.mrf.mxu0
      %v724 = vadd.f32 %v696, %v723
      %v725 = vpop.f32.mrf.mxu0
      %726 = vdwg.mxu0
      %728 = vrot.lane.b32.xlu0 %v724, 96
      %v729 = vpop.permute.xlu0 %728
      %vm730 = vcmask 64512
      %v731 = vsel %vm730, %v724, 0
      %v733 = vsel %vm730, %v729, 0
      %735 = vmatpush.xpose.msra.mxu0 0.0
      %736 = vmatpush.xpose.msra.mxu0 0.0
      %737 = vmatpush.xpose.msra.mxu0 0.0
      %738 = vmatpush.xpose.msra.mxu0 0.0
      %739 = vmatpush.xpose.msra.mxu0 0.0
      %740 = vmatpush.xpose.msra.mxu0 0.0
      %741 = vmatpush.xpose.msra.mxu0 0.0
      %742 = vmatpush.xpose.msra.mxu0 0.0
      %743 = vmatpush.xpose.msra.mxu0 0.0
      %744 = vmatpush.xpose.msra.mxu0 0.0
      %745 = vmatpush.xpose.msra.mxu0 0.0
      %746 = vmatpush.xpose.msra.mxu0 0.0
      %747 = vmatpush.xpose.msra.mxu0 0.0
      %748 = vmatpush.xpose.msra.mxu0 0.0
      %749 = vmatpush.xpose.msra.mxu0 0.0
      %750 = vmatpush.xpose.msra.mxu0 %v733
      %751 = vmatmul.f32.gmra.mxu0 %v731
      %v752 = vpop.f32.mrf.mxu0
      %v753 = vadd.f32 0.0, %v752
      %754 = vdwg.mxu0
      %v755 = vmul.f32 %v753, 0.35355338
      %vm756 = vcmask 36864
      %v757 = vsel %vm756, %v755, -inf
      %758 = vmax.xlane.f32.xlu0 %v757
      %v759 = vpop.xlane.xlu0 %758
      %v760 = vsub.f32 %v755, %v759
      %v761 = vmul.f32 %v760, 1.442695
      %v762 = vpow.pop %v761
      %v763 = vsel %vm756, %v762, 0.0
      %764 = vadd.xlane.f32.xlu0 %v763
      %v765 = vpop.xlane.xlu0 %764
      %v766 = vrcp.pop %v765
      %v767 = vmul.f32 %v762, %v766
      %768 = vrot.lane.b32.xlu0 %v724, 64
      %v769 = vpop.permute.xlu0 %768
      %vm770 = vcmask 39936
      %v772 = vsel %vm770, %v767, 0
      %vm774 = vcmask 1044480
      %v775 = vsel %vm774, %v769, 0
      %777 = vmatpush.msra.mxu0 0.0
      %778 = vmatpush.msra.mxu0 0.0
      %779 = vmatpush.msra.mxu0 0.0
      %780 = vmatpush.msra.mxu0 0.0
      %781 = vmatpush.msra.mxu0 0.0
      %782 = vmatpush.msra.mxu0 0.0
      %783 = vmatpush.msra.mxu0 0.0
      %784 = vmatpush.msra.mxu0 0.0
      %785 = vmatpush.msra.mxu0 0.0
      %786 = vmatpush.msra.mxu0 0.0
      %787 = vmatpush.msra.mxu0 0.0
      %788 = vmatpush.msra.mxu0 0.0
      %789 = vmatpush.msra.mxu0 0.0
      %790 = vmatpush.msra.mxu0 0.0
      %791 = vmatpush.msra.mxu0 0.0
      %792 = vmatpush.msra.mxu0 %v775
      %793 = vmatmul.f32.gmra.mxu0 %v772
      %v794 = vpop.f32.mrf.mxu0
      %v795 = vadd.f32 0.0, %v794
      %796 = vdwg.mxu0
      %797 = vrot.lane.b32.xlu0 %v724, 120
      %v798 = vpop.permute.xlu0 %797
      %799 = vrot.lane.b32.xlu0 %v724, 88
      %v800 = vpop.permute.xlu0 %799
      %v801 = vsel %vm730, %v798, 0
      %v803 = vsel %vm730, %v800, 0
      %805 = vmatpush.xpose.msra.mxu0 0.0
      %806 = vmatpush.xpose.msra.mxu0 0.0
      %807 = vmatpush.xpose.msra.mxu0 0.0
      %808 = vmatpush.xpose.msra.mxu0 0.0
      %809 = vmatpush.xpose.msra.mxu0 0.0
      %810 = vmatpush.xpose.msra.mxu0 0.0
      %811 = vmatpush.xpose.msra.mxu0 0.0
      %812 = vmatpush.xpose.msra.mxu0 0.0
      %813 = vmatpush.xpose.msra.mxu0 0.0
      %814 = vmatpush.xpose.msra.mxu0 0.0
      %815 = vmatpush.xpose.msra.mxu0 0.0
      %816 = vmatpush.xpose.msra.mxu0 0.0
      %817 = vmatpush.xpose.msra.mxu0 0.0
      %818 = vmatpush.xpose.msra.mxu0 0.0
      %819 = vmatpush.xpose.msra.mxu0 0.0
      %820 = vmatpush.xpose.msra.mxu0 %v803
      %821 = vmatmul.f32.gmra.mxu0 %v801
      %v822 = vpop.f32.mrf.mxu0
      %v823 = vadd.f32 0.0, %v822
      %824 = vdwg.mxu0
      %v825 = vmul.f32 %v823, 0.35355338
      %v826 = vsel %vm756, %v825, -inf
      %827 = vmax.xlane.f32.xlu0 %v826
      %v828 = vpop.xlane.xlu0 %827
      %v829 = vsub.f32 %v825, %v828
      %v830 = vmul.f32 %v829, 1.442695
      %v831 = vpow.pop %v830
      %v832 = vsel %vm756, %v831, 0.0
      %833 = vadd.xlane.f32.xlu0 %v832
      %v834 = vpop.xlane.xlu0 %833
      %v835 = vrcp.pop %v834
      %v836 = vmul.f32 %v831, %v835
      %837 = vrot.lane.b32.xlu0 %v724, 56
      %v838 = vpop.permute.xlu0 %837
      %v840 = vsel %vm770, %v836, 0
      %v842 = vsel %vm774, %v838, 0
      %844 = vmatpush.msra.mxu0 0.0
      %845 = vmatpush.msra.mxu0 0.0
      %846 = vmatpush.msra.mxu0 0.0
      %847 = vmatpush.msra.mxu0 0.0
      %848 = vmatpush.msra.mxu0 0.0
      %849 = vmatpush.msra.mxu0 0.0
      %850 = vmatpush.msra.mxu0 0.0
      %851 = vmatpush.msra.mxu0 0.0
      %852 = vmatpush.msra.mxu0 0.0
      %853 = vmatpush.msra.mxu0 0.0
      %854 = vmatpush.msra.mxu0 0.0
      %855 = vmatpush.msra.mxu0 0.0
      %856 = vmatpush.msra.mxu0 0.0
      %857 = vmatpush.msra.mxu0 0.0
      %858 = vmatpush.msra.mxu0 0.0
      %859 = vmatpush.msra.mxu0 %v842
      %860 = vmatmul.f32.gmra.mxu0 %v840
      %v861 = vpop.f32.mrf.mxu0
      %v862 = vadd.f32 0.0, %v861
      %863 = vdwg.mxu0
      %864 = vrot.lane.b32.xlu0 %v724, 112
      %v865 = vpop.permute.xlu0 %864
      %866 = vrot.lane.b32.xlu0 %v724, 80
      %v867 = vpop.permute.xlu0 %866
      %v868 = vsel %vm730, %v865, 0
      %v870 = vsel %vm730, %v867, 0
      %872 = vmatpush.xpose.msra.mxu0 0.0
      %873 = vmatpush.xpose.msra.mxu0 0.0
      %874 = vmatpush.xpose.msra.mxu0 0.0
      %875 = vmatpush.xpose.msra.mxu0 0.0
      %876 = vmatpush.xpose.msra.mxu0 0.0
      %877 = vmatpush.xpose.msra.mxu0 0.0
      %878 = vmatpush.xpose.msra.mxu0 0.0
      %879 = vmatpush.xpose.msra.mxu0 0.0
      %880 = vmatpush.xpose.msra.mxu0 0.0
      %881 = vmatpush.xpose.msra.mxu0 0.0
      %882 = vmatpush.xpose.msra.mxu0 0.0
      %883 = vmatpush.xpose.msra.mxu0 0.0
      %884 = vmatpush.xpose.msra.mxu0 0.0
      %885 = vmatpush.xpose.msra.mxu0 0.0
      %886 = vmatpush.xpose.msra.mxu0 0.0
      %887 = vmatpush.xpose.msra.mxu0 %v870
      %888 = vmatmul.f32.gmra.mxu0 %v868
      %v889 = vpop.f32.mrf.mxu0
      %v890 = vadd.f32 0.0, %v889
      %891 = vdwg.mxu0
      %v892 = vmul.f32 %v890, 0.35355338
      %v893 = vsel %vm756, %v892, -inf
      %894 = vmax.xlane.f32.xlu0 %v893
      %v895 = vpop.xlane.xlu0 %894
      %v896 = vsub.f32 %v892, %v895
      %v897 = vmul.f32 %v896, 1.442695
      %v898 = vpow.pop %v897
      %v899 = vsel %vm756, %v898, 0.0
      %900 = vadd.xlane.f32.xlu0 %v899
      %v901 = vpop.xlane.xlu0 %900
      %v902 = vrcp.pop %v901
      %v903 = vmul.f32 %v898, %v902
      %904 = vrot.lane.b32.xlu0 %v724, 48
      %v905 = vpop.permute.xlu0 %904
      %v907 = vsel %vm770, %v903, 0
      %v909 = vsel %vm774, %v905, 0
      %911 = vmatpush.msra.mxu0 0.0
      %912 = vmatpush.msra.mxu0 0.0
      %913 = vmatpush.msra.mxu0 0.0
      %914 = vmatpush.msra.mxu0 0.0
      %915 = vmatpush.msra.mxu0 0.0
      %916 = vmatpush.msra.mxu0 0.0
      %917 = vmatpush.msra.mxu0 0.0
      %918 = vmatpush.msra.mxu0 0.0
      %919 = vmatpush.msra.mxu0 0.0
      %920 = vmatpush.msra.mxu0 0.0
      %921 = vmatpush.msra.mxu0 0.0
      %922 = vmatpush.msra.mxu0 0.0
      %923 = vmatpush.msra.mxu0 0.0
      %924 = vmatpush.msra.mxu0 0.0
      %925 = vmatpush.msra.mxu0 0.0
      %926 = vmatpush.msra.mxu0 %v909
      %927 = vmatmul.f32.gmra.mxu0 %v907
      %v928 = vpop.f32.mrf.mxu0
      %v929 = vadd.f32 0.0, %v928
      %930 = vdwg.mxu0
      %931 = vrot.lane.b32.xlu0 %v724, 104
      %v932 = vpop.permute.xlu0 %931
      %933 = vrot.lane.b32.xlu0 %v724, 72
      %v934 = vpop.permute.xlu0 %933
      %v935 = vsel %vm730, %v932, 0
      %v937 = vsel %vm730, %v934, 0
      %939 = vmatpush.xpose.msra.mxu0 0.0
      %940 = vmatpush.xpose.msra.mxu0 0.0
      %941 = vmatpush.xpose.msra.mxu0 0.0
      %942 = vmatpush.xpose.msra.mxu0 0.0
      %943 = vmatpush.xpose.msra.mxu0 0.0
      %944 = vmatpush.xpose.msra.mxu0 0.0
      %945 = vmatpush.xpose.msra.mxu0 0.0
      %946 = vmatpush.xpose.msra.mxu0 0.0
      %947 = vmatpush.xpose.msra.mxu0 0.0
      %948 = vmatpush.xpose.msra.mxu0 0.0
      %949 = vmatpush.xpose.msra.mxu0 0.0
      %950 = vmatpush.xpose.msra.mxu0 0.0
      %951 = vmatpush.xpose.msra.mxu0 0.0
      %952 = vmatpush.xpose.msra.mxu0 0.0
      %953 = vmatpush.xpose.msra.mxu0 0.0
      %954 = vmatpush.xpose.msra.mxu0 %v937
      %955 = vmatmul.f32.gmra.mxu0 %v935
      %v956 = vpop.f32.mrf.mxu0
      %v957 = vadd.f32 0.0, %v956
      %958 = vdwg.mxu0
      %v959 = vmul.f32 %v957, 0.35355338
      %v960 = vsel %vm756, %v959, -inf
      %961 = vmax.xlane.f32.xlu0 %v960
      %v962 = vpop.xlane.xlu0 %961
      %v963 = vsub.f32 %v959, %v962
      %v964 = vmul.f32 %v963, 1.442695
      %v965 = vpow.pop %v964
      %v966 = vsel %vm756, %v965, 0.0
      %967 = vadd.xlane.f32.xlu0 %v966
      %v968 = vpop.xlane.xlu0 %967
      %v969 = vrcp.pop %v968
      %v970 = vmul.f32 %v965, %v969
      %971 = vrot.lane.b32.xlu0 %v724, 40
      %v972 = vpop.permute.xlu0 %971
      %v974 = vsel %vm770, %v970, 0
      %v976 = vsel %vm774, %v972, 0
      %978 = vmatpush.msra.mxu0 0.0
      %979 = vmatpush.msra.mxu0 0.0
      %980 = vmatpush.msra.mxu0 0.0
      %981 = vmatpush.msra.mxu0 0.0
      %982 = vmatpush.msra.mxu0 0.0
      %983 = vmatpush.msra.mxu0 0.0
      %984 = vmatpush.msra.mxu0 0.0
      %985 = vmatpush.msra.mxu0 0.0
      %986 = vmatpush.msra.mxu0 0.0
      %987 = vmatpush.msra.mxu0 0.0
      %988 = vmatpush.msra.mxu0 0.0
      %989 = vmatpush.msra.mxu0 0.0
      %990 = vmatpush.msra.mxu0 0.0
      %991 = vmatpush.msra.mxu0 0.0
      %992 = vmatpush.msra.mxu0 0.0
      %993 = vmatpush.msra.mxu0 %v976
      %994 = vmatmul.f32.gmra.mxu0 %v974
      %v995 = vpop.f32.mrf.mxu0
      %v996 = vadd.f32 0.0, %v995
      %997 = vdwg.mxu0
      %999 = vrot.lane.b32.xlu0 %v862, 8
      %v1000 = vpop.permute.xlu0 %999
      %1003 = vrot.lane.b32.xlu0 %v929, 16
      %v1004 = vpop.permute.xlu0 %1003
      %1007 = vrot.lane.b32.xlu0 %v996, 24
      %v1008 = vpop.permute.xlu0 %1007
      %v1010 = vsel %vm730, %v795, %v1000
      %vm1011 = vcmask 130048
      %v1012 = vsel %vm1011, %v1010, %v1004
      %vm1013 = vcmask 195584
      %v1014 = vsel %vm1013, %v1012, %v1008
      %v1015 = vld [vmem:[%s610] sm:$0xf]
      %v1016 = vld [vmem:[%s610 + $0x4] sm:$0xf]
      %v1017 = vld [vmem:[%s610 + $0x8] sm:$0xf]
      %v1018 = vld [vmem:[%s610 + $0xc] sm:$0xf]
      %v1019 = vld [vmem:[%s613] sm:$0x1]
      %v1020 = vpack.c.bf16 %v1014, %v1014
      %v1022 = vperm.slane %v1019, 0
      %v1028 = vunpack.c.l.b16 %v1015
      %v1029 = vunpack.c.l.b16 %v1016
      %v1030 = vunpack.c.l.b16 %v1017
      %v1031 = vunpack.c.l.b16 %v1018
      %v1032 = vpack.c.b16 %v1029, %v1028
      %v1033 = vpack.c.b16 %v1031, %v1030
      %v1037 = vsel %vm710, %v1020, 0
      %1039 = vmatpush.bf16.msra.mxu0 0
      %1040 = vmatpush.bf16.msra.mxu0 0
      %1041 = vmatpush.bf16.msra.mxu0 0
      %1042 = vmatpush.bf16.msra.mxu0 0
      %1043 = vmatpush.bf16.msra.mxu0 0
      %1044 = vmatpush.bf16.msra.mxu0 0
      %1045 = vmatpush.bf16.msra.mxu0 %v1033
      %1046 = vmatpush.bf16.msra.mxu0 %v1032
      %1047 = vmatmul.bf16.gmra.mxu0 %v1037
      %v1048 = vpop.f32.mrf.mxu0
      %v1049 = vadd.f32 %v1022, %v1048
      %v1050 = vpop.f32.mrf.mxu0
      %1051 = vdwg.mxu0
      %v1052 = vadd.f32 %v648, %v1049
      %v1053 = vld [vmem:[%s616] sm:$0x1]
      %v1054 = vld [vmem:[%s619] sm:$0x1]
      %v1055 = vsel %vm651, %v1052, 0.0
      %1056 = vadd.xlane.f32.xlu0 %v1055
      %v1057 = vpop.xlane.xlu0 %1056
      %v1058 = vmul.f32 %v1057, %v661
      %v1059 = vsub.f32 %v1052, %v1058
      %v1060 = vmul.f32 %v1059, %v1059
      %v1061 = vsel %vm651, %v1060, 0.0
      %1062 = vadd.xlane.f32.xlu0 %v1061
      %v1063 = vpop.xlane.xlu0 %1062
      %v1064 = vmul.f32 %v1063, %v661
      %v1065 = vadd.f32 %v1064, 1e-05
      %v1066 = vrsqrt.pop %v1065
      %v1067 = vmul.f32 %v1066, %v1065
      %v1068 = vmul.f32 %v1067, %v1066
      %v1069 = vmul.f32 0.5, %v1068
      %v1070 = vsub.f32 1.5, %v1069
      %v1071 = vmul.f32 %v1066, %v1070
      %vm1072 = vweird.f32 %v1065
      %vm1073 = vweird.f32 %v1066
      %vm1074 = vmor %vm1072, %vm1073
      %v1075 = vsel %vm1074, %v1066, %v1071
      %v1076 = vmul.f32 %v1059, %v1075
      %v1078 = vperm.slane %v1053, 0
      %v1080 = vmul.f32 %v1076, %v1078
      %v1082 = vperm.slane %v1054, 0
      %v1084 = vadd.f32 %v1080, %v1082
      %v1085 = vld [vmem:[%s624] sm:$0xf]
      %v1086 = vld [vmem:[%s624 + $0x4] sm:$0xf]
      %v1087 = vld [vmem:[%s624 + $0x8] sm:$0xf]
      %v1088 = vld [vmem:[%s624 + $0xc] sm:$0xf]
      %v1089 = vld [vmem:[%s627] sm:$0x1]
      %v1090 = vpack.c.bf16 %v1084, %v1084
      %v1092 = vperm.slane %v1089, 0
      %v1098 = vunpack.c.l.b16 %v1085
      %v1099 = vunpack.c.l.b16 %v1086
      %v1100 = vunpack.c.l.b16 %v1087
      %v1101 = vunpack.c.l.b16 %v1088
      %v1102 = vpack.c.b16 %v1099, %v1098
      %v1103 = vpack.c.b16 %v1101, %v1100
      %v1107 = vsel %vm710, %v1090, 0
      %1109 = vmatpush.bf16.msra.mxu0 0
      %1110 = vmatpush.bf16.msra.mxu0 0
      %1111 = vmatpush.bf16.msra.mxu0 0
      %1112 = vmatpush.bf16.msra.mxu0 0
      %1113 = vmatpush.bf16.msra.mxu0 0
      %1114 = vmatpush.bf16.msra.mxu0 0
      %1115 = vmatpush.bf16.msra.mxu0 %v1103
      %1116 = vmatpush.bf16.msra.mxu0 %v1102
      %1117 = vmatmul.bf16.gmra.mxu0 %v1107
      %v1118 = vpop.f32.mrf.mxu0
      %v1119 = vadd.f32 %v1092, %v1118
      %v1120 = vpop.f32.mrf.mxu0
      %1121 = vdwg.mxu0
      %v1122 = vmul.f32 %v1119, 1.702
      %v1123 = vxor.u32 %v1122, 2147483648
      %v1124 = vmul.f32 %v1123, 1.442695
      %v1125 = vpow.pop %v1124
      %v1126 = vadd.f32 %v1125, 1.0
      %v1127 = vrcp.pop %v1126
      %v1128 = vmul.f32 %v1126, %v1127
      %v1129 = vsub.f32 1.0, %v1128
      %v1130 = vmul.f32 %v1127, %v1129
      %v1131 = vadd.f32 %v1127, %v1130
      %vm1132 = vweird.f32 %v1126
      %vm1133 = vweird.f32 %v1127
      %vm1134 = vmor %vm1132, %vm1133
      %v1135 = vsel %vm1134, %v1127, %v1131
      %v1136 = vand.u32 2147483647, %v1126
      %vm1137 = vcmp.eq.f32.partialorder %v1136, 8.507059e+37
      %v1138 = vand.u32 %v1126, 2147483648
      %v1139 = vor.u32 1.1754944e-38, %v1138
      %v1140 = vsel %vm1137, %v1139, %v1135
      %v1141 = vmul.f32 1.0, %v1140
      %v1142 = vmul.f32 %v1119, %v1141
      %v1143 = vld [vmem:[%s632] sm:$0xf]
      %v1144 = vld [vmem:[%s632 + $0x4] sm:$0xf]
      %v1145 = vld [vmem:[%s632 + $0x8] sm:$0xf]
      %v1146 = vld [vmem:[%s632 + $0xc] sm:$0xf]
      %v1147 = vld [vmem:[%s632 + $0x10] sm:$0xf]
      %v1148 = vld [vmem:[%s632 + $0x14] sm:$0xf]
      %v1149 = vld [vmem:[%s632 + $0x18] sm:$0xf]
      %v1150 = vld [vmem:[%s632 + $0x1c] sm:$0xf]
      %v1151 = vld [vmem:[%s632 + $0x20] sm:$0xf]
      %v1152 = vld [vmem:[%s632 + $0x24] sm:$0xf]
      %v1153 = vld [vmem:[%s632 + $0x28] sm:$0xf]
      %v1154 = vld [vmem:[%s632 + $0x2c] sm:$0xf]
      %v1155 = vld [vmem:[%s632 + $0x30] sm:$0xf]
      %v1156 = vld [vmem:[%s632 + $0x34] sm:$0xf]
      %v1157 = vld [vmem:[%s632 + $0x38] sm:$0xf]
      %v1158 = vld [vmem:[%s632 + $0x3c] sm:$0xf]
      %v1159 = vld [vmem:[%s635] sm:$0x1]
      %v1160 = vpack.c.bf16 %v1142, %v1142
      %v1162 = vperm.slane %v1159, 0
      %v1180 = vunpack.c.l.b16 %v1143
      %v1181 = vunpack.c.l.b16 %v1144
      %v1182 = vunpack.c.l.b16 %v1145
      %v1183 = vunpack.c.l.b16 %v1146
      %v1184 = vunpack.c.l.b16 %v1147
      %v1185 = vunpack.c.l.b16 %v1148
      %v1186 = vunpack.c.l.b16 %v1149
      %v1187 = vunpack.c.l.b16 %v1150
      %v1188 = vunpack.c.l.b16 %v1151
      %v1189 = vunpack.c.l.b16 %v1152
      %v1190 = vunpack.c.l.b16 %v1153
      %v1191 = vunpack.c.l.b16 %v1154
      %v1192 = vunpack.c.l.b16 %v1155
      %v1193 = vunpack.c.l.b16 %v1156
      %v1194 = vunpack.c.l.b16 %v1157
      %v1195 = vunpack.c.l.b16 %v1158
      %v1196 = vpack.c.b16 %v1181, %v1180
      %v1197 = vpack.c.b16 %v1183, %v1182
      %v1198 = vpack.c.b16 %v1185, %v1184
      %v1199 = vpack.c.b16 %v1187, %v1186
      %v1200 = vpack.c.b16 %v1189, %v1188
      %v1201 = vpack.c.b16 %v1191, %v1190
      %v1202 = vpack.c.b16 %v1193, %v1192
      %v1203 = vpack.c.b16 %v1195, %v1194
      %1212 = vmatpush.bf16.msra.mxu0 %v1203
      %1213 = vmatpush.bf16.msra.mxu0 %v1202
      %1214 = vmatpush.bf16.msra.mxu0 %v1201
      %1215 = vmatpush.bf16.msra.mxu0 %v1200
      %1216 = vmatpush.bf16.msra.mxu0 %v1199
      %1217 = vmatpush.bf16.msra.mxu0 %v1198
      %1218 = vmatpush.bf16.msra.mxu0 %v1197
      %1219 = vmatpush.bf16.msra.mxu0 %v1196
      %1220 = vmatmul.bf16.gmra.mxu0 %v1160
      %v1221 = vpop.f32.mrf.mxu0
      %v1222 = vadd.f32 %v1162, %v1221
      %v1223 = vpop.f32.mrf.mxu0
      %1224 = vdwg.mxu0
      %v1225 = vadd.f32 %v1052, %v1222
      %1226 = vst.msk [vmem:[%s639] sm:$0x1f] %vm651, %v1225
      %p1227 = scmp.lt.s32.totalorder %s28, 1
      %s1228 = scalar_select %p1227, %s28, 1
      %s1229 = smul.addr %s1228, 8
      %s1230 = scalar_lea.vmem %s13, %s1229
      // Predicated region
      $region77: #{forward.8} parent=71 // pred_check
        %p1231 = pneg %p392
      $region78: #{forward.8} parent=71 // pred_check_branch
        %1233 = sbr.rel (%p1231) target = $region80
      $region79: #{forward.8} parent=71 // pred_region
        _
      $region80: #{forward.8} parent=71 // pred_fallthru
        _
    $region72: #{forward.8} parent=5 // pred_fallthru
      _
    %p1234 = scmp.le.s32.totalorder 2, %s19
    // Predicated region
    $region81: #{forward.8} parent=5 // pred_check
      %p1235 = pneg %p1234
    $region82: #{forward.8} parent=5 // pred_check_branch
      %1237 = sbr.rel (%p1235) target = $region84
    $region83: #{forward.8} parent=5 // pred_region
      %s1238 = ssub.s32 %s19, 2
      // Predicated region
      $region85: #{forward.8} parent=83 // pred_check
        %p1239 = pneg %p398
      $region86: #{forward.8} parent=83 // pred_check_branch
        %1241 = sbr.rel (%p1239) target = $region88
      $region87: #{forward.8} parent=83 // pred_region
        %p1242 = scmp.lt.s32.totalorder %s30, 1
        %s1243 = scalar_select %p1242, %s30, 1
        %s1244 = smul.addr %s1243, 8
        %s1245 = scalar_lea.vmem %s13, %s1244
      $region88: #{forward.8} parent=83 // pred_fallthru
        _
    $region84: #{forward.8} parent=5 // pred_fallthru
      _
  $region6: #{forward.8} parent=0 // loop_footer
    %s23 = sadd.s32 1, %s19
  $region7: #{forward.8} parent=0 // loop_footer_branch
    %18 = sbr.rel target = $region3
  $region8: #{forward.8} parent=0 // loop_exit
    _

// kernel: forward.6
$region0: #{forward.6}
  #allocation0 [shape = 'u32[]', space=smem, size = 0x4, offset = 0x4, fixed_abs, tag = 'smem constant byte address 0x4 - core index']
  #allocation1 [shape = 'u32[72,128]{1,0:T(1,128)}', space=vmem, size = 0x9000, scoped, tag = 'internal scratch']
  %s0 = inlined_call_operand.vmem [shape: f32[3,8,32], index: 0, kind: input, shape index: {}]
  %s1 = inlined_call_operand.vmem [shape: f32[3,8], index: 1, kind: input, shape index: {}]
  %s2 = inlined_call_operand.vmem [shape: f32[1,32], index: 2, kind: input, shape index: {}]
  %s3 = inlined_call_operand.vmem [shape: f32[1,32], index: 3, kind: input, shape index: {}]
  %s4 = inlined_call_operand.vmem [shape: bf16[32,32], index: 4, kind: input, shape index: {}]
  %s5 = inlined_call_operand.vmem [shape: f32[3,32], index: 5, kind: output, shape index: {}]
  %s6 = sld [smem:[#allocation0]]
  $region30: #{forward.6} parent=0
    _
  %s8 = ssub.s32 1, %s6
  %s9 = scalar_select 0, %s8, %s6
  // Predicated region
  $region2: #{forward.6} parent=0 // pred_check
    _
  $region3: #{forward.6} parent=0 // pred_check_branch
    %11 = sbr.rel (0) target = $region5
  $region4: #{forward.6} parent=0 // pred_region
    _
  $region5: #{forward.6} parent=0 // pred_fallthru
    _
  // Predicated region
  $region6: #{forward.6} parent=0 // pred_check
    _
  $region7: #{forward.6} parent=0 // pred_check_branch
    %13 = sbr.rel (0) target = $region9
  $region8: #{forward.6} parent=0 // pred_region
    _
  $region9: #{forward.6} parent=0 // pred_fallthru
    _
  // Predicated region
  $region10: #{forward.6} parent=0 // pred_check
    _
  $region11: #{forward.6} parent=0 // pred_check_branch
    %15 = sbr.rel (0) target = $region13
  $region12: #{forward.6} parent=0 // pred_region
    _
  $region13: #{forward.6} parent=0 // pred_fallthru
    _
  // Predicated region
  $region14: #{forward.6} parent=0 // pred_check
    _
  $region15: #{forward.6} parent=0 // pred_check_branch
    %17 = sbr.rel (0) target = $region17
  $region16: #{forward.6} parent=0 // pred_region
    _
  $region17: #{forward.6} parent=0 // pred_fallthru
    _
  // Predicated region
  $region18: #{forward.6} parent=0 // pred_check
    _
  $region19: #{forward.6} parent=0 // pred_check_branch
    %19 = sbr.rel (0) target = $region21
  $region20: #{forward.6} parent=0 // pred_region
    _
  $region21: #{forward.6} parent=0 // pred_fallthru
    _
  %v21 = vld [vmem:[%s0] sm:$0xff]
  %v22 = vld [vmem:[%s0 + $0x8] sm:$0xff]
  %v23 = vld [vmem:[%s0 + $0x10] sm:$0xff]
  %v24 = vld [vmem:[%s1] sm:$0x7]
  %v25 = vperm.slane %v24, 0
  %v26 = vlaneseq
  %v27 = vshrl.u32 %v26, 7
  %29 = vset.pattern.permute.xlu0 %v27
  %30 = vperm.xlu0 %29, %v25
  %v31 = vpop.permute.xlu0 %30
  %v32 = vperm.slane %v24, 1
  %v33 = vlaneseq
  %v34 = vshrl.u32 %v33, 7
  %36 = vset.pattern.permute.xlu0 %v34
  %37 = vperm.xlu0 %36, %v32
  %v38 = vpop.permute.xlu0 %37
  %v39 = vperm.slane %v24, 2
  %v40 = vlaneseq
  %v41 = vshrl.u32 %v40, 7
  %43 = vset.pattern.permute.xlu0 %v41
  %44 = vperm.xlu0 %43, %v39
  %v45 = vpop.permute.xlu0 %44
  %v46 = vmul.f32 %v31, %v21
  %v47 = vmul.f32 %v38, %v22
  %v48 = vmul.f32 %v45, %v23
  %vm49 = vcmask 261120
  %v50 = vsel %vm49, %v46, 0.0
  %v51 = vrot.slane %v50, 4
  %v52 = vadd.f32 %v50, %v51
  %v53 = vrot.slane %v52, 2
  %v54 = vadd.f32 %v52, %v53
  %v55 = vrot.slane %v54, 1
  %v56 = vadd.f32 %v54, %v55
  %v57 = vsel %vm49, %v47, 0.0
  %v58 = vrot.slane %v57, 4
  %v59 = vadd.f32 %v57, %v58
  %v60 = vrot.slane %v59, 2
  %v61 = vadd.f32 %v59, %v60
  %v62 = vrot.slane %v61, 1
  %v63 = vadd.f32 %v61, %v62
  %v64 = vsel %vm49, %v48, 0.0
  %v65 = vrot.slane %v64, 4
  %v66 = vadd.f32 %v64, %v65
  %v67 = vrot.slane %v66, 2
  %v68 = vadd.f32 %v66, %v67
  %v69 = vrot.slane %v68, 1
  %v70 = vadd.f32 %v68, %v69
  %v71 = vld [vmem:[%s2] sm:$0x1]
  %v72 = vld [vmem:[%s3] sm:$0x1]
  %vm76 = vcmask 1041409
  %v77 = vsel %vm76, %v63, %v56
  %vm78 = vcmask 1042434
  %v79 = vsel %vm78, %v70, %v77
  %vm81 = vcmask 256000
  %v82 = vsel %vm81, %v79, 0.0
  %83 = vadd.xlane.f32.xlu0 %v82
  %v84 = vpop.xlane.xlu0 %83
  %v85 = vrcp.pop 32.0
  %v86 = vmul.f32 32.0, %v85
  %v87 = vsub.f32 1.0, %v86
  %v88 = vmul.f32 %v85, %v87
  %v89 = vadd.f32 %v85, %v88
  %vm90 = vweird.f32 %v85
  %v91 = vsel %vm90, %v85, %v89
  %v92 = vmul.f32 %v84, %v91
  %v94 = vrot.slane %v92, 1
  %v95 = vrot.slane %v92, 2
  %v99 = vsub.f32 %v56, %v92
  %v100 = vsub.f32 %v63, %v94
  %v101 = vsub.f32 %v70, %v95
  %v102 = vmul.f32 %v99, %v99
  %v103 = vmul.f32 %v100, %v100
  %v104 = vmul.f32 %v101, %v101
  %v108 = vrot.slane %v103, 7
  %v109 = vsel %vm76, %v108, %v102
  %v110 = vrot.slane %v104, 6
  %v111 = vsel %vm78, %v110, %v109
  %v113 = vsel %vm81, %v111, 0.0
  %114 = vadd.xlane.f32.xlu0 %v113
  %v115 = vpop.xlane.xlu0 %114
  %v116 = vmul.f32 %v115, %v91
  %v117 = vadd.f32 %v116, 1e-05
  %v118 = vrsqrt.pop %v117
  %v119 = vmul.f32 %v118, %v117
  %v120 = vmul.f32 %v119, %v118
  %v121 = vmul.f32 0.5, %v120
  %v122 = vsub.f32 1.5, %v121
  %v123 = vmul.f32 %v118, %v122
  %vm124 = vweird.f32 %v117
  %vm125 = vweird.f32 %v118
  %vm126 = vmor %vm124, %vm125
  %v127 = vsel %vm126, %v118, %v123
  %v129 = vrot.slane %v127, 1
  %v130 = vrot.slane %v127, 2
  %v134 = vmul.f32 %v99, %v127
  %v135 = vmul.f32 %v100, %v129
  %v136 = vmul.f32 %v101, %v130
  %v138 = vperm.slane %v71, 0
  %v140 = vmul.f32 %v134, %v138
  %v141 = vmul.f32 %v135, %v138
  %v142 = vmul.f32 %v136, %v138
  %v144 = vperm.slane %v72, 0
  %v146 = vadd.f32 %v140, %v144
  %v147 = vadd.f32 %v141, %v144
  %v148 = vadd.f32 %v142, %v144
  %v149 = vpack.c.bf16 %v146, %v146
  %v150 = vpack.c.bf16 %v147, %v147
  %v151 = vpack.c.bf16 %v148, %v148
  %v152 = vld [vmem:[%s4] sm:$0xf]
  %v153 = vld [vmem:[%s4 + $0x4] sm:$0xf]
  %v154 = vld [vmem:[%s4 + $0x8] sm:$0xf]
  %v155 = vld [vmem:[%s4 + $0xc] sm:$0xf]
  %v159 = vunpack.c.l.b16 %v149
  %v160 = vunpack.c.l.b16 %v150
  %v161 = vunpack.c.l.b16 %v151
  %v162 = vrot.slane %v160, 7
  %v163 = vsel %vm76, %v162, %v159
  %v164 = vrot.slane %v161, 6
  %v165 = vsel %vm78, %v164, %v163
  %v166 = vpack.c.b16 %v165, %v165
  %v171 = vunpack.c.l.b16 %v152
  %v172 = vunpack.c.l.b16 %v153
  %v173 = vunpack.c.l.b16 %v154
  %v174 = vunpack.c.l.b16 %v155
  %v175 = vpack.c.b16 %v172, %v171
  %v176 = vpack.c.b16 %v174, %v173
  %v180 = vsel %vm49, %v166, 0
  %182 = vmatpush.bf16.msra.mxu0 0
  %183 = vmatpush.bf16.msra.mxu0 0
  %184 = vmatpush.bf16.msra.mxu0 0
  %185 = vmatpush.bf16.msra.mxu0 0
  %186 = vmatpush.bf16.msra.mxu0 0
  %187 = vmatpush.bf16.msra.mxu0 0
  %188 = vmatpush.bf16.msra.mxu0 %v176
  %189 = vmatpush.bf16.msra.mxu0 %v175
  %190 = vmatmul.bf16.gmra.mxu0 %v180
  %v191 = vpop.f32.mrf.mxu0
  %v192 = vadd.f32 0.0, %v191
  %v193 = vpop.f32.mrf.mxu0
  %194 = vdwg.mxu0
  %v195 = vmul.f32 %v192, %v192
  %v196 = vsel %vm81, %v195, 0.0
  %197 = vadd.xlane.f32.xlu0 %v196
  %v198 = vpop.xlane.xlu0 %197
  %v199 = vadd.f32 %v198, 1e-12
  %v200 = vrsqrt.pop %v199
  %v201 = vmul.f32 %v200, %v199
  %v202 = vmul.f32 %v201, %v200
  %v203 = vmul.f32 0.5, %v202
  %v204 = vsub.f32 1.5, %v203
  %v205 = vmul.f32 %v200, %v204
  %vm206 = vweird.f32 %v199
  %vm207 = vweird.f32 %v200
  %vm208 = vmor %vm206, %vm207
  %v209 = vsel %vm208, %v200, %v205
  %v210 = vmul.f32 %v192, %v209
  %211 = vst.msk [vmem:[%s5] sm:$0x7] %vm81, %v210
  // Predicated region
  $region22: #{forward.6} parent=0 // pred_check
    _
  $region23: #{forward.6} parent=0 // pred_check_branch
    %213 = sbr.rel (0) target = $region25
  $region24: #{forward.6} parent=0 // pred_region
    _
  $region25: #{forward.6} parent=0 // pred_fallthru
    _
  // Predicated region
  $region26: #{forward.6} parent=0 // pred_check
    _
  $region27: #{forward.6} parent=0 // pred_check_branch
    %215 = sbr.rel (0) target = $region29
  $region28: #{forward.6} parent=0 // pred_region
    _
  $region29: #{forward.6} parent=0 // pred_fallthru
    _

// kernel: forward.5
$region0: #{forward.5}
  #allocation0 [shape = 'u32[]', space=smem, size = 0x4, offset = 0x4, fixed_abs, tag = 'smem constant byte address 0x4 - core index']
  #allocation1 [shape = 'u32[72,128]{1,0:T(1,128)}', space=vmem, size = 0x9000, scoped, tag = 'internal scratch']
  %s0 = inlined_call_operand.vmem [shape: f32[3,8,32], index: 0, kind: input, shape index: {}]
  %s1 = inlined_call_operand.vmem [shape: f32[2,1,32], index: 1, kind: input, shape index: {}]
  %s2 = inlined_call_operand.vmem [shape: f32[2,1,32], index: 2, kind: input, shape index: {}]
  %s3 = inlined_call_operand.vmem [shape: bf16[2,32,96], index: 3, kind: input, shape index: {}]
  %s4 = inlined_call_operand.vmem [shape: f32[2,1,96], index: 4, kind: input, shape index: {}]
  %s5 = inlined_call_operand.vmem [shape: bf16[2,32,32], index: 5, kind: input, shape index: {}]
  %s6 = inlined_call_operand.vmem [shape: f32[2,1,32], index: 6, kind: input, shape index: {}]
  %s7 = inlined_call_operand.vmem [shape: f32[2,1,32], index: 7, kind: input, shape index: {}]
  %s8 = inlined_call_operand.vmem [shape: f32[2,1,32], index: 8, kind: input, shape index: {}]
  %s9 = inlined_call_operand.vmem [shape: bf16[2,32,128], index: 9, kind: input, shape index: {}]
  %s10 = inlined_call_operand.vmem [shape: f32[2,1,128], index: 10, kind: input, shape index: {}]
  %s11 = inlined_call_operand.vmem [shape: bf16[2,128,32], index: 11, kind: input, shape index: {}]
  %s12 = inlined_call_operand.vmem [shape: f32[2,1,32], index: 12, kind: input, shape index: {}]
  %s13 = inlined_call_operand.vmem [shape: f32[3,8,32], index: 13, kind: output, shape index: {}]
  %s14 = sld [smem:[#allocation0]]
  $region89: #{forward.5} parent=0
    _
  %s16 = ssub.s32 1, %s14
  %s17 = scalar_select 0, %s16, %s14
  loop: start=0, step=1, limit=8
  $region2: #{forward.5} parent=0 // loop_pre_header
    _
  $region3: #{forward.5} parent=0 // loop_header
    %s19 = sphi 0, %s23
    %p20 = scmp.ge.s32.totalorder %s19, 8
    %s26 = sphi 0, %s38
    %s27 = sphi 0, %s34
    %s28 = sphi 0, %s26
    %s29 = sphi 0, %s27
    %s30 = sphi 0, %s28
    %s31 = sphi 0, %s29
    %s41 = sphi 0, %s43
    %s44 = sphi 0, %s41
    %s45 = sphi 0, %s44
    %s61 = sphi 0, %s45
    %s67 = sphi 0, %s69
    %s70 = sphi 0, %s67
    %s71 = sphi 0, %s70
    %s87 = sphi 0, %s71
    %s93 = sphi 0, %s95
    %s96 = sphi 0, %s93
    %s97 = sphi 0, %s96
    %s113 = sphi 0, %s97
    %s119 = sphi 0, %s121
    %s122 = sphi 0, %s119
    %s123 = sphi 0, %s122
    %s139 = sphi 0, %s123
    %s145 = sphi 0, %s147
    %s148 = sphi 0, %s145
    %s149 = sphi 0, %s148
    %s165 = sphi 0, %s149
    %s171 = sphi 0, %s173
    %s174 = sphi 0, %s171
    %s175 = sphi 0, %s174
    %s191 = sphi 0, %s175
    %s197 = sphi 0, %s199
    %s200 = sphi 0, %s197
    %s201 = sphi 0, %s200
    %s217 = sphi 0, %s201
    %s223 = sphi 0, %s225
    %s226 = sphi 0, %s223
    %s227 = sphi 0, %s226
    %s243 = sphi 0, %s227
    %s249 = sphi 0, %s251
    %s252 = sphi 0, %s249
    %s253 = sphi 0, %s252
    %s269 = sphi 0, %s253
    %s275 = sphi 0, %s277
    %s278 = sphi 0, %s275
    %s279 = sphi 0, %s278
    %s295 = sphi 0, %s279
    %s301 = sphi 0, %s303
    %s304 = sphi 0, %s301
    %s305 = sphi 0, %s304
    %s321 = sphi 0, %s305
    %s327 = sphi 0, %s329
    %s330 = sphi 0, %s327
    %s331 = sphi 0, %s330
    %s347 = sphi 0, %s331
    %s353 = sphi 0, %s355
    %s356 = sphi 0, %s353
    %s357 = sphi 0, %s356
    %s373 = sphi 0, %s357
    %s379 = sphi 0, %s381
    %s382 = sphi 0, %s379
    %s383 = sphi 0, %s382
    %s399 = sphi 0, %s383
  $region4: #{forward.5} parent=0 // loop_header_branch
    %22 = sbr.rel (%p20) target = $region8
  $region5: #{forward.5} parent=0 // loop_body
    %s24 = ssub.s32 %s19, 1
    %s25 = ssub.s32 %s19, 2
    %s32 = sadd.s32 1, %s27
    %p33 = scmp.ge.s32.totalorder %s32, 2
    %s34 = scalar_select %p33, 0, %s32
    %s35 = sadd.s32 1, %s26
    %s36 = scalar_select %p33, %s35, %s26
    %p37 = scmp.ge.s32.totalorder %s36, 3
    %s38 = scalar_select %p37, 0, %s36
    %s39 = ssub.s32 %s26, %s38
    %p40 = scmp.eq.s32.totalorder %s39, 0
    %s42 = sadd.s32 %s41, 1
    %s43 = scalar_select %p40, %s41, %s42
    %p46 = pneg %p40
    %p47 = scmp.eq.s32.totalorder %s19, 5
    %p48 = por %p46, %p47
    %p49 = scmp.ne.s32.totalorder %s41, %s44
    %p50 = scmp.eq.s32.totalorder %s19, 0
    %p51 = por %p49, %p50
    %p52 = scmp.ne.s32.totalorder %s41, %s44
    %p53 = scmp.eq.s32.totalorder %s24, 5
    %p54 = por %p52, %p53
    %p55 = scmp.ne.s32.totalorder %s44, %s45
    %p56 = scmp.eq.s32.totalorder %s24, 0
    %p57 = por %p55, %p56
    %p58 = scmp.ne.s32.totalorder %s44, %s45
    %p59 = scmp.eq.s32.totalorder %s25, 5
    %p60 = por %p58, %p59
    %p62 = scmp.ne.s32.totalorder %s45, %s61
    %p63 = scmp.eq.s32.totalorder %s25, 0
    %p64 = por %p62, %p63
    %s65 = ssub.s32 %s27, %s34
    %p66 = scmp.eq.s32.totalorder %s65, 0
    %s68 = sadd.s32 %s67, 1
    %s69 = scalar_select %p66, %s67, %s68
    %p72 = pneg %p66
    %p73 = scmp.eq.s32.totalorder %s19, 5
    %p74 = por %p72, %p73
    %p75 = scmp.ne.s32.totalorder %s67, %s70
    %p76 = scmp.eq.s32.totalorder %s19, 0
    %p77 = por %p75, %p76
    %p78 = scmp.ne.s32.totalorder %s67, %s70
    %p79 = scmp.eq.s32.totalorder %s24, 5
    %p80 = por %p78, %p79
    %p81 = scmp.ne.s32.totalorder %s70, %s71
    %p82 = scmp.eq.s32.totalorder %s24, 0
    %p83 = por %p81, %p82
    %p84 = scmp.ne.s32.totalorder %s70, %s71
    %p85 = scmp.eq.s32.totalorder %s25, 5
    %p86 = por %p84, %p85
    %p88 = scmp.ne.s32.totalorder %s71, %s87
    %p89 = scmp.eq.s32.totalorder %s25, 0
    %p90 = por %p88, %p89
    %s91 = ssub.s32 %s27, %s34
    %p92 = scmp.eq.s32.totalorder %s91, 0
    %s94 = sadd.s32 %s93, 1
    %s95 = scalar_select %p92, %s93, %s94
    %p98 = pneg %p92
    %p99 = scmp.eq.s32.totalorder %s19, 5
    %p100 = por %p98, %p99
    %p101 = scmp.ne.s32.totalorder %s93, %s96
    %p102 = scmp.eq.s32.totalorder %s19, 0
    %p103 = por %p101, %p102
    %p104 = scmp.ne.s32.totalorder %s93, %s96
    %p105 = scmp.eq.s32.totalorder %s24, 5
    %p106 = por %p104, %p105
    %p107 = scmp.ne.s32.totalorder %s96, %s97
    %p108 = scmp.eq.s32.totalorder %s24, 0
    %p109 = por %p107, %p108
    %p110 = scmp.ne.s32.totalorder %s96, %s97
    %p111 = scmp.eq.s32.totalorder %s25, 5
    %p112 = por %p110, %p111
    %p114 = scmp.ne.s32.totalorder %s97, %s113
    %p115 = scmp.eq.s32.totalorder %s25, 0
    %p116 = por %p114, %p115
    %s117 = ssub.s32 %s27, %s34
    %p118 = scmp.eq.s32.totalorder %s117, 0
    %s120 = sadd.s32 %s119, 1
    %s121 = scalar_select %p118, %s119, %s120
    %p124 = pneg %p118
    %p125 = scmp.eq.s32.totalorder %s19, 5
    %p126 = por %p124, %p125
    %p127 = scmp.ne.s32.totalorder %s119, %s122
    %p128 = scmp.eq.s32.totalorder %s19, 0
    %p129 = por %p127, %p128
    %p130 = scmp.ne.s32.totalorder %s119, %s122
    %p131 = scmp.eq.s32.totalorder %s24, 5
    %p132 = por %p130, %p131
    %p133 = scmp.ne.s32.totalorder %s122, %s123
    %p134 = scmp.eq.s32.totalorder %s24, 0
    %p135 = por %p133, %p134
    %p136 = scmp.ne.s32.totalorder %s122, %s123
    %p137 = scmp.eq.s32.totalorder %s25, 5
    %p138 = por %p136, %p137
    %p140 = scmp.ne.s32.totalorder %s123, %s139
    %p141 = scmp.eq.s32.totalorder %s25, 0
    %p142 = por %p140, %p141
    %s143 = ssub.s32 %s27, %s34
    %p144 = scmp.eq.s32.totalorder %s143, 0
    %s146 = sadd.s32 %s145, 1
    %s147 = scalar_select %p144, %s145, %s146
    %p150 = pneg %p144
    %p151 = scmp.eq.s32.totalorder %s19, 5
    %p152 = por %p150, %p151
    %p153 = scmp.ne.s32.totalorder %s145, %s148
    %p154 = scmp.eq.s32.totalorder %s19, 0
    %p155 = por %p153, %p154
    %p156 = scmp.ne.s32.totalorder %s145, %s148
    %p157 = scmp.eq.s32.totalorder %s24, 5
    %p158 = por %p156, %p157
    %p159 = scmp.ne.s32.totalorder %s148, %s149
    %p160 = scmp.eq.s32.totalorder %s24, 0
    %p161 = por %p159, %p160
    %p162 = scmp.ne.s32.totalorder %s148, %s149
    %p163 = scmp.eq.s32.totalorder %s25, 5
    %p164 = por %p162, %p163
    %p166 = scmp.ne.s32.totalorder %s149, %s165
    %p167 = scmp.eq.s32.totalorder %s25, 0
    %p168 = por %p166, %p167
    %s169 = ssub.s32 %s27, %s34
    %p170 = scmp.eq.s32.totalorder %s169, 0
    %s172 = sadd.s32 %s171, 1
    %s173 = scalar_select %p170, %s171, %s172
    %p176 = pneg %p170
    %p177 = scmp.eq.s32.totalorder %s19, 5
    %p178 = por %p176, %p177
    %p179 = scmp.ne.s32.totalorder %s171, %s174
    %p180 = scmp.eq.s32.totalorder %s19, 0
    %p181 = por %p179, %p180
    %p182 = scmp.ne.s32.totalorder %s171, %s174
    %p183 = scmp.eq.s32.totalorder %s24, 5
    %p184 = por %p182, %p183
    %p185 = scmp.ne.s32.totalorder %s174, %s175
    %p186 = scmp.eq.s32.totalorder %s24, 0
    %p187 = por %p185, %p186
    %p188 = scmp.ne.s32.totalorder %s174, %s175
    %p189 = scmp.eq.s32.totalorder %s25, 5
    %p190 = por %p188, %p189
    %p192 = scmp.ne.s32.totalorder %s175, %s191
    %p193 = scmp.eq.s32.totalorder %s25, 0
    %p194 = por %p192, %p193
    %s195 = ssub.s32 %s27, %s34
    %p196 = scmp.eq.s32.totalorder %s195, 0
    %s198 = sadd.s32 %s197, 1
    %s199 = scalar_select %p196, %s197, %s198
    %p202 = pneg %p196
    %p203 = scmp.eq.s32.totalorder %s19, 5
    %p204 = por %p202, %p203
    %p205 = scmp.ne.s32.totalorder %s197, %s200
    %p206 = scmp.eq.s32.totalorder %s19, 0
    %p207 = por %p205, %p206
    %p208 = scmp.ne.s32.totalorder %s197, %s200
    %p209 = scmp.eq.s32.totalorder %s24, 5
    %p210 = por %p208, %p209
    %p211 = scmp.ne.s32.totalorder %s200, %s201
    %p212 = scmp.eq.s32.totalorder %s24, 0
    %p213 = por %p211, %p212
    %p214 = scmp.ne.s32.totalorder %s200, %s201
    %p215 = scmp.eq.s32.totalorder %s25, 5
    %p216 = por %p214, %p215
    %p218 = scmp.ne.s32.totalorder %s201, %s217
    %p219 = scmp.eq.s32.totalorder %s25, 0
    %p220 = por %p218, %p219
    %s221 = ssub.s32 %s27, %s34
    %p222 = scmp.eq.s32.totalorder %s221, 0
    %s224 = sadd.s32 %s223, 1
    %s225 = scalar_select %p222, %s223, %s224
    %p228 = pneg %p222
    %p229 = scmp.eq.s32.totalorder %s19, 5
    %p230 = por %p228, %p229
    %p231 = scmp.ne.s32.totalorder %s223, %s226
    %p232 = scmp.eq.s32.totalorder %s19, 0
    %p233 = por %p231, %p232
    %p234 = scmp.ne.s32.totalorder %s223, %s226
    %p235 = scmp.eq.s32.totalorder %s24, 5
    %p236 = por %p234, %p235
    %p237 = scmp.ne.s32.totalorder %s226, %s227
    %p238 = scmp.eq.s32.totalorder %s24, 0
    %p239 = por %p237, %p238
    %p240 = scmp.ne.s32.totalorder %s226, %s227
    %p241 = scmp.eq.s32.totalorder %s25, 5
    %p242 = por %p240, %p241
    %p244 = scmp.ne.s32.totalorder %s227, %s243
    %p245 = scmp.eq.s32.totalorder %s25, 0
    %p246 = por %p244, %p245
    %s247 = ssub.s32 %s27, %s34
    %p248 = scmp.eq.s32.totalorder %s247, 0
    %s250 = sadd.s32 %s249, 1
    %s251 = scalar_select %p248, %s249, %s250
    %p254 = pneg %p248
    %p255 = scmp.eq.s32.totalorder %s19, 5
    %p256 = por %p254, %p255
    %p257 = scmp.ne.s32.totalorder %s249, %s252
    %p258 = scmp.eq.s32.totalorder %s19, 0
    %p259 = por %p257, %p258
    %p260 = scmp.ne.s32.totalorder %s249, %s252
    %p261 = scmp.eq.s32.totalorder %s24, 5
    %p262 = por %p260, %p261
    %p263 = scmp.ne.s32.totalorder %s252, %s253
    %p264 = scmp.eq.s32.totalorder %s24, 0
    %p265 = por %p263, %p264
    %p266 = scmp.ne.s32.totalorder %s252, %s253
    %p267 = scmp.eq.s32.totalorder %s25, 5
    %p268 = por %p266, %p267
    %p270 = scmp.ne.s32.totalorder %s253, %s269
    %p271 = scmp.eq.s32.totalorder %s25, 0
    %p272 = por %p270, %p271
    %s273 = ssub.s32 %s27, %s34
    %p274 = scmp.eq.s32.totalorder %s273, 0
    %s276 = sadd.s32 %s275, 1
    %s277 = scalar_select %p274, %s275, %s276
    %p280 = pneg %p274
    %p281 = scmp.eq.s32.totalorder %s19, 5
    %p282 = por %p280, %p281
    %p283 = scmp.ne.s32.totalorder %s275, %s278
    %p284 = scmp.eq.s32.totalorder %s19, 0
    %p285 = por %p283, %p284
    %p286 = scmp.ne.s32.totalorder %s275, %s278
    %p287 = scmp.eq.s32.totalorder %s24, 5
    %p288 = por %p286, %p287
    %p289 = scmp.ne.s32.totalorder %s278, %s279
    %p290 = scmp.eq.s32.totalorder %s24, 0
    %p291 = por %p289, %p290
    %p292 = scmp.ne.s32.totalorder %s278, %s279
    %p293 = scmp.eq.s32.totalorder %s25, 5
    %p294 = por %p292, %p293
    %p296 = scmp.ne.s32.totalorder %s279, %s295
    %p297 = scmp.eq.s32.totalorder %s25, 0
    %p298 = por %p296, %p297
    %s299 = ssub.s32 %s27, %s34
    %p300 = scmp.eq.s32.totalorder %s299, 0
    %s302 = sadd.s32 %s301, 1
    %s303 = scalar_select %p300, %s301, %s302
    %p306 = pneg %p300
    %p307 = scmp.eq.s32.totalorder %s19, 5
    %p308 = por %p306, %p307
    %p309 = scmp.ne.s32.totalorder %s301, %s304
    %p310 = scmp.eq.s32.totalorder %s19, 0
    %p311 = por %p309, %p310
    %p312 = scmp.ne.s32.totalorder %s301, %s304
    %p313 = scmp.eq.s32.totalorder %s24, 5
    %p314 = por %p312, %p313
    %p315 = scmp.ne.s32.totalorder %s304, %s305
    %p316 = scmp.eq.s32.totalorder %s24, 0
    %p317 = por %p315, %p316
    %p318 = scmp.ne.s32.totalorder %s304, %s305
    %p319 = scmp.eq.s32.totalorder %s25, 5
    %p320 = por %p318, %p319
    %p322 = scmp.ne.s32.totalorder %s305, %s321
    %p323 = scmp.eq.s32.totalorder %s25, 0
    %p324 = por %p322, %p323
    %s325 = ssub.s32 %s27, %s34
    %p326 = scmp.eq.s32.totalorder %s325, 0
    %s328 = sadd.s32 %s327, 1
    %s329 = scalar_select %p326, %s327, %s328
    %p332 = pneg %p326
    %p333 = scmp.eq.s32.totalorder %s19, 5
    %p334 = por %p332, %p333
    %p335 = scmp.ne.s32.totalorder %s327, %s330
    %p336 = scmp.eq.s32.totalorder %s19, 0
    %p337 = por %p335, %p336
    %p338 = scmp.ne.s32.totalorder %s327, %s330
    %p339 = scmp.eq.s32.totalorder %s24, 5
    %p340 = por %p338, %p339
    %p341 = scmp.ne.s32.totalorder %s330, %s331
    %p342 = scmp.eq.s32.totalorder %s24, 0
    %p343 = por %p341, %p342
    %p344 = scmp.ne.s32.totalorder %s330, %s331
    %p345 = scmp.eq.s32.totalorder %s25, 5
    %p346 = por %p344, %p345
    %p348 = scmp.ne.s32.totalorder %s331, %s347
    %p349 = scmp.eq.s32.totalorder %s25, 0
    %p350 = por %p348, %p349
    %s351 = ssub.s32 %s27, %s34
    %p352 = scmp.eq.s32.totalorder %s351, 0
    %s354 = sadd.s32 %s353, 1
    %s355 = scalar_select %p352, %s353, %s354
    %p358 = pneg %p352
    %p359 = scmp.eq.s32.totalorder %s19, 5
    %p360 = por %p358, %p359
    %p361 = scmp.ne.s32.totalorder %s353, %s356
    %p362 = scmp.eq.s32.totalorder %s19, 0
    %p363 = por %p361, %p362
    %p364 = scmp.ne.s32.totalorder %s353, %s356
    %p365 = scmp.eq.s32.totalorder %s24, 5
    %p366 = por %p364, %p365
    %p367 = scmp.ne.s32.totalorder %s356, %s357
    %p368 = scmp.eq.s32.totalorder %s24, 0
    %p369 = por %p367, %p368
    %p370 = scmp.ne.s32.totalorder %s356, %s357
    %p371 = scmp.eq.s32.totalorder %s25, 5
    %p372 = por %p370, %p371
    %p374 = scmp.ne.s32.totalorder %s357, %s373
    %p375 = scmp.eq.s32.totalorder %s25, 0
    %p376 = por %p374, %p375
    %s377 = ssub.s32 %s26, %s38
    %p378 = scmp.eq.s32.totalorder %s377, 0
    %s380 = sadd.s32 %s379, 1
    %s381 = scalar_select %p378, %s379, %s380
    %p384 = pneg %p378
    %p385 = scmp.eq.s32.totalorder %s19, 5
    %p386 = por %p384, %p385
    %p387 = scmp.ne.s32.totalorder %s379, %s382
    %p388 = scmp.eq.s32.totalorder %s19, 0
    %p389 = por %p387, %p388
    %p390 = scmp.ne.s32.totalorder %s379, %s382
    %p391 = scmp.eq.s32.totalorder %s24, 5
    %p392 = por %p390, %p391
    %p393 = scmp.ne.s32.totalorder %s382, %s383
    %p394 = scmp.eq.s32.totalorder %s24, 0
    %p395 = por %p393, %p394
    %p396 = scmp.ne.s32.totalorder %s382, %s383
    %p397 = scmp.eq.s32.totalorder %s25, 5
    %p398 = por %p396, %p397
    %p400 = scmp.ne.s32.totalorder %s383, %s399
    %p401 = scmp.eq.s32.totalorder %s25, 0
    %p402 = por %p400, %p401
    %p403 = scmp.le.s32.totalorder 1, %s19
    %p404 = scmp.lt.s32.totalorder %s19, 7
    %p405 = pnand %p403, %p404
    %p406 = pneg %p405
    // Predicated region
    $region9: #{forward.5} parent=5 // pred_check
      _
    $region10: #{forward.5} parent=5 // pred_check_branch
      %408 = sbr.rel (%p405) target = $region12
    $region11: #{forward.5} parent=5 // pred_region
      %s409 = ssub.s32 %s19, 1
    $region12: #{forward.5} parent=5 // pred_fallthru
      _
    %p410 = scmp.lt.s32.totalorder %s19, 6
    // Predicated region
    $region13: #{forward.5} parent=5 // pred_check
      %p411 = pneg %p410
    $region14: #{forward.5} parent=5 // pred_check_branch
      %413 = sbr.rel (%p411) target = $region16
    $region15: #{forward.5} parent=5 // pred_region
      // Predicated region
      $region17: #{forward.5} parent=15 // pred_check
        %p414 = pneg %p51
      $region18: #{forward.5} parent=15 // pred_check_branch
        %416 = sbr.rel (%p414) target = $region20
      $region19: #{forward.5} parent=15 // pred_region
        %p417 = scmp.lt.s32.totalorder %s26, 2
        %s418 = scalar_select %p417, %s26, 2
        %s419 = smul.addr %s418, 8
        %s420 = scalar_lea.vmem %s0, %s419
      $region20: #{forward.5} parent=15 // pred_fallthru
        _
      // Predicated region
      $region21: #{forward.5} parent=15 // pred_check
        %p421 = pneg %p77
      $region22: #{forward.5} parent=15 // pred_check_branch
        %423 = sbr.rel (%p421) target = $region24
      $region23: #{forward.5} parent=15 // pred_region
        %p424 = scmp.lt.s32.totalorder %s27, 1
        %s425 = scalar_select %p424, %s27, 1
        %s426 = scalar_lea.vmem %s1, %s425
      $region24: #{forward.5} parent=15 // pred_fallthru
        _
      // Predicated region
      $region25: #{forward.5} parent=15 // pred_check
        %p427 = pneg %p103
      $region26: #{forward.5} parent=15 // pred_check_branch
        %429 = sbr.rel (%p427) target = $region28
      $region27: #{forward.5} parent=15 // pred_region
        %p430 = scmp.lt.s32.totalorder %s27, 1
        %s431 = scalar_select %p430, %s27, 1
        %s432 = scalar_lea.vmem %s2, %s431
      $region28: #{forward.5} parent=15 // pred_fallthru
        _
      // Predicated region
      $region29: #{forward.5} parent=15 // pred_check
        %p433 = pneg %p129
      $region30: #{forward.5} parent=15 // pred_check_branch
        %435 = sbr.rel (%p433) target = $region32
      $region31: #{forward.5} parent=15 // pred_region
        %p436 = scmp.lt.s32.totalorder %s27, 1
        %s437 = scalar_select %p436, %s27, 1
        %s438 = smul.addr %s437, 4
        %s439 = smul.addr %s438, 4
        %s440 = scalar_lea.vmem %s3, %s439
      $region32: #{forward.5} parent=15 // pred_fallthru
        _
      // Predicated region
      $region33: #{forward.5} parent=15 // pred_check
        %p441 = pneg %p155
      $region34: #{forward.5} parent=15 // pred_check_branch
        %443 = sbr.rel (%p441) target = $region36
      $region35: #{forward.5} parent=15 // pred_region
        %p444 = scmp.lt.s32.totalorder %s27, 1
        %s445 = scalar_select %p444, %s27, 1
        %s446 = scalar_lea.vmem %s4, %s445
      $region36: #{forward.5} parent=15 // pred_fallthru
        _
      // Predicated region
      $region37: #{forward.5} parent=15 // pred_check
        %p447 = pneg %p181
      $region38: #{forward.5} parent=15 // pred_check_branch
        %449 = sbr.rel (%p447) target = $region40
      $region39: #{forward.5} parent=15 // pred_region
        %p450 = scmp.lt.s32.totalorder %s27, 1
        %s451 = scalar_select %p450, %s27, 1
        %s452 = smul.addr %s451, 4
        %s453 = smul.addr %s452, 4
        %s454 = scalar_lea.vmem %s5, %s453
      $region40: #{forward.5} parent=15 // pred_fallthru
        _
      // Predicated region
      $region41: #{forward.5} parent=15 // pred_check
        %p455 = pneg %p207
      $region42: #{forward.5} parent=15 // pred_check_branch
        %457 = sbr.rel (%p455) target = $region44
      $region43: #{forward.5} parent=15 // pred_region
        %p458 = scmp.lt.s32.totalorder %s27, 1
        %s459 = scalar_select %p458, %s27, 1
        %s460 = scalar_lea.vmem %s6, %s459
      $region44: #{forward.5} parent=15 // pred_fallthru
        _
      // Predicated region
      $region45: #{forward.5} parent=15 // pred_check
        %p461 = pneg %p233
      $region46: #{forward.5} parent=15 // pred_check_branch
        %463 = sbr.rel (%p461) target = $region48
      $region47: #{forward.5} parent=15 // pred_region
        %p464 = scmp.lt.s32.totalorder %s27, 1
        %s465 = scalar_select %p464, %s27, 1
        %s466 = scalar_lea.vmem %s7, %s465
      $region48: #{forward.5} parent=15 // pred_fallthru
        _
      // Predicated region
      $region49: #{forward.5} parent=15 // pred_check
        %p467 = pneg %p259
      $region50: #{forward.5} parent=15 // pred_check_branch
        %469 = sbr.rel (%p467) target = $region52
      $region51: #{forward.5} parent=15 // pred_region
        %p470 = scmp.lt.s32.totalorder %s27, 1
        %s471 = scalar_select %p470, %s27, 1
        %s472 = scalar_lea.vmem %s8, %s471
      $region52: #{forward.5} parent=15 // pred_fallthru
        _
      // Predicated region
      $region53: #{forward.5} parent=15 // pred_check
        %p473 = pneg %p285
      $region54: #{forward.5} parent=15 // pred_check_branch
        %475 = sbr.rel (%p473) target = $region56
      $region55: #{forward.5} parent=15 // pred_region
        %p476 = scmp.lt.s32.totalorder %s27, 1
        %s477 = scalar_select %p476, %s27, 1
        %s478 = smul.addr %s477, 4
        %s479 = smul.addr %s478, 4
        %s480 = scalar_lea.vmem %s9, %s479
      $region56: #{forward.5} parent=15 // pred_fallthru
        _
      // Predicated region
      $region57: #{forward.5} parent=15 // pred_check
        %p481 = pneg %p311
      $region58: #{forward.5} parent=15 // pred_check_branch
        %483 = sbr.rel (%p481) target = $region60
      $region59: #{forward.5} parent=15 // pred_region
        %p484 = scmp.lt.s32.totalorder %s27, 1
        %s485 = scalar_select %p484, %s27, 1
        %s486 = scalar_lea.vmem %s10, %s485
      $region60: #{forward.5} parent=15 // pred_fallthru
        _
      // Predicated region
      $region61: #{forward.5} parent=15 // pred_check
        %p487 = pneg %p337
      $region62: #{forward.5} parent=15 // pred_check_branch
        %489 = sbr.rel (%p487) target = $region64
      $region63: #{forward.5} parent=15 // pred_region
        %p490 = scmp.lt.s32.totalorder %s27, 1
        %s491 = scalar_select %p490, %s27, 1
        %s492 = smul.addr %s491, 16
        %s493 = smul.addr %s492, 4
        %s494 = scalar_lea.vmem %s11, %s493
      $region64: #{forward.5} parent=15 // pred_fallthru
        _
      // Predicated region
      $region65: #{forward.5} parent=15 // pred_check
        %p495 = pneg %p363
      $region66: #{forward.5} parent=15 // pred_check_branch
        %497 = sbr.rel (%p495) target = $region68
      $region67: #{forward.5} parent=15 // pred_region
        %p498 = scmp.lt.s32.totalorder %s27, 1
        %s499 = scalar_select %p498, %s27, 1
        %s500 = scalar_lea.vmem %s12, %s499
      $region68: #{forward.5} parent=15 // pred_fallthru
        _
    $region16: #{forward.5} parent=5 // pred_fallthru
      _
    %p501 = scmp.le.s32.totalorder 1, %s19
    %p502 = scmp.lt.s32.totalorder %s19, 7
    %p503 = pnand %p501, %p502
    %p504 = pneg %p503
    // Predicated region
    $region69: #{forward.5} parent=5 // pred_check
      _
    $region70: #{forward.5} parent=5 // pred_check_branch
      %506 = sbr.rel (%p503) target = $region72
    $region71: #{forward.5} parent=5 // pred_region
      %s507 = ssub.s32 %s19, 1
      %p508 = scmp.lt.s32.totalorder %s28, 2
      %s509 = scalar_select %p508, %s28, 2
      %s510 = smul.addr %s509, 8
      %s511 = scalar_lea.vmem %s0, %s510
      %p512 = pneg %p57
      %p513 = pneg %p54
      %p514 = scmp.lt.s32.totalorder %s29, 1
      %s515 = scalar_select %p514, %s29, 1
      %s516 = scalar_lea.vmem %s1, %s515
      %p517 = pneg %p83
      %p518 = pneg %p80
      %p519 = scmp.lt.s32.totalorder %s29, 1
      %s520 = scalar_select %p519, %s29, 1
      %s521 = scalar_lea.vmem %s2, %s520
      %p522 = pneg %p109
      %p523 = pneg %p106
      %p524 = scmp.lt.s32.totalorder %s29, 1
      %s525 = scalar_select %p524, %s29, 1
      %s526 = smul.addr %s525, 4
      %s527 = smul.addr %s526, 4
      %s528 = scalar_lea.vmem %s3, %s527
      %p529 = pneg %p135
      %p530 = pneg %p132
      %p531 = scmp.lt.s32.totalorder %s29, 1
      %s532 = scalar_select %p531, %s29, 1
      %s533 = scalar_lea.vmem %s4, %s532
      %p534 = pneg %p161
      %p535 = pneg %p158
      %p536 = scmp.lt.s32.totalorder %s29, 1
      %s537 = scalar_select %p536, %s29, 1
      %s538 = smul.addr %s537, 4
      %s539 = smul.addr %s538, 4
      %s540 = scalar_lea.vmem %s5, %s539
      %p541 = pneg %p187
      %p542 = pneg %p184
      %p543 = scmp.lt.s32.totalorder %s29, 1
      %s544 = scalar_select %p543, %s29, 1
      %s545 = scalar_lea.vmem %s6, %s544
      %p546 = pneg %p213
      %p547 = pneg %p210
      %p548 = scmp.lt.s32.totalorder %s29, 1
      %s549 = scalar_select %p548, %s29, 1
      %s550 = scalar_lea.vmem %s7, %s549
      %p551 = pneg %p239
      %p552 = pneg %p236
      %p553 = scmp.lt.s32.totalorder %s29, 1
      %s554 = scalar_select %p553, %s29, 1
      %s555 = scalar_lea.vmem %s8, %s554
      %p556 = pneg %p265
      %p557 = pneg %p262
      %p558 = scmp.lt.s32.totalorder %s29, 1
      %s559 = scalar_select %p558, %s29, 1
      %s560 = smul.addr %s559, 4
      %s561 = smul.addr %s560, 4
      %s562 = scalar_lea.vmem %s9, %s561
      %p563 = pneg %p291
      %p564 = pneg %p288
      %p565 = scmp.lt.s32.totalorder %s29, 1
      %s566 = scalar_select %p565, %s29, 1
      %s567 = scalar_lea.vmem %s10, %s566
      %p568 = pneg %p317
      %p569 = pneg %p314
      %p570 = scmp.lt.s32.totalorder %s29, 1
      %s571 = scalar_select %p570, %s29, 1
      %s572 = smul.addr %s571, 16
      %s573 = smul.addr %s572, 4
      %s574 = scalar_lea.vmem %s11, %s573
      %p575 = pneg %p343
      %p576 = pneg %p340
      %p577 = scmp.lt.s32.totalorder %s29, 1
      %s578 = scalar_select %p577, %s29, 1
      %s579 = scalar_lea.vmem %s12, %s578
      %p580 = pneg %p369
      %p581 = pneg %p366
      %p582 = pneg %p395
      %p583 = pneg %p392
      %p584 = scmp.lt.s32.totalorder %s28, 2
      %s585 = scalar_select %p584, %s28, 2
      %s586 = smul.addr %s585, 8
      %s587 = scalar_lea.vmem %s13, %s586
      %p588 = scmp.lt.s32.totalorder %s28, 2
      %s589 = scalar_select %p588, %s28, 2
      %s590 = smul.addr %s589, 8
      %s591 = scalar_lea.vmem %s0, %s590
      %p592 = scmp.lt.s32.totalorder %s29, 1
      %s593 = scalar_select %p592, %s29, 1
      %s594 = scalar_lea.vmem %s1, %s593
      %p595 = scmp.lt.s32.totalorder %s29, 1
      %s596 = scalar_select %p595, %s29, 1
      %s597 = scalar_lea.vmem %s2, %s596
      %p598 = scmp.lt.s32.totalorder %s29, 1
      %s599 = scalar_select %p598, %s29, 1
      %s600 = smul.addr %s599, 4
      %s601 = smul.addr %s600, 4
      %s602 = scalar_lea.vmem %s3, %s601
      %p603 = scmp.lt.s32.totalorder %s29, 1
      %s604 = scalar_select %p603, %s29, 1
      %s605 = scalar_lea.vmem %s4, %s604
      %p606 = scmp.lt.s32.totalorder %s29, 1
      %s607 = scalar_select %p606, %s29, 1
      %s608 = smul.addr %s607, 4
      %s609 = smul.addr %s608, 4
      %s610 = scalar_lea.vmem %s5, %s609
      %p611 = scmp.lt.s32.totalorder %s29, 1
      %s612 = scalar_select %p611, %s29, 1
      %s613 = scalar_lea.vmem %s6, %s612
      %p614 = scmp.lt.s32.totalorder %s29, 1
      %s615 = scalar_select %p614, %s29, 1
      %s616 = scalar_lea.vmem %s7, %s615
      %p617 = scmp.lt.s32.totalorder %s29, 1
      %s618 = scalar_select %p617, %s29, 1
      %s619 = scalar_lea.vmem %s8, %s618
      %p620 = scmp.lt.s32.totalorder %s29, 1
      %s621 = scalar_select %p620, %s29, 1
      %s622 = smul.addr %s621, 4
      %s623 = smul.addr %s622, 4
      %s624 = scalar_lea.vmem %s9, %s623
      %p625 = scmp.lt.s32.totalorder %s29, 1
      %s626 = scalar_select %p625, %s29, 1
      %s627 = scalar_lea.vmem %s10, %s626
      %p628 = scmp.lt.s32.totalorder %s29, 1
      %s629 = scalar_select %p628, %s29, 1
      %s630 = smul.addr %s629, 16
      %s631 = smul.addr %s630, 4
      %s632 = scalar_lea.vmem %s11, %s631
      %p633 = scmp.lt.s32.totalorder %s29, 1
      %s634 = scalar_select %p633, %s29, 1
      %s635 = scalar_lea.vmem %s12, %s634
      %p636 = scmp.lt.s32.totalorder %s28, 2
      %s637 = scalar_select %p636, %s28, 2
      %s638 = smul.addr %s637, 8
      %s639 = scalar_lea.vmem %s13, %s638
      %p641 = scmp.eq.s32.totalorder %s29, 0
      // Predicated region
      $region73: #{forward.5} parent=71 // pred_check
        %p642 = pneg %p641
      $region74: #{forward.5} parent=71 // pred_check_branch
        %644 = sbr.rel (%p642) target = $region76
      $region75: #{forward.5} parent=71 // pred_region
        %v645 = vld [vmem:[%s591] sm:$0xff]
        %vm646 = vcmask 261120
        %647 = vst.msk [vmem:[%s639] sm:$0xff] %vm646, %v645
      $region76: #{forward.5} parent=71 // pred_fallthru
        _
      %v648 = vld [vmem:[%s639] sm:$0xff]
      %v649 = vld [vmem:[%s594] sm:$0x1]
      %v650 = vld [vmem:[%s597] sm:$0x1]
      %vm651 = vcmask 261120
      %v652 = vsel %vm651, %v648, 0.0
      %653 = vadd.xlane.f32.xlu0 %v652
      %v654 = vpop.xlane.xlu0 %653
      %v655 = vrcp.pop 32.0
      %v656 = vmul.f32 32.0, %v655
      %v657 = vsub.f32 1.0, %v656
      %v658 = vmul.f32 %v655, %v657
      %v659 = vadd.f32 %v655, %v658
      %vm660 = vweird.f32 %v655
      %v661 = vsel %vm660, %v655, %v659
      %v662 = vmul.f32 %v654, %v661
      %v663 = vsub.f32 %v648, %v662
      %v664 = vmul.f32 %v663, %v663
      %v665 = vsel %vm651, %v664, 0.0
      %666 = vadd.xlane.f32.xlu0 %v665
      %v667 = vpop.xlane.xlu0 %666
      %v668 = vmul.f32 %v667, %v661
      %v669 = vadd.f32 %v668, 1e-05
      %v670 = vrsqrt.pop %v669
      %v671 = vmul.f32 %v670, %v669
      %v672 = vmul.f32 %v671, %v670
      %v673 = vmul.f32 0.5, %v672
      %v674 = vsub.f32 1.5, %v673
      %v675 = vmul.f32 %v670, %v674
      %vm676 = vweird.f32 %v669
      %vm677 = vweird.f32 %v670
      %vm678 = vmor %vm676, %vm677
      %v679 = vsel %vm678, %v670, %v675
      %v680 = vmul.f32 %v663, %v679
      %v682 = vperm.slane %v649, 0
      %v684 = vmul.f32 %v680, %v682
      %v686 = vperm.slane %v650, 0
      %v688 = vadd.f32 %v684, %v686
      %v689 = vld [vmem:[%s602] sm:$0xf]
      %v690 = vld [vmem:[%s602 + $0x4] sm:$0xf]
      %v691 = vld [vmem:[%s602 + $0x8] sm:$0xf]
      %v692 = vld [vmem:[%s602 + $0xc] sm:$0xf]
      %v693 = vld [vmem:[%s605] sm:$0x1]
      %v694 = vpack.c.bf16 %v688, %v688
      %v696 = vperm.slane %v693, 0
      %v702 = vunpack.c.l.b16 %v689
      %v703 = vunpack.c.l.b16 %v690
      %v704 = vunpack.c.l.b16 %v691
      %v705 = vunpack.c.l.b16 %v692
      %v706 = vpack.c.b16 %v703, %v702
      %v707 = vpack.c.b16 %v705, %v704
      %v711 = vsel %vm651, %v694, 0
      %713 = vmatpush.bf16.msra.mxu0 0
      %714 = vmatpush.bf16.msra.mxu0 0
      %715 = vmatpush.bf16.msra.mxu0 0
      %716 = vmatpush.bf16.msra.mxu0 0
      %717 = vmatpush.bf16.msra.mxu0 0
      %718 = vmatpush.bf16.msra.mxu0 0
      %719 = vmatpush.bf16.msra.mxu0 %v707
      %720 = vmatpush.bf16.msra.mxu0 %v706
      %721 = vmatmul.bf16.gmra.mxu0 %v711
      %v722 = vpop.f32.mrf.mxu0
      %v723 = vadd.f32 %v696, %v722
      %v724 = vpop.f32.mrf.mxu0
      %725 = vdwg.mxu0
      %v726 = vlaneseq
      %v727 = vshrl.u32 %v726, 7
      %v728 = vlaneseq
      %v729 = vand.u32 %v728, 127
      %731 = vrot.lane.b32.xlu0 %v723, 96
      %v732 = vpop.permute.xlu0 %731
      %vm733 = vcmask 64512
      %v734 = vsel %vm733, %v723, 0
      %v736 = vsel %vm733, %v732, 0
      %738 = vmatpush.xpose.msra.mxu0 0.0
      %739 = vmatpush.xpose.msra.mxu0 0.0
      %740 = vmatpush.xpose.msra.mxu0 0.0
      %741 = vmatpush.xpose.msra.mxu0 0.0
      %742 = vmatpush.xpose.msra.mxu0 0.0
      %743 = vmatpush.xpose.msra.mxu0 0.0
      %744 = vmatpush.xpose.msra.mxu0 0.0
      %745 = vmatpush.xpose.msra.mxu0 0.0
      %746 = vmatpush.xpose.msra.mxu0 0.0
      %747 = vmatpush.xpose.msra.mxu0 0.0
      %748 = vmatpush.xpose.msra.mxu0 0.0
      %749 = vmatpush.xpose.msra.mxu0 0.0
      %750 = vmatpush.xpose.msra.mxu0 0.0
      %751 = vmatpush.xpose.msra.mxu0 0.0
      %752 = vmatpush.xpose.msra.mxu0 0.0
      %753 = vmatpush.xpose.msra.mxu0 %v736
      %754 = vmatmul.f32.gmra.mxu0 %v734
      %v755 = vpop.f32.mrf.mxu0
      %v756 = vadd.f32 0.0, %v755
      %757 = vdwg.mxu0
      %v758 = vmul.f32 %v756, 0.35355338
      %vm759 = vcmp.le.s32.totalorder %v729, %v727
      %v760 = vsel %vm759, %v758, -1e+30
      %v761 = vsel %vm733, %v760, -inf
      %762 = vmax.xlane.f32.xlu0 %v761
      %v763 = vpop.xlane.xlu0 %762
      %v764 = vsub.f32 %v760, %v763
      %v765 = vmul.f32 %v764, 1.442695
      %v766 = vpow.pop %v765
      %v767 = vsel %vm733, %v766, 0.0
      %768 = vadd.xlane.f32.xlu0 %v767
      %v769 = vpop.xlane.xlu0 %768
      %v770 = vrcp.pop %v769
      %v771 = vmul.f32 %v766, %v770
      %772 = vrot.lane.b32.xlu0 %v723, 64
      %v773 = vpop.permute.xlu0 %772
      %v776 = vsel %vm733, %v771, 0
      %778 = vmatpush.msra.mxu0 0.0
      %779 = vmatpush.msra.mxu0 0.0
      %780 = vmatpush.msra.mxu0 0.0
      %781 = vmatpush.msra.mxu0 0.0
      %782 = vmatpush.msra.mxu0 0.0
      %783 = vmatpush.msra.mxu0 0.0
      %784 = vmatpush.msra.mxu0 0.0
      %785 = vmatpush.msra.mxu0 0.0
      %786 = vmatpush.msra.mxu0 0.0
      %787 = vmatpush.msra.mxu0 0.0
      %788 = vmatpush.msra.mxu0 0.0
      %789 = vmatpush.msra.mxu0 0.0
      %790 = vmatpush.msra.mxu0 0.0
      %791 = vmatpush.msra.mxu0 0.0
      %792 = vmatpush.msra.mxu0 0.0
      %793 = vmatpush.msra.mxu0 %v773
      %794 = vmatmul.f32.gmra.mxu0 %v776
      %v795 = vpop.f32.mrf.mxu0
      %v796 = vadd.f32 0.0, %v795
      %797 = vdwg.mxu0
      %798 = vrot.lane.b32.xlu0 %v723, 120
      %v799 = vpop.permute.xlu0 %798
      %800 = vrot.lane.b32.xlu0 %v723, 88
      %v801 = vpop.permute.xlu0 %800
      %v802 = vsel %vm733, %v799, 0
      %v804 = vsel %vm733, %v801, 0
      %806 = vmatpush.xpose.msra.mxu0 0.0
      %807 = vmatpush.xpose.msra.mxu0 0.0
      %808 = vmatpush.xpose.msra.mxu0 0.0
      %809 = vmatpush.xpose.msra.mxu0 0.0
      %810 = vmatpush.xpose.msra.mxu0 0.0
      %811 = vmatpush.xpose.msra.mxu0 0.0
      %812 = vmatpush.xpose.msra.mxu0 0.0
      %813 = vmatpush.xpose.msra.mxu0 0.0
      %814 = vmatpush.xpose.msra.mxu0 0.0
      %815 = vmatpush.xpose.msra.mxu0 0.0
      %816 = vmatpush.xpose.msra.mxu0 0.0
      %817 = vmatpush.xpose.msra.mxu0 0.0
      %818 = vmatpush.xpose.msra.mxu0 0.0
      %819 = vmatpush.xpose.msra.mxu0 0.0
      %820 = vmatpush.xpose.msra.mxu0 0.0
      %821 = vmatpush.xpose.msra.mxu0 %v804
      %822 = vmatmul.f32.gmra.mxu0 %v802
      %v823 = vpop.f32.mrf.mxu0
      %v824 = vadd.f32 0.0, %v823
      %825 = vdwg.mxu0
      %v826 = vmul.f32 %v824, 0.35355338
      %v827 = vsel %vm759, %v826, -1e+30
      %v828 = vsel %vm733, %v827, -inf
      %829 = vmax.xlane.f32.xlu0 %v828
      %v830 = vpop.xlane.xlu0 %829
      %v831 = vsub.f32 %v827, %v830
      %v832 = vmul.f32 %v831, 1.442695
      %v833 = vpow.pop %v832
      %v834 = vsel %vm733, %v833, 0.0
      %835 = vadd.xlane.f32.xlu0 %v834
      %v836 = vpop.xlane.xlu0 %835
      %v837 = vrcp.pop %v836
      %v838 = vmul.f32 %v833, %v837
      %839 = vrot.lane.b32.xlu0 %v723, 56
      %v840 = vpop.permute.xlu0 %839
      %v843 = vsel %vm733, %v838, 0
      %845 = vmatpush.msra.mxu0 0.0
      %846 = vmatpush.msra.mxu0 0.0
      %847 = vmatpush.msra.mxu0 0.0
      %848 = vmatpush.msra.mxu0 0.0
      %849 = vmatpush.msra.mxu0 0.0
      %850 = vmatpush.msra.mxu0 0.0
      %851 = vmatpush.msra.mxu0 0.0
      %852 = vmatpush.msra.mxu0 0.0
      %853 = vmatpush.msra.mxu0 0.0
      %854 = vmatpush.msra.mxu0 0.0
      %855 = vmatpush.msra.mxu0 0.0
      %856 = vmatpush.msra.mxu0 0.0
      %857 = vmatpush.msra.mxu0 0.0
      %858 = vmatpush.msra.mxu0 0.0
      %859 = vmatpush.msra.mxu0 0.0
      %860 = vmatpush.msra.mxu0 %v840
      %861 = vmatmul.f32.gmra.mxu0 %v843
      %v862 = vpop.f32.mrf.mxu0
      %v863 = vadd.f32 0.0, %v862
      %864 = vdwg.mxu0
      %865 = vrot.lane.b32.xlu0 %v723, 112
      %v866 = vpop.permute.xlu0 %865
      %867 = vrot.lane.b32.xlu0 %v723, 80
      %v868 = vpop.permute.xlu0 %867
      %v869 = vsel %vm733, %v866, 0
      %v871 = vsel %vm733, %v868, 0
      %873 = vmatpush.xpose.msra.mxu0 0.0
      %874 = vmatpush.xpose.msra.mxu0 0.0
      %875 = vmatpush.xpose.msra.mxu0 0.0
      %876 = vmatpush.xpose.msra.mxu0 0.0
      %877 = vmatpush.xpose.msra.mxu0 0.0
      %878 = vmatpush.xpose.msra.mxu0 0.0
      %879 = vmatpush.xpose.msra.mxu0 0.0
      %880 = vmatpush.xpose.msra.mxu0 0.0
      %881 = vmatpush.xpose.msra.mxu0 0.0
      %882 = vmatpush.xpose.msra.mxu0 0.0
      %883 = vmatpush.xpose.msra.mxu0 0.0
      %884 = vmatpush.xpose.msra.mxu0 0.0
      %885 = vmatpush.xpose.msra.mxu0 0.0
      %886 = vmatpush.xpose.msra.mxu0 0.0
      %887 = vmatpush.xpose.msra.mxu0 0.0
      %888 = vmatpush.xpose.msra.mxu0 %v871
      %889 = vmatmul.f32.gmra.mxu0 %v869
      %v890 = vpop.f32.mrf.mxu0
      %v891 = vadd.f32 0.0, %v890
      %892 = vdwg.mxu0
      %v893 = vmul.f32 %v891, 0.35355338
      %v894 = vsel %vm759, %v893, -1e+30
      %v895 = vsel %vm733, %v894, -inf
      %896 = vmax.xlane.f32.xlu0 %v895
      %v897 = vpop.xlane.xlu0 %896
      %v898 = vsub.f32 %v894, %v897
      %v899 = vmul.f32 %v898, 1.442695
      %v900 = vpow.pop %v899
      %v901 = vsel %vm733, %v900, 0.0
      %902 = vadd.xlane.f32.xlu0 %v901
      %v903 = vpop.xlane.xlu0 %902
      %v904 = vrcp.pop %v903
      %v905 = vmul.f32 %v900, %v904
      %906 = vrot.lane.b32.xlu0 %v723, 48
      %v907 = vpop.permute.xlu0 %906
      %v910 = vsel %vm733, %v905, 0
      %912 = vmatpush.msra.mxu0 0.0
      %913 = vmatpush.msra.mxu0 0.0
      %914 = vmatpush.msra.mxu0 0.0
      %915 = vmatpush.msra.mxu0 0.0
      %916 = vmatpush.msra.mxu0 0.0
      %917 = vmatpush.msra.mxu0 0.0
      %918 = vmatpush.msra.mxu0 0.0
      %919 = vmatpush.msra.mxu0 0.0
      %920 = vmatpush.msra.mxu0 0.0
      %921 = vmatpush.msra.mxu0 0.0
      %922 = vmatpush.msra.mxu0 0.0
      %923 = vmatpush.msra.mxu0 0.0
      %924 = vmatpush.msra.mxu0 0.0
      %925 = vmatpush.msra.mxu0 0.0
      %926 = vmatpush.msra.mxu0 0.0
      %927 = vmatpush.msra.mxu0 %v907
      %928 = vmatmul.f32.gmra.mxu0 %v910
      %v929 = vpop.f32.mrf.mxu0
      %v930 = vadd.f32 0.0, %v929
      %931 = vdwg.mxu0
      %932 = vrot.lane.b32.xlu0 %v723, 104
      %v933 = vpop.permute.xlu0 %932
      %934 = vrot.lane.b32.xlu0 %v723, 72
      %v935 = vpop.permute.xlu0 %934
      %v936 = vsel %vm733, %v933, 0
      %v938 = vsel %vm733, %v935, 0
      %940 = vmatpush.xpose.msra.mxu0 0.0
      %941 = vmatpush.xpose.msra.mxu0 0.0
      %942 = vmatpush.xpose.msra.mxu0 0.0
      %943 = vmatpush.xpose.msra.mxu0 0.0
      %944 = vmatpush.xpose.msra.mxu0 0.0
      %945 = vmatpush.xpose.msra.mxu0 0.0
      %946 = vmatpush.xpose.msra.mxu0 0.0
      %947 = vmatpush.xpose.msra.mxu0 0.0
      %948 = vmatpush.xpose.msra.mxu0 0.0
      %949 = vmatpush.xpose.msra.mxu0 0.0
      %950 = vmatpush.xpose.msra.mxu0 0.0
      %951 = vmatpush.xpose.msra.mxu0 0.0
      %952 = vmatpush.xpose.msra.mxu0 0.0
      %953 = vmatpush.xpose.msra.mxu0 0.0
      %954 = vmatpush.xpose.msra.mxu0 0.0
      %955 = vmatpush.xpose.msra.mxu0 %v938
      %956 = vmatmul.f32.gmra.mxu0 %v936
      %v957 = vpop.f32.mrf.mxu0
      %v958 = vadd.f32 0.0, %v957
      %959 = vdwg.mxu0
      %v960 = vmul.f32 %v958, 0.35355338
      %v961 = vsel %vm759, %v960, -1e+30
      %v962 = vsel %vm733, %v961, -inf
      %963 = vmax.xlane.f32.xlu0 %v962
      %v964 = vpop.xlane.xlu0 %963
      %v965 = vsub.f32 %v961, %v964
      %v966 = vmul.f32 %v965, 1.442695
      %v967 = vpow.pop %v966
      %v968 = vsel %vm733, %v967, 0.0
      %969 = vadd.xlane.f32.xlu0 %v968
      %v970 = vpop.xlane.xlu0 %969
      %v971 = vrcp.pop %v970
      %v972 = vmul.f32 %v967, %v971
      %973 = vrot.lane.b32.xlu0 %v723, 40
      %v974 = vpop.permute.xlu0 %973
      %v977 = vsel %vm733, %v972, 0
      %979 = vmatpush.msra.mxu0 0.0
      %980 = vmatpush.msra.mxu0 0.0
      %981 = vmatpush.msra.mxu0 0.0
      %982 = vmatpush.msra.mxu0 0.0
      %983 = vmatpush.msra.mxu0 0.0
      %984 = vmatpush.msra.mxu0 0.0
      %985 = vmatpush.msra.mxu0 0.0
      %986 = vmatpush.msra.mxu0 0.0
      %987 = vmatpush.msra.mxu0 0.0
      %988 = vmatpush.msra.mxu0 0.0
      %989 = vmatpush.msra.mxu0 0.0
      %990 = vmatpush.msra.mxu0 0.0
      %991 = vmatpush.msra.mxu0 0.0
      %992 = vmatpush.msra.mxu0 0.0
      %993 = vmatpush.msra.mxu0 0.0
      %994 = vmatpush.msra.mxu0 %v974
      %995 = vmatmul.f32.gmra.mxu0 %v977
      %v996 = vpop.f32.mrf.mxu0
      %v997 = vadd.f32 0.0, %v996
      %998 = vdwg.mxu0
      %1000 = vrot.lane.b32.xlu0 %v863, 8
      %v1001 = vpop.permute.xlu0 %1000
      %1004 = vrot.lane.b32.xlu0 %v930, 16
      %v1005 = vpop.permute.xlu0 %1004
      %1008 = vrot.lane.b32.xlu0 %v997, 24
      %v1009 = vpop.permute.xlu0 %1008
      %v1011 = vsel %vm733, %v796, %v1001
      %vm1012 = vcmask 130048
      %v1013 = vsel %vm1012, %v1011, %v1005
      %vm1014 = vcmask 195584
      %v1015 = vsel %vm1014, %v1013, %v1009
      %v1016 = vld [vmem:[%s610] sm:$0xf]
      %v1017 = vld [vmem:[%s610 + $0x4] sm:$0xf]
      %v1018 = vld [vmem:[%s610 + $0x8] sm:$0xf]
      %v1019 = vld [vmem:[%s610 + $0xc] sm:$0xf]
      %v1020 = vld [vmem:[%s613] sm:$0x1]
      %v1021 = vpack.c.bf16 %v1015, %v1015
      %v1023 = vperm.slane %v1020, 0
      %v1029 = vunpack.c.l.b16 %v1016
      %v1030 = vunpack.c.l.b16 %v1017
      %v1031 = vunpack.c.l.b16 %v1018
      %v1032 = vunpack.c.l.b16 %v1019
      %v1033 = vpack.c.b16 %v1030, %v1029
      %v1034 = vpack.c.b16 %v1032, %v1031
      %v1038 = vsel %vm651, %v1021, 0
      %1040 = vmatpush.bf16.msra.mxu0 0
      %1041 = vmatpush.bf16.msra.mxu0 0
      %1042 = vmatpush.bf16.msra.mxu0 0
      %1043 = vmatpush.bf16.msra.mxu0 0
      %1044 = vmatpush.bf16.msra.mxu0 0
      %1045 = vmatpush.bf16.msra.mxu0 0
      %1046 = vmatpush.bf16.msra.mxu0 %v1034
      %1047 = vmatpush.bf16.msra.mxu0 %v1033
      %1048 = vmatmul.bf16.gmra.mxu0 %v1038
      %v1049 = vpop.f32.mrf.mxu0
      %v1050 = vadd.f32 %v1023, %v1049
      %v1051 = vpop.f32.mrf.mxu0
      %1052 = vdwg.mxu0
      %v1053 = vadd.f32 %v648, %v1050
      %v1054 = vld [vmem:[%s616] sm:$0x1]
      %v1055 = vld [vmem:[%s619] sm:$0x1]
      %v1056 = vsel %vm651, %v1053, 0.0
      %1057 = vadd.xlane.f32.xlu0 %v1056
      %v1058 = vpop.xlane.xlu0 %1057
      %v1059 = vmul.f32 %v1058, %v661
      %v1060 = vsub.f32 %v1053, %v1059
      %v1061 = vmul.f32 %v1060, %v1060
      %v1062 = vsel %vm651, %v1061, 0.0
      %1063 = vadd.xlane.f32.xlu0 %v1062
      %v1064 = vpop.xlane.xlu0 %1063
      %v1065 = vmul.f32 %v1064, %v661
      %v1066 = vadd.f32 %v1065, 1e-05
      %v1067 = vrsqrt.pop %v1066
      %v1068 = vmul.f32 %v1067, %v1066
      %v1069 = vmul.f32 %v1068, %v1067
      %v1070 = vmul.f32 0.5, %v1069
      %v1071 = vsub.f32 1.5, %v1070
      %v1072 = vmul.f32 %v1067, %v1071
      %vm1073 = vweird.f32 %v1066
      %vm1074 = vweird.f32 %v1067
      %vm1075 = vmor %vm1073, %vm1074
      %v1076 = vsel %vm1075, %v1067, %v1072
      %v1077 = vmul.f32 %v1060, %v1076
      %v1079 = vperm.slane %v1054, 0
      %v1081 = vmul.f32 %v1077, %v1079
      %v1083 = vperm.slane %v1055, 0
      %v1085 = vadd.f32 %v1081, %v1083
      %v1086 = vld [vmem:[%s624] sm:$0xf]
      %v1087 = vld [vmem:[%s624 + $0x4] sm:$0xf]
      %v1088 = vld [vmem:[%s624 + $0x8] sm:$0xf]
      %v1089 = vld [vmem:[%s624 + $0xc] sm:$0xf]
      %v1090 = vld [vmem:[%s627] sm:$0x1]
      %v1091 = vpack.c.bf16 %v1085, %v1085
      %v1093 = vperm.slane %v1090, 0
      %v1099 = vunpack.c.l.b16 %v1086
      %v1100 = vunpack.c.l.b16 %v1087
      %v1101 = vunpack.c.l.b16 %v1088
      %v1102 = vunpack.c.l.b16 %v1089
      %v1103 = vpack.c.b16 %v1100, %v1099
      %v1104 = vpack.c.b16 %v1102, %v1101
      %v1108 = vsel %vm651, %v1091, 0
      %1110 = vmatpush.bf16.msra.mxu0 0
      %1111 = vmatpush.bf16.msra.mxu0 0
      %1112 = vmatpush.bf16.msra.mxu0 0
      %1113 = vmatpush.bf16.msra.mxu0 0
      %1114 = vmatpush.bf16.msra.mxu0 0
      %1115 = vmatpush.bf16.msra.mxu0 0
      %1116 = vmatpush.bf16.msra.mxu0 %v1104
      %1117 = vmatpush.bf16.msra.mxu0 %v1103
      %1118 = vmatmul.bf16.gmra.mxu0 %v1108
      %v1119 = vpop.f32.mrf.mxu0
      %v1120 = vadd.f32 %v1093, %v1119
      %v1121 = vpop.f32.mrf.mxu0
      %1122 = vdwg.mxu0
      %v1123 = vmul.f32 %v1120, 1.702
      %v1124 = vxor.u32 %v1123, 2147483648
      %v1125 = vmul.f32 %v1124, 1.442695
      %v1126 = vpow.pop %v1125
      %v1127 = vadd.f32 %v1126, 1.0
      %v1128 = vrcp.pop %v1127
      %v1129 = vmul.f32 %v1127, %v1128
      %v1130 = vsub.f32 1.0, %v1129
      %v1131 = vmul.f32 %v1128, %v1130
      %v1132 = vadd.f32 %v1128, %v1131
      %vm1133 = vweird.f32 %v1127
      %vm1134 = vweird.f32 %v1128
      %vm1135 = vmor %vm1133, %vm1134
      %v1136 = vsel %vm1135, %v1128, %v1132
      %v1137 = vand.u32 2147483647, %v1127
      %vm1138 = vcmp.eq.f32.partialorder %v1137, 8.507059e+37
      %v1139 = vand.u32 %v1127, 2147483648
      %v1140 = vor.u32 1.1754944e-38, %v1139
      %v1141 = vsel %vm1138, %v1140, %v1136
      %v1142 = vmul.f32 1.0, %v1141
      %v1143 = vmul.f32 %v1120, %v1142
      %v1144 = vld [vmem:[%s632] sm:$0xf]
      %v1145 = vld [vmem:[%s632 + $0x4] sm:$0xf]
      %v1146 = vld [vmem:[%s632 + $0x8] sm:$0xf]
      %v1147 = vld [vmem:[%s632 + $0xc] sm:$0xf]
      %v1148 = vld [vmem:[%s632 + $0x10] sm:$0xf]
      %v1149 = vld [vmem:[%s632 + $0x14] sm:$0xf]
      %v1150 = vld [vmem:[%s632 + $0x18] sm:$0xf]
      %v1151 = vld [vmem:[%s632 + $0x1c] sm:$0xf]
      %v1152 = vld [vmem:[%s632 + $0x20] sm:$0xf]
      %v1153 = vld [vmem:[%s632 + $0x24] sm:$0xf]
      %v1154 = vld [vmem:[%s632 + $0x28] sm:$0xf]
      %v1155 = vld [vmem:[%s632 + $0x2c] sm:$0xf]
      %v1156 = vld [vmem:[%s632 + $0x30] sm:$0xf]
      %v1157 = vld [vmem:[%s632 + $0x34] sm:$0xf]
      %v1158 = vld [vmem:[%s632 + $0x38] sm:$0xf]
      %v1159 = vld [vmem:[%s632 + $0x3c] sm:$0xf]
      %v1160 = vld [vmem:[%s635] sm:$0x1]
      %v1161 = vpack.c.bf16 %v1143, %v1143
      %v1163 = vperm.slane %v1160, 0
      %v1181 = vunpack.c.l.b16 %v1144
      %v1182 = vunpack.c.l.b16 %v1145
      %v1183 = vunpack.c.l.b16 %v1146
      %v1184 = vunpack.c.l.b16 %v1147
      %v1185 = vunpack.c.l.b16 %v1148
      %v1186 = vunpack.c.l.b16 %v1149
      %v1187 = vunpack.c.l.b16 %v1150
      %v1188 = vunpack.c.l.b16 %v1151
      %v1189 = vunpack.c.l.b16 %v1152
      %v1190 = vunpack.c.l.b16 %v1153
      %v1191 = vunpack.c.l.b16 %v1154
      %v1192 = vunpack.c.l.b16 %v1155
      %v1193 = vunpack.c.l.b16 %v1156
      %v1194 = vunpack.c.l.b16 %v1157
      %v1195 = vunpack.c.l.b16 %v1158
      %v1196 = vunpack.c.l.b16 %v1159
      %v1197 = vpack.c.b16 %v1182, %v1181
      %v1198 = vpack.c.b16 %v1184, %v1183
      %v1199 = vpack.c.b16 %v1186, %v1185
      %v1200 = vpack.c.b16 %v1188, %v1187
      %v1201 = vpack.c.b16 %v1190, %v1189
      %v1202 = vpack.c.b16 %v1192, %v1191
      %v1203 = vpack.c.b16 %v1194, %v1193
      %v1204 = vpack.c.b16 %v1196, %v1195
      %1213 = vmatpush.bf16.msra.mxu0 %v1204
      %1214 = vmatpush.bf16.msra.mxu0 %v1203
      %1215 = vmatpush.bf16.msra.mxu0 %v1202
      %1216 = vmatpush.bf16.msra.mxu0 %v1201
      %1217 = vmatpush.bf16.msra.mxu0 %v1200
      %1218 = vmatpush.bf16.msra.mxu0 %v1199
      %1219 = vmatpush.bf16.msra.mxu0 %v1198
      %1220 = vmatpush.bf16.msra.mxu0 %v1197
      %1221 = vmatmul.bf16.gmra.mxu0 %v1161
      %v1222 = vpop.f32.mrf.mxu0
      %v1223 = vadd.f32 %v1163, %v1222
      %v1224 = vpop.f32.mrf.mxu0
      %1225 = vdwg.mxu0
      %v1226 = vadd.f32 %v1053, %v1223
      %1227 = vst.msk [vmem:[%s639] sm:$0xff] %vm651, %v1226
      %p1228 = scmp.lt.s32.totalorder %s28, 2
      %s1229 = scalar_select %p1228, %s28, 2
      %s1230 = smul.addr %s1229, 8
      %s1231 = scalar_lea.vmem %s13, %s1230
      // Predicated region
      $region77: #{forward.5} parent=71 // pred_check
        %p1232 = pneg %p392
      $region78: #{forward.5} parent=71 // pred_check_branch
        %1234 = sbr.rel (%p1232) target = $region80
      $region79: #{forward.5} parent=71 // pred_region
        _
      $region80: #{forward.5} parent=71 // pred_fallthru
        _
    $region72: #{forward.5} parent=5 // pred_fallthru
      _
    %p1235 = scmp.le.s32.totalorder 2, %s19
    // Predicated region
    $region81: #{forward.5} parent=5 // pred_check
      %p1236 = pneg %p1235
    $region82: #{forward.5} parent=5 // pred_check_branch
      %1238 = sbr.rel (%p1236) target = $region84
    $region83: #{forward.5} parent=5 // pred_region
      %s1239 = ssub.s32 %s19, 2
      // Predicated region
      $region85: #{forward.5} parent=83 // pred_check
        %p1240 = pneg %p398
      $region86: #{forward.5} parent=83 // pred_check_branch
        %1242 = sbr.rel (%p1240) target = $region88
      $region87: #{forward.5} parent=83 // pred_region
        %p1243 = scmp.lt.s32.totalorder %s30, 2
        %s1244 = scalar_select %p1243, %s30, 2
        %s1245 = smul.addr %s1244, 8
        %s1246 = scalar_lea.vmem %s13, %s1245
      $region88: #{forward.5} parent=83 // pred_fallthru
        _
    $region84: #{forward.5} parent=5 // pred_fallthru
      _
  $region6: #{forward.5} parent=0 // loop_footer
    %s23 = sadd.s32 1, %s19
  $region7: #{forward.5} parent=0 // loop_footer_branch
    %18 = sbr.rel target = $region3
  $region8: #{forward.5} parent=0 // loop_exit
    _

// kernel: forward.9
$region0: #{forward.9}
  #allocation0 [shape = 'u32[]', space=smem, size = 0x4, offset = 0x4, fixed_abs, tag = 'smem constant byte address 0x4 - core index']
  #allocation1 [shape = 'u32[72,128]{1,0:T(1,128)}', space=vmem, size = 0x9000, scoped, tag = 'internal scratch']
  #allocation2 [shape = 'f32[1]{0:T(128)S(6)}', space=smem, size = 0x200, scoped, tag = 'scoped memory for forward.9']
  %s0 = inlined_call_operand.vmem [shape: f32[2,5,32], index: 0, kind: input, shape index: {}]
  %s1 = inlined_call_operand.vmem [shape: f32[1,32], index: 1, kind: input, shape index: {}]
  %s2 = inlined_call_operand.vmem [shape: f32[1,32], index: 2, kind: input, shape index: {}]
  %s3 = inlined_call_operand.vmem [shape: bf16[32,32], index: 3, kind: input, shape index: {}]
  %s4 = inlined_call_operand.vmem [shape: f32[3,32], index: 4, kind: input, shape index: {}]
  %s5 = inlined_call_operand.<no memory space> [shape: f32[1], index: 5, kind: input, shape index: {}]
  %s6 = inlined_call_operand.hbm [shape: f32[2,3], index: 6, kind: output, shape index: {}]
  %s7 = sld [smem:[#allocation0]]
  $region34: #{forward.9} parent=0
    _
  %s9 = ssub.s32 1, %s7
  %s10 = scalar_select 0, %s9, %s7
  %11 = sst [smem:[#allocation2]] %s5
  $region1: #{forward.9} parent=0
    #allocation3 [shape = 'u8[1024]{0}', space=vmem, size = 0x400, scoped, tag = 'output window, operand 0, single buffered']
    #allocation4 [shape = 's32[1]{0}', space=sflag, size = 0x4, scoped, tag = 'scoped memory for forward.9']
    %12 = vsyncpa [#allocation4], 0
    // Predicated region
    $region2: #{forward.9} parent=1 // pred_check
      _
    $region3: #{forward.9} parent=1 // pred_check_branch
      %14 = sbr.rel (0) target = $region5
    $region4: #{forward.9} parent=1 // pred_region
      _
    $region5: #{forward.9} parent=1 // pred_fallthru
      _
    // Predicated region
    $region6: #{forward.9} parent=1 // pred_check
      _
    $region7: #{forward.9} parent=1 // pred_check_branch
      %16 = sbr.rel (0) target = $region9
    $region8: #{forward.9} parent=1 // pred_region
      _
    $region9: #{forward.9} parent=1 // pred_fallthru
      _
    // Predicated region
    $region10: #{forward.9} parent=1 // pred_check
      _
    $region11: #{forward.9} parent=1 // pred_check_branch
      %18 = sbr.rel (0) target = $region13
    $region12: #{forward.9} parent=1 // pred_region
      _
    $region13: #{forward.9} parent=1 // pred_fallthru
      _
    // Predicated region
    $region14: #{forward.9} parent=1 // pred_check
      _
    $region15: #{forward.9} parent=1 // pred_check_branch
      %20 = sbr.rel (0) target = $region17
    $region16: #{forward.9} parent=1 // pred_region
      _
    $region17: #{forward.9} parent=1 // pred_fallthru
      _
    // Predicated region
    $region18: #{forward.9} parent=1 // pred_check
      _
    $region19: #{forward.9} parent=1 // pred_check_branch
      %22 = sbr.rel (0) target = $region21
    $region20: #{forward.9} parent=1 // pred_region
      _
    $region21: #{forward.9} parent=1 // pred_fallthru
      _
    // Predicated region
    $region22: #{forward.9} parent=1 // pred_check
      _
    $region23: #{forward.9} parent=1 // pred_check_branch
      %24 = sbr.rel (0) target = $region25
    $region24: #{forward.9} parent=1 // pred_region
      _
    $region25: #{forward.9} parent=1 // pred_fallthru
      _
    %v26 = vld [vmem:[%s0] sm:$0x1f]
    %v27 = vld [vmem:[%s0 + $0x8] sm:$0x1f]
    %v28 = vld [vmem:[%s1] sm:$0x1]
    %v29 = vld [vmem:[%s2] sm:$0x1]
    %v32 = vrot.slane %v27, 7
    %vm33 = vcmask 1041409
    %v34 = vsel %vm33, %v32, %v26
    %vm36 = vcmask 254976
    %v37 = vsel %vm36, %v34, 0.0
    %38 = vadd.xlane.f32.xlu0 %v37
    %v39 = vpop.xlane.xlu0 %38
    %v40 = vrcp.pop 32.0
    %v41 = vmul.f32 32.0, %v40
    %v42 = vsub.f32 1.0, %v41
    %v43 = vmul.f32 %v40, %v42
    %v44 = vadd.f32 %v40, %v43
    %vm45 = vweird.f32 %v40
    %v46 = vsel %vm45, %v40, %v44
    %v47 = vmul.f32 %v39, %v46
    %v49 = vrot.slane %v47, 1
    %v52 = vsub.f32 %v26, %v47
    %v53 = vsub.f32 %v27, %v49
    %v54 = vmul.f32 %v52, %v52
    %v55 = vmul.f32 %v53, %v53
    %v58 = vrot.slane %v55, 7
    %v59 = vsel %vm33, %v58, %v54
    %v61 = vsel %vm36, %v59, 0.0
    %62 = vadd.xlane.f32.xlu0 %v61
    %v63 = vpop.xlane.xlu0 %62
    %v64 = vmul.f32 %v63, %v46
    %v65 = vadd.f32 %v64, 1e-05
    %v66 = vrsqrt.pop %v65
    %v67 = vmul.f32 %v66, %v65
    %v68 = vmul.f32 %v67, %v66
    %v69 = vmul.f32 0.5, %v68
    %v70 = vsub.f32 1.5, %v69
    %v71 = vmul.f32 %v66, %v70
    %vm72 = vweird.f32 %v65
    %vm73 = vweird.f32 %v66
    %vm74 = vmor %vm72, %vm73
    %v75 = vsel %vm74, %v66, %v71
    %v77 = vrot.slane %v75, 1
    %v80 = vmul.f32 %v52, %v75
    %v81 = vmul.f32 %v53, %v77
    %v83 = vperm.slane %v28, 0
    %v85 = vmul.f32 %v80, %v83
    %v86 = vmul.f32 %v81, %v83
    %v88 = vperm.slane %v29, 0
    %v90 = vadd.f32 %v85, %v88
    %v91 = vadd.f32 %v86, %v88
    %v92 = vpack.c.bf16 %v90, %v90
    %v93 = vpack.c.bf16 %v91, %v91
    %v94 = vld [vmem:[%s3] sm:$0xf]
    %v95 = vld [vmem:[%s3 + $0x4] sm:$0xf]
    %v96 = vld [vmem:[%s3 + $0x8] sm:$0xf]
    %v97 = vld [vmem:[%s3 + $0xc] sm:$0xf]
    %v100 = vunpack.c.l.b16 %v92
    %v101 = vunpack.c.l.b16 %v93
    %v102 = vrot.slane %v101, 7
    %v103 = vsel %vm33, %v102, %v100
    %v104 = vpack.c.b16 %v103, %v103
    %v109 = vunpack.c.l.b16 %v94
    %v110 = vunpack.c.l.b16 %v95
    %v111 = vunpack.c.l.b16 %v96
    %v112 = vunpack.c.l.b16 %v97
    %v113 = vpack.c.b16 %v110, %v109
    %v114 = vpack.c.b16 %v112, %v111
    %vm117 = vcmask 261120
    %v119 = vsel %vm117, %v104, 0
    %121 = vmatpush.bf16.msra.mxu0 0
    %122 = vmatpush.bf16.msra.mxu0 0
    %123 = vmatpush.bf16.msra.mxu0 0
    %124 = vmatpush.bf16.msra.mxu0 0
    %125 = vmatpush.bf16.msra.mxu0 0
    %126 = vmatpush.bf16.msra.mxu0 0
    %127 = vmatpush.bf16.msra.mxu0 %v114
    %128 = vmatpush.bf16.msra.mxu0 %v113
    %129 = vmatmul.bf16.gmra.mxu0 %v119
    %v130 = vpop.f32.mrf.mxu0
    %v131 = vadd.f32 0.0, %v130
    %v132 = vpop.f32.mrf.mxu0
    %133 = vdwg.mxu0
    %v134 = vmul.f32 %v131, %v131
    %v135 = vsel %vm36, %v134, 0.0
    %136 = vadd.xlane.f32.xlu0 %v135
    %v137 = vpop.xlane.xlu0 %136
    %v138 = vadd.f32 %v137, 1e-12
    %v139 = vrsqrt.pop %v138
    %v140 = vmul.f32 %v139, %v138
    %v141 = vmul.f32 %v140, %v139
    %v142 = vmul.f32 0.5, %v141
    %v143 = vsub.f32 1.5, %v142
    %v144 = vmul.f32 %v139, %v143
    %vm145 = vweird.f32 %v138
    %vm146 = vweird.f32 %v139
    %vm147 = vmor %vm145, %vm146
    %v148 = vsel %vm147, %v139, %v144
    %v149 = vmul.f32 %v131, %v148
    %v150 = vld [vmem:[%s4] sm:$0x7]
    %v152 = vsel %vm117, %v149, 0
    %v155 = vsel %vm117, %v150, 0
    %157 = vmatpush.xpose.msra.mxu0 0.0
    %158 = vmatpush.xpose.msra.mxu0 0.0
    %159 = vmatpush.xpose.msra.mxu0 0.0
    %160 = vmatpush.xpose.msra.mxu0 0.0
    %161 = vmatpush.xpose.msra.mxu0 0.0
    %162 = vmatpush.xpose.msra.mxu0 0.0
    %163 = vmatpush.xpose.msra.mxu0 0.0
    %164 = vmatpush.xpose.msra.mxu0 0.0
    %165 = vmatpush.xpose.msra.mxu0 0.0
    %166 = vmatpush.xpose.msra.mxu0 0.0
    %167 = vmatpush.xpose.msra.mxu0 0.0
    %168 = vmatpush.xpose.msra.mxu0 0.0
    %169 = vmatpush.xpose.msra.mxu0 0.0
    %170 = vmatpush.xpose.msra.mxu0 0.0
    %171 = vmatpush.xpose.msra.mxu0 0.0
    %172 = vmatpush.xpose.msra.mxu0 %v155
    %173 = vmatmul.f32.gmra.mxu0 %v152
    %v174 = vpop.f32.mrf.mxu0
    %v175 = vadd.f32 0.0, %v174
    %176 = vdwg.mxu0
    %s177 = sld [smem:[#allocation2]]
    %v178 = vstv %s177
    %v179 = vmul.f32 %v178, %v175
    %vm180 = vcmask 17408
    %181 = vst.msk [vmem:[#allocation3] sm:$0x3] %vm180, %v179
    // Predicated region
    $region26: #{forward.9} parent=1 // pred_check
      _
    $region27: #{forward.9} parent=1 // pred_check_branch
      %183 = sbr.rel (0) target = $region29
    $region28: #{forward.9} parent=1 // pred_region
      %185 = vsyncadd [#allocation4], 0
      %s187 = sshll.u32 [#allocation3], 4
      %s188 = int_to_ptr.vmem [resolvable:$true] %s187
      %s189 = sshll.u32 %s6, 4
      %s190 = int_to_ptr.hbm [resolvable:$true] %s189
      %192 = dma.vmem_to_hbm [thread:$0]  %s188, 32, %s190, [#allocation4]
    $region29: #{forward.9} parent=1 // pred_fallthru
      _
    // Predicated region
    $region30: #{forward.9} parent=1 // pred_check
      _
    $region31: #{forward.9} parent=1 // pred_check_branch
      %194 = sbr.rel (0) target = $region33
    $region32: #{forward.9} parent=1 // pred_region
      %196 = dma.done [#allocation4], 32
    $region33: #{forward.9} parent=1 // pred_fallthru
      _
    %197 = vsyncpa [#allocation4], 1

</llo_original>
